<compile_context>
chip_gen: v6e
topology: v6e:2x2x1
jax: 0.10.0
libtpu: 0.0.40
codegen_flags: <defaults>
</compile_context>

<pallas_src>
import functools

import jax
import jax.numpy as jnp
from jax.experimental import pallas as pl
from jax.experimental.pallas import tpu as pltpu


# ------------------------------ fused kernel -------------------------------

def _layernorm(y, g, b, eps):
    mean = jnp.mean(y, axis=-1, keepdims=True)
    c = y - mean
    var = jnp.mean(c * c, axis=-1, keepdims=True)   # biased variance, matches torch LN
    return c * jax.lax.rsqrt(var + eps) * g + b


def _encoder_kernel(x_ref, in_w_ref, in_b_ref, wq_ref, wk_ref, wv_ref, wo_ref,
                    w1_ref, b1_ref, w2_ref, b2_ref, ln_ref, fn_ref, o_ref,
                    *, S, H, d_k, d_v, n_layers):
    inv_scale = 1.0 / (float(d_k) ** 0.5)

    # one batch element per grid program; input projection (Linear with bias)
    h = jnp.dot(x_ref[0], in_w_ref[...],
                preferred_element_type=jnp.float32) + in_b_ref[...]      # (S, D)

    for l in range(n_layers):                     # static unroll, n_layers small
        residual = h
        # shared lhs for the three head-batched projections
        hb = jnp.broadcast_to(h, (H,) + h.shape)                         # (H, S, D)

        # ---- Q/K/V projections, heads as the dot_general batch dim ----
        qh = jnp.einsum('hsd,hdk->hsk', hb, wq_ref[l],
                        preferred_element_type=jnp.float32)              # (H, S, d_k)
        kh = jnp.einsum('hsd,hdk->hsk', hb, wk_ref[l],
                        preferred_element_type=jnp.float32)              # (H, S, d_k)
        vh = jnp.einsum('hsd,hdk->hsk', hb, wv_ref[l],
                        preferred_element_type=jnp.float32)              # (H, S, d_v)

        # ---- scaled dot-product attention (exact softmax, as in the reference)
        s = jnp.einsum('hqd,hkd->hqk', qh, kh,
                       preferred_element_type=jnp.float32) * inv_scale   # (H, S, S)
        s = s - jnp.max(s, axis=-1, keepdims=True)
        p = jnp.exp(s)
        p = p / jnp.sum(p, axis=-1, keepdims=True)
        ctx = jnp.einsum('hqk,hkd->hqd', p, vh,
                         preferred_element_type=jnp.float32)             # (H, S, d_v)

        # ---- fc: per-head output projection summed over heads
        #      == concat(heads) @ Wo, but with no lane-dim reshape/transpose.
        attn = jnp.einsum('hsd,hdm->hsm', ctx, wo_ref[l],
                          preferred_element_type=jnp.float32).sum(axis=0)  # (S, D)

        # attention-module LayerNorm (eps = 1e-6), includes the residual
        attn = _layernorm(attn + residual, ln_ref[l, 0], ln_ref[l, 1], 1e-6)
        # EncoderLayer LN1 (eps = 1e-5); residual re-added, per the reference
        h1 = _layernorm(residual + attn, ln_ref[l, 2], ln_ref[l, 3], 1e-5)
        # FFN: Linear -> ReLU -> Linear (with biases)
        f = jnp.dot(h1, w1_ref[l], preferred_element_type=jnp.float32) + b1_ref[l]
        f = jnp.maximum(f, 0.0)
        f = jnp.dot(f, w2_ref[l], preferred_element_type=jnp.float32) + b2_ref[l]
        h = _layernorm(h1 + f, ln_ref[l, 4], ln_ref[l, 5], 1e-5)

    # final Encoder LayerNorm (eps = 1e-5)
    o_ref[0] = _layernorm(h, fn_ref[0], fn_ref[1], 1e-5).astype(o_ref.dtype)


# --------------------------- host-side wrapper ------------------------------

def _full_spec(a):
    nd = a.ndim
    return pl.BlockSpec(a.shape, lambda b, _nd=nd: (0,) * _nd)


def encoder_forward(x, params, *, d_model, n_heads, n_layers, d_k, d_v):
    B, S, input_dim = x.shape
    weights = [
        params["in_w"], params["in_b"],
        params["wq"], params["wk"], params["wv"], params["wo"],
        params["w1"], params["b1"], params["w2"], params["b2"],
        params["ln"], params["fnorm"],
    ]
    kern = functools.partial(_encoder_kernel, S=S, H=n_heads,
                             d_k=d_k, d_v=d_v, n_layers=n_layers)
    out = pl.pallas_call(
        kern,
        out_shape=jax.ShapeDtypeStruct((B, S, d_model), jnp.float32),
        grid=(B,),
        in_specs=[pl.BlockSpec((1, S, input_dim), lambda b: (b, 0, 0))]
                 + [_full_spec(a) for a in weights],
        out_specs=pl.BlockSpec((1, S, d_model), lambda b: (b, 0, 0)),
        compiler_params=pltpu.CompilerParams(
            dimension_semantics=("parallel",),          # uses both TCs on v7x
            vmem_limit_bytes=32 * 1024 * 1024),
    )(x.astype(jnp.float32), *weights)
    return out


# --------------------------- parameter handling -----------------------------

def init_params(key, input_dim, d_model, n_heads, n_layers, d_ff, d_k, d_v):
    assert n_heads * d_v == d_model, \
        "outputs.view(..., d_model) requires H*d_v == d_model"

    def w(k, shape, scale=0.05):
        return scale * jax.random.normal(k, shape, dtype=jnp.float32)

    keys = jax.random.split(key, 2 + 8 * n_layers)
    it = iter(keys)
    in_w = w(next(it), (input_dim, d_model))
    in_b = w(next(it), (1, d_model))

    # Per-head weight layouts (equivalent to the PyTorch Linears):
    #   wq[l,h] == query.weight[h*d_k:(h+1)*d_k, :].T   -> (d_model, d_k)
    #   wo[l,h] == fc.weight[:, h*d_v:(h+1)*d_v].T      -> (d_v, d_model)
    wq, wk, wv, wo, w1, b1, w2, b2 = ([] for _ in range(8))
    for _ in range(n_layers):
        wq.append(w(next(it), (n_heads, d_model, d_k)))
        wk.append(w(next(it), (n_heads, d_model, d_k)))
        wv.append(w(next(it), (n_heads, d_model, d_v)))
        wo.append(w(next(it), (n_heads, d_v, d_model)))
        w1.append(w(next(it), (d_model, d_ff)))
        b1.append(w(next(it), (1, d_ff)))
        w2.append(w(next(it), (d_ff, d_model)))
        b2.append(w(next(it), (1, d_model)))

    ones = jnp.ones((1, d_model), jnp.float32)
    zeros = jnp.zeros((1, d_model), jnp.float32)
    # per-layer LN params: [attn_g, attn_b, ln1_g, ln1_b, ln2_g, ln2_b]
    layer_ln = jnp.stack([ones, zeros, ones, zeros, ones, zeros])  # (6,1,D)

    return {
        "in_w": in_w, "in_b": in_b,
        "wq": jnp.stack(wq),          # (L, H, D, d_k)
        "wk": jnp.stack(wk),          # (L, H, D, d_k)
        "wv": jnp.stack(wv),          # (L, H, D, d_v)
        "wo": jnp.stack(wo),          # (L, H, d_v, D)
        "w1": jnp.stack(w1), "b1": jnp.stack(b1),
        "w2": jnp.stack(w2), "b2": jnp.stack(b2),
        "ln": jnp.tile(layer_ln[None], (n_layers, 1, 1, 1)),  # (L,6,1,D)
        "fnorm": jnp.stack([ones, zeros]),                    # (2,1,D)
    }


# ----------------------------------- main -----------------------------------

if __name__ == "__main__":
    # Small shapes consistent with the module.
    B, input_dim, seq_length = 2, 4, 8
    d_model, n_heads, n_layers, d_ff, d_k, d_v = 32, 4, 2, 64, 8, 8

    key = jax.random.PRNGKey(0)
    kx, kp = jax.random.split(key)
    x = jax.random.normal(kx, (B, seq_length, input_dim), dtype=jnp.float32)
    params = init_params(kp, input_dim, d_model, n_heads, n_layers, d_ff, d_k, d_v)

    fwd = functools.partial(encoder_forward, d_model=d_model, n_heads=n_heads,
                            n_layers=n_layers, d_k=d_k, d_v=d_v)
    out = jax.jit(fwd)(x, params)
    out = jax.block_until_ready(out)
    assert out.shape == (B, seq_length, d_model)
    assert bool(jnp.all(jnp.isfinite(out)))
    print("KERNEL_OK")
</pallas_src>

<mosaic_0001>
module attributes {stable_mosaic.version = 11 : i64} {
  func.func @_encoder_kernel(%arg0: i32, %arg1: memref<1x8x4xf32, #tpu.memory_space<vmem>>, %arg2: memref<4x32xf32, #tpu.memory_space<vmem>>, %arg3: memref<1x32xf32, #tpu.memory_space<vmem>>, %arg4: memref<2x4x32x8xf32, #tpu.memory_space<vmem>>, %arg5: memref<2x4x32x8xf32, #tpu.memory_space<vmem>>, %arg6: memref<2x4x32x8xf32, #tpu.memory_space<vmem>>, %arg7: memref<2x4x8x32xf32, #tpu.memory_space<vmem>>, %arg8: memref<2x32x64xf32, #tpu.memory_space<vmem>>, %arg9: memref<2x1x64xf32, #tpu.memory_space<vmem>>, %arg10: memref<2x64x32xf32, #tpu.memory_space<vmem>>, %arg11: memref<2x1x32xf32, #tpu.memory_space<vmem>>, %arg12: memref<2x6x1x32xf32, #tpu.memory_space<vmem>>, %arg13: memref<2x1x32xf32, #tpu.memory_space<vmem>>, %arg14: memref<1x8x32xf32, #tpu.memory_space<vmem>>) attributes {dimension_semantics = [#tpu.dimension_semantics<parallel>], iteration_bounds = array<i64: 2>, scalar_prefetch = 0 : i64, scratch_operands = 0 : i64, tpu.core_type = #tpu.core_type<tc>, window_params = [{transform_indices = @transform_0, window_bounds = array<i64: 1, 8, 4>}, {pipeline_mode = #tpu.pipeline_mode<synchronous>, transform_indices = @transform_1, window_bounds = array<i64: 4, 32>}, {pipeline_mode = #tpu.pipeline_mode<synchronous>, transform_indices = @transform_2, window_bounds = array<i64: 1, 32>}, {pipeline_mode = #tpu.pipeline_mode<synchronous>, transform_indices = @transform_3, window_bounds = array<i64: 2, 4, 32, 8>}, {pipeline_mode = #tpu.pipeline_mode<synchronous>, transform_indices = @transform_4, window_bounds = array<i64: 2, 4, 32, 8>}, {pipeline_mode = #tpu.pipeline_mode<synchronous>, transform_indices = @transform_5, window_bounds = array<i64: 2, 4, 32, 8>}, {pipeline_mode = #tpu.pipeline_mode<synchronous>, transform_indices = @transform_6, window_bounds = array<i64: 2, 4, 8, 32>}, {pipeline_mode = #tpu.pipeline_mode<synchronous>, transform_indices = @transform_7, window_bounds = array<i64: 2, 32, 64>}, {pipeline_mode = #tpu.pipeline_mode<synchronous>, transform_indices = @transform_8, window_bounds = array<i64: 2, 1, 64>}, {pipeline_mode = #tpu.pipeline_mode<synchronous>, transform_indices = @transform_9, window_bounds = array<i64: 2, 64, 32>}, {pipeline_mode = #tpu.pipeline_mode<synchronous>, transform_indices = @transform_10, window_bounds = array<i64: 2, 1, 32>}, {pipeline_mode = #tpu.pipeline_mode<synchronous>, transform_indices = @transform_11, window_bounds = array<i64: 2, 6, 1, 32>}, {pipeline_mode = #tpu.pipeline_mode<synchronous>, transform_indices = @transform_12, window_bounds = array<i64: 2, 1, 32>}, {transform_indices = @transform_13, window_bounds = array<i64: 1, 8, 32>}]} {
    %c0 = arith.constant 0 : index
    %c0_0 = arith.constant 0 : index
    %c0_1 = arith.constant 0 : index
    %0 = vector.load %arg1[%c0, %c0_0, %c0_1] : memref<1x8x4xf32, #tpu.memory_space<vmem>>, vector<1x8x4xf32>
    %1 = vector.shape_cast %0 : vector<1x8x4xf32> to vector<8x4xf32>
    %c0_2 = arith.constant 0 : index
    %c0_3 = arith.constant 0 : index
    %2 = vector.load %arg2[%c0_2, %c0_3] : memref<4x32xf32, #tpu.memory_space<vmem>>, vector<4x32xf32>
    %cst = arith.constant dense<0.000000e+00> : vector<8x32xf32>
    %3 = tpu.matmul %1, %2, %cst {dimension_numbers = #tpu.dot_dimension_numbers<[1], [0], [0], [1], [0, 0, 1, 1], [], []>} : vector<8x4xf32>, vector<4x32xf32>, vector<8x32xf32> -> vector<8x32xf32>
    %c0_4 = arith.constant 0 : index
    %c0_5 = arith.constant 0 : index
    %4 = vector.load %arg3[%c0_4, %c0_5] : memref<1x32xf32, #tpu.memory_space<vmem>>, vector<1x32xf32>
    %5 = vector.broadcast %4 : vector<1x32xf32> to vector<8x32xf32>
    %6 = arith.addf %3, %5 : vector<8x32xf32>
    %7 = vector.shape_cast %6 : vector<8x32xf32> to vector<1x8x32xf32>
    %8 = vector.broadcast %7 : vector<1x8x32xf32> to vector<4x8x32xf32>
    %c0_6 = arith.constant 0 : index
    %c0_7 = arith.constant 0 : index
    %c0_8 = arith.constant 0 : index
    %c0_9 = arith.constant 0 : index
    %9 = vector.load %arg4[%c0_6, %c0_7, %c0_8, %c0_9] : memref<2x4x32x8xf32, #tpu.memory_space<vmem>>, vector<1x4x32x8xf32>
    %10 = vector.shape_cast %9 : vector<1x4x32x8xf32> to vector<4x32x8xf32>
    "tpu.trace_start"() <{level = 10 : i32, message = "hsd,hdk->hsk"}> : () -> ()
    %cst_10 = arith.constant dense<0.000000e+00> : vector<4x8x8xf32>
    %11 = tpu.matmul %8, %10, %cst_10 {dimension_numbers = #tpu.dot_dimension_numbers<[2], [1], [1], [2], [0, 0, 0, 1, 1, 2], [0], [0]>} : vector<4x8x32xf32>, vector<4x32x8xf32>, vector<4x8x8xf32> -> vector<4x8x8xf32>
    "tpu.trace_stop"() : () -> ()
    %c0_11 = arith.constant 0 : index
    %c0_12 = arith.constant 0 : index
    %c0_13 = arith.constant 0 : index
    %c0_14 = arith.constant 0 : index
    %12 = vector.load %arg5[%c0_11, %c0_12, %c0_13, %c0_14] : memref<2x4x32x8xf32, #tpu.memory_space<vmem>>, vector<1x4x32x8xf32>
    %13 = vector.shape_cast %12 : vector<1x4x32x8xf32> to vector<4x32x8xf32>
    "tpu.trace_start"() <{level = 10 : i32, message = "hsd,hdk->hsk"}> : () -> ()
    %cst_15 = arith.constant dense<0.000000e+00> : vector<4x8x8xf32>
    %14 = tpu.matmul %8, %13, %cst_15 {dimension_numbers = #tpu.dot_dimension_numbers<[2], [1], [1], [2], [0, 0, 0, 1, 1, 2], [0], [0]>} : vector<4x8x32xf32>, vector<4x32x8xf32>, vector<4x8x8xf32> -> vector<4x8x8xf32>
    "tpu.trace_stop"() : () -> ()
    %c0_16 = arith.constant 0 : index
    %c0_17 = arith.constant 0 : index
    %c0_18 = arith.constant 0 : index
    %c0_19 = arith.constant 0 : index
    %15 = vector.load %arg6[%c0_16, %c0_17, %c0_18, %c0_19] : memref<2x4x32x8xf32, #tpu.memory_space<vmem>>, vector<1x4x32x8xf32>
    %16 = vector.shape_cast %15 : vector<1x4x32x8xf32> to vector<4x32x8xf32>
    "tpu.trace_start"() <{level = 10 : i32, message = "hsd,hdk->hsk"}> : () -> ()
    %cst_20 = arith.constant dense<0.000000e+00> : vector<4x8x8xf32>
    %17 = tpu.matmul %8, %16, %cst_20 {dimension_numbers = #tpu.dot_dimension_numbers<[2], [1], [1], [2], [0, 0, 0, 1, 1, 2], [0], [0]>} : vector<4x8x32xf32>, vector<4x32x8xf32>, vector<4x8x8xf32> -> vector<4x8x8xf32>
    "tpu.trace_stop"() : () -> ()
    "tpu.trace_start"() <{level = 10 : i32, message = "hqd,hkd->hqk"}> : () -> ()
    %cst_21 = arith.constant dense<0.000000e+00> : vector<4x8x8xf32>
    %18 = tpu.matmul %11, %14, %cst_21 {dimension_numbers = #tpu.dot_dimension_numbers<[2], [2], [1], [1], [0, 0, 0, 1, 1, 1], [0], [0]>} : vector<4x8x8xf32>, vector<4x8x8xf32>, vector<4x8x8xf32> -> vector<4x8x8xf32>
    "tpu.trace_stop"() : () -> ()
    %cst_22 = arith.constant 0.353553385 : f32
    %19 = vector.broadcast %cst_22 : f32 to vector<4x8x8xf32>
    %20 = arith.mulf %18, %19 : vector<4x8x8xf32>
    %cst_23 = arith.constant dense<0xFF800000> : vector<4x8xf32>
    %21 = vector.multi_reduction <maximumf>, %20, %cst_23 [2] : vector<4x8x8xf32> to vector<4x8xf32>
    %22 = vector.shape_cast %21 : vector<4x8xf32> to vector<4x8x1xf32>
    %23 = vector.broadcast %22 : vector<4x8x1xf32> to vector<4x8x8xf32>
    %24 = arith.subf %20, %23 : vector<4x8x8xf32>
    %25 = math.exp %24 : vector<4x8x8xf32>
    %cst_24 = arith.constant dense<0.000000e+00> : vector<4x8xf32>
    %26 = vector.multi_reduction <add>, %25, %cst_24 [2] : vector<4x8x8xf32> to vector<4x8xf32>
    %27 = vector.shape_cast %26 : vector<4x8xf32> to vector<4x8x1xf32>
    %28 = vector.broadcast %27 : vector<4x8x1xf32> to vector<4x8x8xf32>
    %29 = arith.divf %25, %28 : vector<4x8x8xf32>
    "tpu.trace_start"() <{level = 10 : i32, message = "hqk,hkd->hqd"}> : () -> ()
    %cst_25 = arith.constant dense<0.000000e+00> : vector<4x8x8xf32>
    %30 = tpu.matmul %29, %17, %cst_25 {dimension_numbers = #tpu.dot_dimension_numbers<[2], [1], [1], [2], [0, 0, 0, 1, 1, 2], [0], [0]>} : vector<4x8x8xf32>, vector<4x8x8xf32>, vector<4x8x8xf32> -> vector<4x8x8xf32>
    "tpu.trace_stop"() : () -> ()
    %c0_26 = arith.constant 0 : index
    %c0_27 = arith.constant 0 : index
    %c0_28 = arith.constant 0 : index
    %c0_29 = arith.constant 0 : index
    %31 = vector.load %arg7[%c0_26, %c0_27, %c0_28, %c0_29] : memref<2x4x8x32xf32, #tpu.memory_space<vmem>>, vector<1x4x8x32xf32>
    %32 = vector.shape_cast %31 : vector<1x4x8x32xf32> to vector<4x8x32xf32>
    "tpu.trace_start"() <{level = 10 : i32, message = "hsd,hdm->hsm"}> : () -> ()
    %cst_30 = arith.constant dense<0.000000e+00> : vector<4x8x32xf32>
    %33 = tpu.matmul %30, %32, %cst_30 {dimension_numbers = #tpu.dot_dimension_numbers<[2], [1], [1], [2], [0, 0, 0, 1, 1, 2], [0], [0]>} : vector<4x8x8xf32>, vector<4x8x32xf32>, vector<4x8x32xf32> -> vector<4x8x32xf32>
    "tpu.trace_stop"() : () -> ()
    %cst_31 = arith.constant dense<0.000000e+00> : vector<8x32xf32>
    %34 = vector.multi_reduction <add>, %33, %cst_31 [0] : vector<4x8x32xf32> to vector<8x32xf32>
    %35 = arith.addf %34, %6 : vector<8x32xf32>
    %c0_32 = arith.constant 0 : index
    %c0_33 = arith.constant 0 : index
    %c0_34 = arith.constant 0 : index
    %c0_35 = arith.constant 0 : index
    %36 = vector.load %arg12[%c0_32, %c0_33, %c0_34, %c0_35] : memref<2x6x1x32xf32, #tpu.memory_space<vmem>>, vector<1x1x1x32xf32>
    %37 = vector.shape_cast %36 : vector<1x1x1x32xf32> to vector<1x32xf32>
    %c0_36 = arith.constant 0 : index
    %c1 = arith.constant 1 : index
    %c0_37 = arith.constant 0 : index
    %c0_38 = arith.constant 0 : index
    %38 = vector.load %arg12[%c0_36, %c1, %c0_37, %c0_38] : memref<2x6x1x32xf32, #tpu.memory_space<vmem>>, vector<1x1x1x32xf32>
    %39 = vector.shape_cast %38 : vector<1x1x1x32xf32> to vector<1x32xf32>
    %cst_39 = arith.constant dense<0.000000e+00> : vector<8xf32>
    %40 = vector.multi_reduction <add>, %35, %cst_39 [1] : vector<8x32xf32> to vector<8xf32>
    %41 = vector.shape_cast %40 : vector<8xf32> to vector<8x1xf32>
    %cst_40 = arith.constant 3.200000e+01 : f32
    %42 = vector.broadcast %cst_40 : f32 to vector<8x1xf32>
    %43 = arith.divf %41, %42 : vector<8x1xf32>
    %44 = vector.broadcast %43 : vector<8x1xf32> to vector<8x32xf32>
    %45 = arith.subf %35, %44 : vector<8x32xf32>
    %46 = arith.mulf %45, %45 : vector<8x32xf32>
    %cst_41 = arith.constant dense<0.000000e+00> : vector<8xf32>
    %47 = vector.multi_reduction <add>, %46, %cst_41 [1] : vector<8x32xf32> to vector<8xf32>
    %48 = vector.shape_cast %47 : vector<8xf32> to vector<8x1xf32>
    %cst_42 = arith.constant 3.200000e+01 : f32
    %49 = vector.broadcast %cst_42 : f32 to vector<8x1xf32>
    %50 = arith.divf %48, %49 : vector<8x1xf32>
    %cst_43 = arith.constant 9.99999997E-7 : f32
    %51 = vector.broadcast %cst_43 : f32 to vector<8x1xf32>
    %52 = arith.addf %50, %51 : vector<8x1xf32>
    %53 = math.rsqrt %52 : vector<8x1xf32>
    %54 = vector.broadcast %53 : vector<8x1xf32> to vector<8x32xf32>
    %55 = arith.mulf %45, %54 : vector<8x32xf32>
    %56 = vector.broadcast %37 : vector<1x32xf32> to vector<8x32xf32>
    %57 = arith.mulf %55, %56 : vector<8x32xf32>
    %58 = vector.broadcast %39 : vector<1x32xf32> to vector<8x32xf32>
    %59 = arith.addf %57, %58 : vector<8x32xf32>
    %60 = arith.addf %6, %59 : vector<8x32xf32>
    %c0_44 = arith.constant 0 : index
    %c2 = arith.constant 2 : index
    %c0_45 = arith.constant 0 : index
    %c0_46 = arith.constant 0 : index
    %61 = vector.load %arg12[%c0_44, %c2, %c0_45, %c0_46] : memref<2x6x1x32xf32, #tpu.memory_space<vmem>>, vector<1x1x1x32xf32>
    %62 = vector.shape_cast %61 : vector<1x1x1x32xf32> to vector<1x32xf32>
    %c0_47 = arith.constant 0 : index
    %c3 = arith.constant 3 : index
    %c0_48 = arith.constant 0 : index
    %c0_49 = arith.constant 0 : index
    %63 = vector.load %arg12[%c0_47, %c3, %c0_48, %c0_49] : memref<2x6x1x32xf32, #tpu.memory_space<vmem>>, vector<1x1x1x32xf32>
    %64 = vector.shape_cast %63 : vector<1x1x1x32xf32> to vector<1x32xf32>
    %cst_50 = arith.constant dense<0.000000e+00> : vector<8xf32>
    %65 = vector.multi_reduction <add>, %60, %cst_50 [1] : vector<8x32xf32> to vector<8xf32>
    %66 = vector.shape_cast %65 : vector<8xf32> to vector<8x1xf32>
    %cst_51 = arith.constant 3.200000e+01 : f32
    %67 = vector.broadcast %cst_51 : f32 to vector<8x1xf32>
    %68 = arith.divf %66, %67 : vector<8x1xf32>
    %69 = vector.broadcast %68 : vector<8x1xf32> to vector<8x32xf32>
    %70 = arith.subf %60, %69 : vector<8x32xf32>
    %71 = arith.mulf %70, %70 : vector<8x32xf32>
    %cst_52 = arith.constant dense<0.000000e+00> : vector<8xf32>
    %72 = vector.multi_reduction <add>, %71, %cst_52 [1] : vector<8x32xf32> to vector<8xf32>
    %73 = vector.shape_cast %72 : vector<8xf32> to vector<8x1xf32>
    %cst_53 = arith.constant 3.200000e+01 : f32
    %74 = vector.broadcast %cst_53 : f32 to vector<8x1xf32>
    %75 = arith.divf %73, %74 : vector<8x1xf32>
    %cst_54 = arith.constant 9.99999974E-6 : f32
    %76 = vector.broadcast %cst_54 : f32 to vector<8x1xf32>
    %77 = arith.addf %75, %76 : vector<8x1xf32>
    %78 = math.rsqrt %77 : vector<8x1xf32>
    %79 = vector.broadcast %78 : vector<8x1xf32> to vector<8x32xf32>
    %80 = arith.mulf %70, %79 : vector<8x32xf32>
    %81 = vector.broadcast %62 : vector<1x32xf32> to vector<8x32xf32>
    %82 = arith.mulf %80, %81 : vector<8x32xf32>
    %83 = vector.broadcast %64 : vector<1x32xf32> to vector<8x32xf32>
    %84 = arith.addf %82, %83 : vector<8x32xf32>
    %c0_55 = arith.constant 0 : index
    %c0_56 = arith.constant 0 : index
    %c0_57 = arith.constant 0 : index
    %85 = vector.load %arg8[%c0_55, %c0_56, %c0_57] : memref<2x32x64xf32, #tpu.memory_space<vmem>>, vector<1x32x64xf32>
    %86 = vector.shape_cast %85 : vector<1x32x64xf32> to vector<32x64xf32>
    %cst_58 = arith.constant dense<0.000000e+00> : vector<8x64xf32>
    %87 = tpu.matmul %84, %86, %cst_58 {dimension_numbers = #tpu.dot_dimension_numbers<[1], [0], [0], [1], [0, 0, 1, 1], [], []>} : vector<8x32xf32>, vector<32x64xf32>, vector<8x64xf32> -> vector<8x64xf32>
    %c0_59 = arith.constant 0 : index
    %c0_60 = arith.constant 0 : index
    %c0_61 = arith.constant 0 : index
    %88 = vector.load %arg9[%c0_59, %c0_60, %c0_61] : memref<2x1x64xf32, #tpu.memory_space<vmem>>, vector<1x1x64xf32>
    %89 = vector.shape_cast %88 : vector<1x1x64xf32> to vector<1x64xf32>
    %90 = vector.broadcast %89 : vector<1x64xf32> to vector<8x64xf32>
    %91 = arith.addf %87, %90 : vector<8x64xf32>
    %cst_62 = arith.constant 0.000000e+00 : f32
    %92 = vector.broadcast %cst_62 : f32 to vector<8x64xf32>
    %93 = arith.maximumf %91, %92 : vector<8x64xf32>
    %c0_63 = arith.constant 0 : index
    %c0_64 = arith.constant 0 : index
    %c0_65 = arith.constant 0 : index
    %94 = vector.load %arg10[%c0_63, %c0_64, %c0_65] : memref<2x64x32xf32, #tpu.memory_space<vmem>>, vector<1x64x32xf32>
    %95 = vector.shape_cast %94 : vector<1x64x32xf32> to vector<64x32xf32>
    %cst_66 = arith.constant dense<0.000000e+00> : vector<8x32xf32>
    %96 = tpu.matmul %93, %95, %cst_66 {dimension_numbers = #tpu.dot_dimension_numbers<[1], [0], [0], [1], [0, 0, 1, 1], [], []>} : vector<8x64xf32>, vector<64x32xf32>, vector<8x32xf32> -> vector<8x32xf32>
    %c0_67 = arith.constant 0 : index
    %c0_68 = arith.constant 0 : index
    %c0_69 = arith.constant 0 : index
    %97 = vector.load %arg11[%c0_67, %c0_68, %c0_69] : memref<2x1x32xf32, #tpu.memory_space<vmem>>, vector<1x1x32xf32>
    %98 = vector.shape_cast %97 : vector<1x1x32xf32> to vector<1x32xf32>
    %99 = vector.broadcast %98 : vector<1x32xf32> to vector<8x32xf32>
    %100 = arith.addf %96, %99 : vector<8x32xf32>
    %101 = arith.addf %84, %100 : vector<8x32xf32>
    %c0_70 = arith.constant 0 : index
    %c4 = arith.constant 4 : index
    %c0_71 = arith.constant 0 : index
    %c0_72 = arith.constant 0 : index
    %102 = vector.load %arg12[%c0_70, %c4, %c0_71, %c0_72] : memref<2x6x1x32xf32, #tpu.memory_space<vmem>>, vector<1x1x1x32xf32>
    %103 = vector.shape_cast %102 : vector<1x1x1x32xf32> to vector<1x32xf32>
    %c0_73 = arith.constant 0 : index
    %c5 = arith.constant 5 : index
    %c0_74 = arith.constant 0 : index
    %c0_75 = arith.constant 0 : index
    %104 = vector.load %arg12[%c0_73, %c5, %c0_74, %c0_75] : memref<2x6x1x32xf32, #tpu.memory_space<vmem>>, vector<1x1x1x32xf32>
    %105 = vector.shape_cast %104 : vector<1x1x1x32xf32> to vector<1x32xf32>
    %cst_76 = arith.constant dense<0.000000e+00> : vector<8xf32>
    %106 = vector.multi_reduction <add>, %101, %cst_76 [1] : vector<8x32xf32> to vector<8xf32>
    %107 = vector.shape_cast %106 : vector<8xf32> to vector<8x1xf32>
    %cst_77 = arith.constant 3.200000e+01 : f32
    %108 = vector.broadcast %cst_77 : f32 to vector<8x1xf32>
    %109 = arith.divf %107, %108 : vector<8x1xf32>
    %110 = vector.broadcast %109 : vector<8x1xf32> to vector<8x32xf32>
    %111 = arith.subf %101, %110 : vector<8x32xf32>
    %112 = arith.mulf %111, %111 : vector<8x32xf32>
    %cst_78 = arith.constant dense<0.000000e+00> : vector<8xf32>
    %113 = vector.multi_reduction <add>, %112, %cst_78 [1] : vector<8x32xf32> to vector<8xf32>
    %114 = vector.shape_cast %113 : vector<8xf32> to vector<8x1xf32>
    %cst_79 = arith.constant 3.200000e+01 : f32
    %115 = vector.broadcast %cst_79 : f32 to vector<8x1xf32>
    %116 = arith.divf %114, %115 : vector<8x1xf32>
    %cst_80 = arith.constant 9.99999974E-6 : f32
    %117 = vector.broadcast %cst_80 : f32 to vector<8x1xf32>
    %118 = arith.addf %116, %117 : vector<8x1xf32>
    %119 = math.rsqrt %118 : vector<8x1xf32>
    %120 = vector.broadcast %119 : vector<8x1xf32> to vector<8x32xf32>
    %121 = arith.mulf %111, %120 : vector<8x32xf32>
    %122 = vector.broadcast %103 : vector<1x32xf32> to vector<8x32xf32>
    %123 = arith.mulf %121, %122 : vector<8x32xf32>
    %124 = vector.broadcast %105 : vector<1x32xf32> to vector<8x32xf32>
    %125 = arith.addf %123, %124 : vector<8x32xf32>
    %126 = vector.shape_cast %125 : vector<8x32xf32> to vector<1x8x32xf32>
    %127 = vector.broadcast %126 : vector<1x8x32xf32> to vector<4x8x32xf32>
    %c1_81 = arith.constant 1 : index
    %c0_82 = arith.constant 0 : index
    %c0_83 = arith.constant 0 : index
    %c0_84 = arith.constant 0 : index
    %128 = vector.load %arg4[%c1_81, %c0_82, %c0_83, %c0_84] : memref<2x4x32x8xf32, #tpu.memory_space<vmem>>, vector<1x4x32x8xf32>
    %129 = vector.shape_cast %128 : vector<1x4x32x8xf32> to vector<4x32x8xf32>
    "tpu.trace_start"() <{level = 10 : i32, message = "hsd,hdk->hsk"}> : () -> ()
    %cst_85 = arith.constant dense<0.000000e+00> : vector<4x8x8xf32>
    %130 = tpu.matmul %127, %129, %cst_85 {dimension_numbers = #tpu.dot_dimension_numbers<[2], [1], [1], [2], [0, 0, 0, 1, 1, 2], [0], [0]>} : vector<4x8x32xf32>, vector<4x32x8xf32>, vector<4x8x8xf32> -> vector<4x8x8xf32>
    "tpu.trace_stop"() : () -> ()
    %c1_86 = arith.constant 1 : index
    %c0_87 = arith.constant 0 : index
    %c0_88 = arith.constant 0 : index
    %c0_89 = arith.constant 0 : index
    %131 = vector.load %arg5[%c1_86, %c0_87, %c0_88, %c0_89] : memref<2x4x32x8xf32, #tpu.memory_space<vmem>>, vector<1x4x32x8xf32>
    %132 = vector.shape_cast %131 : vector<1x4x32x8xf32> to vector<4x32x8xf32>
    "tpu.trace_start"() <{level = 10 : i32, message = "hsd,hdk->hsk"}> : () -> ()
    %cst_90 = arith.constant dense<0.000000e+00> : vector<4x8x8xf32>
    %133 = tpu.matmul %127, %132, %cst_90 {dimension_numbers = #tpu.dot_dimension_numbers<[2], [1], [1], [2], [0, 0, 0, 1, 1, 2], [0], [0]>} : vector<4x8x32xf32>, vector<4x32x8xf32>, vector<4x8x8xf32> -> vector<4x8x8xf32>
    "tpu.trace_stop"() : () -> ()
    %c1_91 = arith.constant 1 : index
    %c0_92 = arith.constant 0 : index
    %c0_93 = arith.constant 0 : index
    %c0_94 = arith.constant 0 : index
    %134 = vector.load %arg6[%c1_91, %c0_92, %c0_93, %c0_94] : memref<2x4x32x8xf32, #tpu.memory_space<vmem>>, vector<1x4x32x8xf32>
    %135 = vector.shape_cast %134 : vector<1x4x32x8xf32> to vector<4x32x8xf32>
    "tpu.trace_start"() <{level = 10 : i32, message = "hsd,hdk->hsk"}> : () -> ()
    %cst_95 = arith.constant dense<0.000000e+00> : vector<4x8x8xf32>
    %136 = tpu.matmul %127, %135, %cst_95 {dimension_numbers = #tpu.dot_dimension_numbers<[2], [1], [1], [2], [0, 0, 0, 1, 1, 2], [0], [0]>} : vector<4x8x32xf32>, vector<4x32x8xf32>, vector<4x8x8xf32> -> vector<4x8x8xf32>
    "tpu.trace_stop"() : () -> ()
    "tpu.trace_start"() <{level = 10 : i32, message = "hqd,hkd->hqk"}> : () -> ()
    %cst_96 = arith.constant dense<0.000000e+00> : vector<4x8x8xf32>
    %137 = tpu.matmul %130, %133, %cst_96 {dimension_numbers = #tpu.dot_dimension_numbers<[2], [2], [1], [1], [0, 0, 0, 1, 1, 1], [0], [0]>} : vector<4x8x8xf32>, vector<4x8x8xf32>, vector<4x8x8xf32> -> vector<4x8x8xf32>
    "tpu.trace_stop"() : () -> ()
    %cst_97 = arith.constant 0.353553385 : f32
    %138 = vector.broadcast %cst_97 : f32 to vector<4x8x8xf32>
    %139 = arith.mulf %137, %138 : vector<4x8x8xf32>
    %cst_98 = arith.constant dense<0xFF800000> : vector<4x8xf32>
    %140 = vector.multi_reduction <maximumf>, %139, %cst_98 [2] : vector<4x8x8xf32> to vector<4x8xf32>
    %141 = vector.shape_cast %140 : vector<4x8xf32> to vector<4x8x1xf32>
    %142 = vector.broadcast %141 : vector<4x8x1xf32> to vector<4x8x8xf32>
    %143 = arith.subf %139, %142 : vector<4x8x8xf32>
    %144 = math.exp %143 : vector<4x8x8xf32>
    %cst_99 = arith.constant dense<0.000000e+00> : vector<4x8xf32>
    %145 = vector.multi_reduction <add>, %144, %cst_99 [2] : vector<4x8x8xf32> to vector<4x8xf32>
    %146 = vector.shape_cast %145 : vector<4x8xf32> to vector<4x8x1xf32>
    %147 = vector.broadcast %146 : vector<4x8x1xf32> to vector<4x8x8xf32>
    %148 = arith.divf %144, %147 : vector<4x8x8xf32>
    "tpu.trace_start"() <{level = 10 : i32, message = "hqk,hkd->hqd"}> : () -> ()
    %cst_100 = arith.constant dense<0.000000e+00> : vector<4x8x8xf32>
    %149 = tpu.matmul %148, %136, %cst_100 {dimension_numbers = #tpu.dot_dimension_numbers<[2], [1], [1], [2], [0, 0, 0, 1, 1, 2], [0], [0]>} : vector<4x8x8xf32>, vector<4x8x8xf32>, vector<4x8x8xf32> -> vector<4x8x8xf32>
    "tpu.trace_stop"() : () -> ()
    %c1_101 = arith.constant 1 : index
    %c0_102 = arith.constant 0 : index
    %c0_103 = arith.constant 0 : index
    %c0_104 = arith.constant 0 : index
    %150 = vector.load %arg7[%c1_101, %c0_102, %c0_103, %c0_104] : memref<2x4x8x32xf32, #tpu.memory_space<vmem>>, vector<1x4x8x32xf32>
    %151 = vector.shape_cast %150 : vector<1x4x8x32xf32> to vector<4x8x32xf32>
    "tpu.trace_start"() <{level = 10 : i32, message = "hsd,hdm->hsm"}> : () -> ()
    %cst_105 = arith.constant dense<0.000000e+00> : vector<4x8x32xf32>
    %152 = tpu.matmul %149, %151, %cst_105 {dimension_numbers = #tpu.dot_dimension_numbers<[2], [1], [1], [2], [0, 0, 0, 1, 1, 2], [0], [0]>} : vector<4x8x8xf32>, vector<4x8x32xf32>, vector<4x8x32xf32> -> vector<4x8x32xf32>
    "tpu.trace_stop"() : () -> ()
    %cst_106 = arith.constant dense<0.000000e+00> : vector<8x32xf32>
    %153 = vector.multi_reduction <add>, %152, %cst_106 [0] : vector<4x8x32xf32> to vector<8x32xf32>
    %154 = arith.addf %153, %125 : vector<8x32xf32>
    %c1_107 = arith.constant 1 : index
    %c0_108 = arith.constant 0 : index
    %c0_109 = arith.constant 0 : index
    %c0_110 = arith.constant 0 : index
    %155 = vector.load %arg12[%c1_107, %c0_108, %c0_109, %c0_110] : memref<2x6x1x32xf32, #tpu.memory_space<vmem>>, vector<1x1x1x32xf32>
    %156 = vector.shape_cast %155 : vector<1x1x1x32xf32> to vector<1x32xf32>
    %c1_111 = arith.constant 1 : index
    %c1_112 = arith.constant 1 : index
    %c0_113 = arith.constant 0 : index
    %c0_114 = arith.constant 0 : index
    %157 = vector.load %arg12[%c1_111, %c1_112, %c0_113, %c0_114] : memref<2x6x1x32xf32, #tpu.memory_space<vmem>>, vector<1x1x1x32xf32>
    %158 = vector.shape_cast %157 : vector<1x1x1x32xf32> to vector<1x32xf32>
    %cst_115 = arith.constant dense<0.000000e+00> : vector<8xf32>
    %159 = vector.multi_reduction <add>, %154, %cst_115 [1] : vector<8x32xf32> to vector<8xf32>
    %160 = vector.shape_cast %159 : vector<8xf32> to vector<8x1xf32>
    %cst_116 = arith.constant 3.200000e+01 : f32
    %161 = vector.broadcast %cst_116 : f32 to vector<8x1xf32>
    %162 = arith.divf %160, %161 : vector<8x1xf32>
    %163 = vector.broadcast %162 : vector<8x1xf32> to vector<8x32xf32>
    %164 = arith.subf %154, %163 : vector<8x32xf32>
    %165 = arith.mulf %164, %164 : vector<8x32xf32>
    %cst_117 = arith.constant dense<0.000000e+00> : vector<8xf32>
    %166 = vector.multi_reduction <add>, %165, %cst_117 [1] : vector<8x32xf32> to vector<8xf32>
    %167 = vector.shape_cast %166 : vector<8xf32> to vector<8x1xf32>
    %cst_118 = arith.constant 3.200000e+01 : f32
    %168 = vector.broadcast %cst_118 : f32 to vector<8x1xf32>
    %169 = arith.divf %167, %168 : vector<8x1xf32>
    %cst_119 = arith.constant 9.99999997E-7 : f32
    %170 = vector.broadcast %cst_119 : f32 to vector<8x1xf32>
    %171 = arith.addf %169, %170 : vector<8x1xf32>
    %172 = math.rsqrt %171 : vector<8x1xf32>
    %173 = vector.broadcast %172 : vector<8x1xf32> to vector<8x32xf32>
    %174 = arith.mulf %164, %173 : vector<8x32xf32>
    %175 = vector.broadcast %156 : vector<1x32xf32> to vector<8x32xf32>
    %176 = arith.mulf %174, %175 : vector<8x32xf32>
    %177 = vector.broadcast %158 : vector<1x32xf32> to vector<8x32xf32>
    %178 = arith.addf %176, %177 : vector<8x32xf32>
    %179 = arith.addf %125, %178 : vector<8x32xf32>
    %c1_120 = arith.constant 1 : index
    %c2_121 = arith.constant 2 : index
    %c0_122 = arith.constant 0 : index
    %c0_123 = arith.constant 0 : index
    %180 = vector.load %arg12[%c1_120, %c2_121, %c0_122, %c0_123] : memref<2x6x1x32xf32, #tpu.memory_space<vmem>>, vector<1x1x1x32xf32>
    %181 = vector.shape_cast %180 : vector<1x1x1x32xf32> to vector<1x32xf32>
    %c1_124 = arith.constant 1 : index
    %c3_125 = arith.constant 3 : index
    %c0_126 = arith.constant 0 : index
    %c0_127 = arith.constant 0 : index
    %182 = vector.load %arg12[%c1_124, %c3_125, %c0_126, %c0_127] : memref<2x6x1x32xf32, #tpu.memory_space<vmem>>, vector<1x1x1x32xf32>
    %183 = vector.shape_cast %182 : vector<1x1x1x32xf32> to vector<1x32xf32>
    %cst_128 = arith.constant dense<0.000000e+00> : vector<8xf32>
    %184 = vector.multi_reduction <add>, %179, %cst_128 [1] : vector<8x32xf32> to vector<8xf32>
    %185 = vector.shape_cast %184 : vector<8xf32> to vector<8x1xf32>
    %cst_129 = arith.constant 3.200000e+01 : f32
    %186 = vector.broadcast %cst_129 : f32 to vector<8x1xf32>
    %187 = arith.divf %185, %186 : vector<8x1xf32>
    %188 = vector.broadcast %187 : vector<8x1xf32> to vector<8x32xf32>
    %189 = arith.subf %179, %188 : vector<8x32xf32>
    %190 = arith.mulf %189, %189 : vector<8x32xf32>
    %cst_130 = arith.constant dense<0.000000e+00> : vector<8xf32>
    %191 = vector.multi_reduction <add>, %190, %cst_130 [1] : vector<8x32xf32> to vector<8xf32>
    %192 = vector.shape_cast %191 : vector<8xf32> to vector<8x1xf32>
    %cst_131 = arith.constant 3.200000e+01 : f32
    %193 = vector.broadcast %cst_131 : f32 to vector<8x1xf32>
    %194 = arith.divf %192, %193 : vector<8x1xf32>
    %cst_132 = arith.constant 9.99999974E-6 : f32
    %195 = vector.broadcast %cst_132 : f32 to vector<8x1xf32>
    %196 = arith.addf %194, %195 : vector<8x1xf32>
    %197 = math.rsqrt %196 : vector<8x1xf32>
    %198 = vector.broadcast %197 : vector<8x1xf32> to vector<8x32xf32>
    %199 = arith.mulf %189, %198 : vector<8x32xf32>
    %200 = vector.broadcast %181 : vector<1x32xf32> to vector<8x32xf32>
    %201 = arith.mulf %199, %200 : vector<8x32xf32>
    %202 = vector.broadcast %183 : vector<1x32xf32> to vector<8x32xf32>
    %203 = arith.addf %201, %202 : vector<8x32xf32>
    %c1_133 = arith.constant 1 : index
    %c0_134 = arith.constant 0 : index
    %c0_135 = arith.constant 0 : index
    %204 = vector.load %arg8[%c1_133, %c0_134, %c0_135] : memref<2x32x64xf32, #tpu.memory_space<vmem>>, vector<1x32x64xf32>
    %205 = vector.shape_cast %204 : vector<1x32x64xf32> to vector<32x64xf32>
    %cst_136 = arith.constant dense<0.000000e+00> : vector<8x64xf32>
    %206 = tpu.matmul %203, %205, %cst_136 {dimension_numbers = #tpu.dot_dimension_numbers<[1], [0], [0], [1], [0, 0, 1, 1], [], []>} : vector<8x32xf32>, vector<32x64xf32>, vector<8x64xf32> -> vector<8x64xf32>
    %c1_137 = arith.constant 1 : index
    %c0_138 = arith.constant 0 : index
    %c0_139 = arith.constant 0 : index
    %207 = vector.load %arg9[%c1_137, %c0_138, %c0_139] : memref<2x1x64xf32, #tpu.memory_space<vmem>>, vector<1x1x64xf32>
    %208 = vector.shape_cast %207 : vector<1x1x64xf32> to vector<1x64xf32>
    %209 = vector.broadcast %208 : vector<1x64xf32> to vector<8x64xf32>
    %210 = arith.addf %206, %209 : vector<8x64xf32>
    %cst_140 = arith.constant 0.000000e+00 : f32
    %211 = vector.broadcast %cst_140 : f32 to vector<8x64xf32>
    %212 = arith.maximumf %210, %211 : vector<8x64xf32>
    %c1_141 = arith.constant 1 : index
    %c0_142 = arith.constant 0 : index
    %c0_143 = arith.constant 0 : index
    %213 = vector.load %arg10[%c1_141, %c0_142, %c0_143] : memref<2x64x32xf32, #tpu.memory_space<vmem>>, vector<1x64x32xf32>
    %214 = vector.shape_cast %213 : vector<1x64x32xf32> to vector<64x32xf32>
    %cst_144 = arith.constant dense<0.000000e+00> : vector<8x32xf32>
    %215 = tpu.matmul %212, %214, %cst_144 {dimension_numbers = #tpu.dot_dimension_numbers<[1], [0], [0], [1], [0, 0, 1, 1], [], []>} : vector<8x64xf32>, vector<64x32xf32>, vector<8x32xf32> -> vector<8x32xf32>
    %c1_145 = arith.constant 1 : index
    %c0_146 = arith.constant 0 : index
    %c0_147 = arith.constant 0 : index
    %216 = vector.load %arg11[%c1_145, %c0_146, %c0_147] : memref<2x1x32xf32, #tpu.memory_space<vmem>>, vector<1x1x32xf32>
    %217 = vector.shape_cast %216 : vector<1x1x32xf32> to vector<1x32xf32>
    %218 = vector.broadcast %217 : vector<1x32xf32> to vector<8x32xf32>
    %219 = arith.addf %215, %218 : vector<8x32xf32>
    %220 = arith.addf %203, %219 : vector<8x32xf32>
    %c1_148 = arith.constant 1 : index
    %c4_149 = arith.constant 4 : index
    %c0_150 = arith.constant 0 : index
    %c0_151 = arith.constant 0 : index
    %221 = vector.load %arg12[%c1_148, %c4_149, %c0_150, %c0_151] : memref<2x6x1x32xf32, #tpu.memory_space<vmem>>, vector<1x1x1x32xf32>
    %222 = vector.shape_cast %221 : vector<1x1x1x32xf32> to vector<1x32xf32>
    %c1_152 = arith.constant 1 : index
    %c5_153 = arith.constant 5 : index
    %c0_154 = arith.constant 0 : index
    %c0_155 = arith.constant 0 : index
    %223 = vector.load %arg12[%c1_152, %c5_153, %c0_154, %c0_155] : memref<2x6x1x32xf32, #tpu.memory_space<vmem>>, vector<1x1x1x32xf32>
    %224 = vector.shape_cast %223 : vector<1x1x1x32xf32> to vector<1x32xf32>
    %cst_156 = arith.constant dense<0.000000e+00> : vector<8xf32>
    %225 = vector.multi_reduction <add>, %220, %cst_156 [1] : vector<8x32xf32> to vector<8xf32>
    %226 = vector.shape_cast %225 : vector<8xf32> to vector<8x1xf32>
    %cst_157 = arith.constant 3.200000e+01 : f32
    %227 = vector.broadcast %cst_157 : f32 to vector<8x1xf32>
    %228 = arith.divf %226, %227 : vector<8x1xf32>
    %229 = vector.broadcast %228 : vector<8x1xf32> to vector<8x32xf32>
    %230 = arith.subf %220, %229 : vector<8x32xf32>
    %231 = arith.mulf %230, %230 : vector<8x32xf32>
    %cst_158 = arith.constant dense<0.000000e+00> : vector<8xf32>
    %232 = vector.multi_reduction <add>, %231, %cst_158 [1] : vector<8x32xf32> to vector<8xf32>
    %233 = vector.shape_cast %232 : vector<8xf32> to vector<8x1xf32>
    %cst_159 = arith.constant 3.200000e+01 : f32
    %234 = vector.broadcast %cst_159 : f32 to vector<8x1xf32>
    %235 = arith.divf %233, %234 : vector<8x1xf32>
    %cst_160 = arith.constant 9.99999974E-6 : f32
    %236 = vector.broadcast %cst_160 : f32 to vector<8x1xf32>
    %237 = arith.addf %235, %236 : vector<8x1xf32>
    %238 = math.rsqrt %237 : vector<8x1xf32>
    %239 = vector.broadcast %238 : vector<8x1xf32> to vector<8x32xf32>
    %240 = arith.mulf %230, %239 : vector<8x32xf32>
    %241 = vector.broadcast %222 : vector<1x32xf32> to vector<8x32xf32>
    %242 = arith.mulf %240, %241 : vector<8x32xf32>
    %243 = vector.broadcast %224 : vector<1x32xf32> to vector<8x32xf32>
    %244 = arith.addf %242, %243 : vector<8x32xf32>
    %c0_161 = arith.constant 0 : index
    %c0_162 = arith.constant 0 : index
    %c0_163 = arith.constant 0 : index
    %245 = vector.load %arg13[%c0_161, %c0_162, %c0_163] : memref<2x1x32xf32, #tpu.memory_space<vmem>>, vector<1x1x32xf32>
    %246 = vector.shape_cast %245 : vector<1x1x32xf32> to vector<1x32xf32>
    %c1_164 = arith.constant 1 : index
    %c0_165 = arith.constant 0 : index
    %c0_166 = arith.constant 0 : index
    %247 = vector.load %arg13[%c1_164, %c0_165, %c0_166] : memref<2x1x32xf32, #tpu.memory_space<vmem>>, vector<1x1x32xf32>
    %248 = vector.shape_cast %247 : vector<1x1x32xf32> to vector<1x32xf32>
    %cst_167 = arith.constant dense<0.000000e+00> : vector<8xf32>
    %249 = vector.multi_reduction <add>, %244, %cst_167 [1] : vector<8x32xf32> to vector<8xf32>
    %250 = vector.shape_cast %249 : vector<8xf32> to vector<8x1xf32>
    %cst_168 = arith.constant 3.200000e+01 : f32
    %251 = vector.broadcast %cst_168 : f32 to vector<8x1xf32>
    %252 = arith.divf %250, %251 : vector<8x1xf32>
    %253 = vector.broadcast %252 : vector<8x1xf32> to vector<8x32xf32>
    %254 = arith.subf %244, %253 : vector<8x32xf32>
    %255 = arith.mulf %254, %254 : vector<8x32xf32>
    %cst_169 = arith.constant dense<0.000000e+00> : vector<8xf32>
    %256 = vector.multi_reduction <add>, %255, %cst_169 [1] : vector<8x32xf32> to vector<8xf32>
    %257 = vector.shape_cast %256 : vector<8xf32> to vector<8x1xf32>
    %cst_170 = arith.constant 3.200000e+01 : f32
    %258 = vector.broadcast %cst_170 : f32 to vector<8x1xf32>
    %259 = arith.divf %257, %258 : vector<8x1xf32>
    %cst_171 = arith.constant 9.99999974E-6 : f32
    %260 = vector.broadcast %cst_171 : f32 to vector<8x1xf32>
    %261 = arith.addf %259, %260 : vector<8x1xf32>
    %262 = math.rsqrt %261 : vector<8x1xf32>
    %263 = vector.broadcast %262 : vector<8x1xf32> to vector<8x32xf32>
    %264 = arith.mulf %254, %263 : vector<8x32xf32>
    %265 = vector.broadcast %246 : vector<1x32xf32> to vector<8x32xf32>
    %266 = arith.mulf %264, %265 : vector<8x32xf32>
    %267 = vector.broadcast %248 : vector<1x32xf32> to vector<8x32xf32>
    %268 = arith.addf %266, %267 : vector<8x32xf32>
    %c0_172 = arith.constant 0 : index
    %c0_173 = arith.constant 0 : index
    %c0_174 = arith.constant 0 : index
    %269 = vector.load %arg14[%c0_172, %c0_173, %c0_174] : memref<1x8x32xf32, #tpu.memory_space<vmem>>, vector<1x8x32xf32>
    %270 = vector.shape_cast %269 : vector<1x8x32xf32> to vector<8x32xf32>
    %271 = vector.shape_cast %268 : vector<8x32xf32> to vector<1x8x32xf32>
    tpu.vector_store %arg14[%c0_172, %c0_173, %c0_174], %271 {strides = array<i32>} : memref<1x8x32xf32, #tpu.memory_space<vmem>>, vector<1x8x32xf32>,
    return
  }
  func.func @transform_0(%arg0: i32) -> (i32, i32, i32) {
    %c0_i32 = arith.constant 0 : i32
    %c0_i32_0 = arith.constant 0 : i32
    %c0_i32_1 = arith.constant 0 : i32
    return %arg0, %c0_i32, %c0_i32_0 : i32, i32, i32
  }
  func.func @transform_1(%arg0: i32) -> (i32, i32) {
    %c0_i32 = arith.constant 0 : i32
    %c0_i32_0 = arith.constant 0 : i32
    %c0_i32_1 = arith.constant 0 : i32
    return %c0_i32, %c0_i32_0 : i32, i32
  }
  func.func @transform_2(%arg0: i32) -> (i32, i32) {
    %c0_i32 = arith.constant 0 : i32
    %c0_i32_0 = arith.constant 0 : i32
    %c0_i32_1 = arith.constant 0 : i32
    return %c0_i32, %c0_i32_0 : i32, i32
  }
  func.func @transform_3(%arg0: i32) -> (i32, i32, i32, i32) {
    %c0_i32 = arith.constant 0 : i32
    %c0_i32_0 = arith.constant 0 : i32
    %c0_i32_1 = arith.constant 0 : i32
    %c0_i32_2 = arith.constant 0 : i32
    %c0_i32_3 = arith.constant 0 : i32
    return %c0_i32, %c0_i32_0, %c0_i32_1, %c0_i32_2 : i32, i32, i32, i32
  }
  func.func @transform_4(%arg0: i32) -> (i32, i32, i32, i32) {
    %c0_i32 = arith.constant 0 : i32
    %c0_i32_0 = arith.constant 0 : i32
    %c0_i32_1 = arith.constant 0 : i32
    %c0_i32_2 = arith.constant 0 : i32
    %c0_i32_3 = arith.constant 0 : i32
    return %c0_i32, %c0_i32_0, %c0_i32_1, %c0_i32_2 : i32, i32, i32, i32
  }
  func.func @transform_5(%arg0: i32) -> (i32, i32, i32, i32) {
    %c0_i32 = arith.constant 0 : i32
    %c0_i32_0 = arith.constant 0 : i32
    %c0_i32_1 = arith.constant 0 : i32
    %c0_i32_2 = arith.constant 0 : i32
    %c0_i32_3 = arith.constant 0 : i32
    return %c0_i32, %c0_i32_0, %c0_i32_1, %c0_i32_2 : i32, i32, i32, i32
  }
  func.func @transform_6(%arg0: i32) -> (i32, i32, i32, i32) {
    %c0_i32 = arith.constant 0 : i32
    %c0_i32_0 = arith.constant 0 : i32
    %c0_i32_1 = arith.constant 0 : i32
    %c0_i32_2 = arith.constant 0 : i32
    %c0_i32_3 = arith.constant 0 : i32
    return %c0_i32, %c0_i32_0, %c0_i32_1, %c0_i32_2 : i32, i32, i32, i32
  }
  func.func @transform_7(%arg0: i32) -> (i32, i32, i32) {
    %c0_i32 = arith.constant 0 : i32
    %c0_i32_0 = arith.constant 0 : i32
    %c0_i32_1 = arith.constant 0 : i32
    %c0_i32_2 = arith.constant 0 : i32
    return %c0_i32, %c0_i32_0, %c0_i32_1 : i32, i32, i32
  }
  func.func @transform_8(%arg0: i32) -> (i32, i32, i32) {
    %c0_i32 = arith.constant 0 : i32
    %c0_i32_0 = arith.constant 0 : i32
    %c0_i32_1 = arith.constant 0 : i32
    %c0_i32_2 = arith.constant 0 : i32
    return %c0_i32, %c0_i32_0, %c0_i32_1 : i32, i32, i32
  }
  func.func @transform_9(%arg0: i32) -> (i32, i32, i32) {
    %c0_i32 = arith.constant 0 : i32
    %c0_i32_0 = arith.constant 0 : i32
    %c0_i32_1 = arith.constant 0 : i32
    %c0_i32_2 = arith.constant 0 : i32
    return %c0_i32, %c0_i32_0, %c0_i32_1 : i32, i32, i32
  }
  func.func @transform_10(%arg0: i32) -> (i32, i32, i32) {
    %c0_i32 = arith.constant 0 : i32
    %c0_i32_0 = arith.constant 0 : i32
    %c0_i32_1 = arith.constant 0 : i32
    %c0_i32_2 = arith.constant 0 : i32
    return %c0_i32, %c0_i32_0, %c0_i32_1 : i32, i32, i32
  }
  func.func @transform_11(%arg0: i32) -> (i32, i32, i32, i32) {
    %c0_i32 = arith.constant 0 : i32
    %c0_i32_0 = arith.constant 0 : i32
    %c0_i32_1 = arith.constant 0 : i32
    %c0_i32_2 = arith.constant 0 : i32
    %c0_i32_3 = arith.constant 0 : i32
    return %c0_i32, %c0_i32_0, %c0_i32_1, %c0_i32_2 : i32, i32, i32, i32
  }
  func.func @transform_12(%arg0: i32) -> (i32, i32, i32) {
    %c0_i32 = arith.constant 0 : i32
    %c0_i32_0 = arith.constant 0 : i32
    %c0_i32_1 = arith.constant 0 : i32
    %c0_i32_2 = arith.constant 0 : i32
    return %c0_i32, %c0_i32_0, %c0_i32_1 : i32, i32, i32
  }
  func.func @transform_13(%arg0: i32) -> (i32, i32, i32) {
    %c0_i32 = arith.constant 0 : i32
    %c0_i32_0 = arith.constant 0 : i32
    %c0_i32_1 = arith.constant 0 : i32
    return %arg0, %c0_i32, %c0_i32_0 : i32, i32, i32
  }
}

</mosaic_0001>

<llo_original>
// kernel: encoder_forward.1
$region0: #{encoder_forward.1}
  #allocation0 [shape = 'u32[]', space=smem, size = 0x4, offset = 0x4, fixed_abs, tag = 'smem constant byte address 0x4 - core index']
  #allocation1 [shape = 'u32[144,128]{1,0:T(1,128)}', space=vmem, size = 0x12000, scoped, tag = 'internal scratch']
  %s0 = inlined_call_operand.vmem [shape: f32[2,8,4], index: 0, kind: input, shape index: {}]
  %s1 = inlined_call_operand.vmem [shape: f32[4,32], index: 1, kind: input, shape index: {}]
  %s2 = inlined_call_operand.vmem [shape: f32[1,32], index: 2, kind: input, shape index: {}]
  %s3 = inlined_call_operand.vmem [shape: f32[2,4,32,8], index: 3, kind: input, shape index: {}]
  %s4 = inlined_call_operand.vmem [shape: f32[2,4,32,8], index: 4, kind: input, shape index: {}]
  %s5 = inlined_call_operand.vmem [shape: f32[2,4,32,8], index: 5, kind: input, shape index: {}]
  %s6 = inlined_call_operand.vmem [shape: f32[2,4,8,32], index: 6, kind: input, shape index: {}]
  %s7 = inlined_call_operand.vmem [shape: f32[2,32,64], index: 7, kind: input, shape index: {}]
  %s8 = inlined_call_operand.vmem [shape: f32[2,1,64], index: 8, kind: input, shape index: {}]
  %s9 = inlined_call_operand.vmem [shape: f32[2,64,32], index: 9, kind: input, shape index: {}]
  %s10 = inlined_call_operand.vmem [shape: f32[2,1,32], index: 10, kind: input, shape index: {}]
  %s11 = inlined_call_operand.vmem [shape: f32[2,6,1,32], index: 11, kind: input, shape index: {}]
  %s12 = inlined_call_operand.vmem [shape: f32[2,1,32], index: 12, kind: input, shape index: {}]
  %s13 = inlined_call_operand.hbm [shape: f32[2,8,32], index: 13, kind: output, shape index: {}]
  %s14 = sld [smem:[#allocation0]]
  $region85: #{encoder_forward.1} parent=0
    _
  %s16 = ssub.s32 1, %s14
  %s17 = scalar_select 0, %s16, %s14
  $region1: #{encoder_forward.1} parent=0
    #allocation2 [shape = 'u8[8192]{0}', space=vmem, size = 0x2000, scoped, tag = 'output window, operand 0']
    #allocation3 [shape = 's32[2]{0}', space=sflag, size = 0x8, scoped, tag = 'scoped memory for encoder_forward.1']
    %18 = vsyncpa [#allocation3], 0
    %s19 = scalar_lea.sflag [#allocation3], 1
    %20 = vsyncpa %s19, 0
    loop: start=0, step=1, limit=4
    $region2: #{encoder_forward.1} parent=1 // loop_pre_header
      _
    $region3: #{encoder_forward.1} parent=1 // loop_header
      %s22 = sphi 0, %s26
      %p23 = scmp.ge.s32.totalorder %s22, 4
      %s32 = sphi 0, %s34
      %s35 = sphi 0, %s32
      %s36 = sphi 0, %s35
      %s52 = sphi 0, %s36
      %s56 = sphi 0, %s56
      %s58 = sphi 0, %s56
      %s59 = sphi 0, %s58
      %s73 = sphi 0, %s59
      %s77 = sphi 0, %s77
      %s79 = sphi 0, %s77
      %s80 = sphi 0, %s79
      %s94 = sphi 0, %s80
      %s98 = sphi 0, %s98
      %s100 = sphi 0, %s98
      %s101 = sphi 0, %s100
      %s115 = sphi 0, %s101
      %s119 = sphi 0, %s119
      %s121 = sphi 0, %s119
      %s122 = sphi 0, %s121
      %s136 = sphi 0, %s122
      %s140 = sphi 0, %s140
      %s142 = sphi 0, %s140
      %s143 = sphi 0, %s142
      %s157 = sphi 0, %s143
      %s161 = sphi 0, %s161
      %s163 = sphi 0, %s161
      %s164 = sphi 0, %s163
      %s178 = sphi 0, %s164
      %s182 = sphi 0, %s182
      %s184 = sphi 0, %s182
      %s185 = sphi 0, %s184
      %s199 = sphi 0, %s185
      %s203 = sphi 0, %s203
      %s205 = sphi 0, %s203
      %s206 = sphi 0, %s205
      %s220 = sphi 0, %s206
      %s224 = sphi 0, %s224
      %s226 = sphi 0, %s224
      %s227 = sphi 0, %s226
      %s241 = sphi 0, %s227
      %s245 = sphi 0, %s245
      %s247 = sphi 0, %s245
      %s248 = sphi 0, %s247
      %s262 = sphi 0, %s248
      %s266 = sphi 0, %s266
      %s268 = sphi 0, %s266
      %s269 = sphi 0, %s268
      %s283 = sphi 0, %s269
      %s287 = sphi 0, %s287
      %s289 = sphi 0, %s287
      %s290 = sphi 0, %s289
      %s304 = sphi 0, %s290
      %s310 = sphi 0, %s312
      %s313 = sphi 0, %s310
      %s314 = sphi 0, %s313
      %s330 = sphi 0, %s314
    $region4: #{encoder_forward.1} parent=1 // loop_header_branch
      %25 = sbr.rel (%p23) target = $region8
    $region5: #{encoder_forward.1} parent=1 // loop_body
      %s27 = ssub.s32 %s22, 1
      %s28 = ssub.s32 %s22, 2
      %s29 = sadd.s32 %s22, 1
      %s30 = ssub.s32 %s22, %s29
      %p31 = scmp.eq.s32.totalorder %s30, 0
      %s33 = sadd.s32 %s32, 1
      %s34 = scalar_select %p31, %s32, %s33
      %p37 = pneg %p31
      %p38 = scmp.eq.s32.totalorder %s22, 1
      %p39 = por %p37, %p38
      %p40 = scmp.ne.s32.totalorder %s32, %s35
      %p41 = scmp.eq.s32.totalorder %s22, 0
      %p42 = por %p40, %p41
      %p43 = scmp.ne.s32.totalorder %s32, %s35
      %p44 = scmp.eq.s32.totalorder %s27, 1
      %p45 = por %p43, %p44
      %p46 = scmp.ne.s32.totalorder %s35, %s36
      %p47 = scmp.eq.s32.totalorder %s27, 0
      %p48 = por %p46, %p47
      %p49 = scmp.ne.s32.totalorder %s35, %s36
      %p50 = scmp.eq.s32.totalorder %s28, 1
      %p51 = por %p49, %p50
      %p53 = scmp.ne.s32.totalorder %s36, %s52
      %p54 = scmp.eq.s32.totalorder %s28, 0
      %p55 = por %p53, %p54
      %s57 = sadd.s32 %s56, 1
      %p60 = scmp.eq.s32.totalorder %s22, 1
      %p61 = scmp.ne.s32.totalorder %s56, %s58
      %p62 = scmp.eq.s32.totalorder %s22, 0
      %p63 = por %p61, %p62
      %p64 = scmp.ne.s32.totalorder %s56, %s58
      %p65 = scmp.eq.s32.totalorder %s27, 1
      %p66 = por %p64, %p65
      %p67 = scmp.ne.s32.totalorder %s58, %s59
      %p68 = scmp.eq.s32.totalorder %s27, 0
      %p69 = por %p67, %p68
      %p70 = scmp.ne.s32.totalorder %s58, %s59
      %p71 = scmp.eq.s32.totalorder %s28, 1
      %p72 = por %p70, %p71
      %p74 = scmp.ne.s32.totalorder %s59, %s73
      %p75 = scmp.eq.s32.totalorder %s28, 0
      %p76 = por %p74, %p75
      %s78 = sadd.s32 %s77, 1
      %p81 = scmp.eq.s32.totalorder %s22, 1
      %p82 = scmp.ne.s32.totalorder %s77, %s79
      %p83 = scmp.eq.s32.totalorder %s22, 0
      %p84 = por %p82, %p83
      %p85 = scmp.ne.s32.totalorder %s77, %s79
      %p86 = scmp.eq.s32.totalorder %s27, 1
      %p87 = por %p85, %p86
      %p88 = scmp.ne.s32.totalorder %s79, %s80
      %p89 = scmp.eq.s32.totalorder %s27, 0
      %p90 = por %p88, %p89
      %p91 = scmp.ne.s32.totalorder %s79, %s80
      %p92 = scmp.eq.s32.totalorder %s28, 1
      %p93 = por %p91, %p92
      %p95 = scmp.ne.s32.totalorder %s80, %s94
      %p96 = scmp.eq.s32.totalorder %s28, 0
      %p97 = por %p95, %p96
      %s99 = sadd.s32 %s98, 1
      %p102 = scmp.eq.s32.totalorder %s22, 1
      %p103 = scmp.ne.s32.totalorder %s98, %s100
      %p104 = scmp.eq.s32.totalorder %s22, 0
      %p105 = por %p103, %p104
      %p106 = scmp.ne.s32.totalorder %s98, %s100
      %p107 = scmp.eq.s32.totalorder %s27, 1
      %p108 = por %p106, %p107
      %p109 = scmp.ne.s32.totalorder %s100, %s101
      %p110 = scmp.eq.s32.totalorder %s27, 0
      %p111 = por %p109, %p110
      %p112 = scmp.ne.s32.totalorder %s100, %s101
      %p113 = scmp.eq.s32.totalorder %s28, 1
      %p114 = por %p112, %p113
      %p116 = scmp.ne.s32.totalorder %s101, %s115
      %p117 = scmp.eq.s32.totalorder %s28, 0
      %p118 = por %p116, %p117
      %s120 = sadd.s32 %s119, 1
      %p123 = scmp.eq.s32.totalorder %s22, 1
      %p124 = scmp.ne.s32.totalorder %s119, %s121
      %p125 = scmp.eq.s32.totalorder %s22, 0
      %p126 = por %p124, %p125
      %p127 = scmp.ne.s32.totalorder %s119, %s121
      %p128 = scmp.eq.s32.totalorder %s27, 1
      %p129 = por %p127, %p128
      %p130 = scmp.ne.s32.totalorder %s121, %s122
      %p131 = scmp.eq.s32.totalorder %s27, 0
      %p132 = por %p130, %p131
      %p133 = scmp.ne.s32.totalorder %s121, %s122
      %p134 = scmp.eq.s32.totalorder %s28, 1
      %p135 = por %p133, %p134
      %p137 = scmp.ne.s32.totalorder %s122, %s136
      %p138 = scmp.eq.s32.totalorder %s28, 0
      %p139 = por %p137, %p138
      %s141 = sadd.s32 %s140, 1
      %p144 = scmp.eq.s32.totalorder %s22, 1
      %p145 = scmp.ne.s32.totalorder %s140, %s142
      %p146 = scmp.eq.s32.totalorder %s22, 0
      %p147 = por %p145, %p146
      %p148 = scmp.ne.s32.totalorder %s140, %s142
      %p149 = scmp.eq.s32.totalorder %s27, 1
      %p150 = por %p148, %p149
      %p151 = scmp.ne.s32.totalorder %s142, %s143
      %p152 = scmp.eq.s32.totalorder %s27, 0
      %p153 = por %p151, %p152
      %p154 = scmp.ne.s32.totalorder %s142, %s143
      %p155 = scmp.eq.s32.totalorder %s28, 1
      %p156 = por %p154, %p155
      %p158 = scmp.ne.s32.totalorder %s143, %s157
      %p159 = scmp.eq.s32.totalorder %s28, 0
      %p160 = por %p158, %p159
      %s162 = sadd.s32 %s161, 1
      %p165 = scmp.eq.s32.totalorder %s22, 1
      %p166 = scmp.ne.s32.totalorder %s161, %s163
      %p167 = scmp.eq.s32.totalorder %s22, 0
      %p168 = por %p166, %p167
      %p169 = scmp.ne.s32.totalorder %s161, %s163
      %p170 = scmp.eq.s32.totalorder %s27, 1
      %p171 = por %p169, %p170
      %p172 = scmp.ne.s32.totalorder %s163, %s164
      %p173 = scmp.eq.s32.totalorder %s27, 0
      %p174 = por %p172, %p173
      %p175 = scmp.ne.s32.totalorder %s163, %s164
      %p176 = scmp.eq.s32.totalorder %s28, 1
      %p177 = por %p175, %p176
      %p179 = scmp.ne.s32.totalorder %s164, %s178
      %p180 = scmp.eq.s32.totalorder %s28, 0
      %p181 = por %p179, %p180
      %s183 = sadd.s32 %s182, 1
      %p186 = scmp.eq.s32.totalorder %s22, 1
      %p187 = scmp.ne.s32.totalorder %s182, %s184
      %p188 = scmp.eq.s32.totalorder %s22, 0
      %p189 = por %p187, %p188
      %p190 = scmp.ne.s32.totalorder %s182, %s184
      %p191 = scmp.eq.s32.totalorder %s27, 1
      %p192 = por %p190, %p191
      %p193 = scmp.ne.s32.totalorder %s184, %s185
      %p194 = scmp.eq.s32.totalorder %s27, 0
      %p195 = por %p193, %p194
      %p196 = scmp.ne.s32.totalorder %s184, %s185
      %p197 = scmp.eq.s32.totalorder %s28, 1
      %p198 = por %p196, %p197
      %p200 = scmp.ne.s32.totalorder %s185, %s199
      %p201 = scmp.eq.s32.totalorder %s28, 0
      %p202 = por %p200, %p201
      %s204 = sadd.s32 %s203, 1
      %p207 = scmp.eq.s32.totalorder %s22, 1
      %p208 = scmp.ne.s32.totalorder %s203, %s205
      %p209 = scmp.eq.s32.totalorder %s22, 0
      %p210 = por %p208, %p209
      %p211 = scmp.ne.s32.totalorder %s203, %s205
      %p212 = scmp.eq.s32.totalorder %s27, 1
      %p213 = por %p211, %p212
      %p214 = scmp.ne.s32.totalorder %s205, %s206
      %p215 = scmp.eq.s32.totalorder %s27, 0
      %p216 = por %p214, %p215
      %p217 = scmp.ne.s32.totalorder %s205, %s206
      %p218 = scmp.eq.s32.totalorder %s28, 1
      %p219 = por %p217, %p218
      %p221 = scmp.ne.s32.totalorder %s206, %s220
      %p222 = scmp.eq.s32.totalorder %s28, 0
      %p223 = por %p221, %p222
      %s225 = sadd.s32 %s224, 1
      %p228 = scmp.eq.s32.totalorder %s22, 1
      %p229 = scmp.ne.s32.totalorder %s224, %s226
      %p230 = scmp.eq.s32.totalorder %s22, 0
      %p231 = por %p229, %p230
      %p232 = scmp.ne.s32.totalorder %s224, %s226
      %p233 = scmp.eq.s32.totalorder %s27, 1
      %p234 = por %p232, %p233
      %p235 = scmp.ne.s32.totalorder %s226, %s227
      %p236 = scmp.eq.s32.totalorder %s27, 0
      %p237 = por %p235, %p236
      %p238 = scmp.ne.s32.totalorder %s226, %s227
      %p239 = scmp.eq.s32.totalorder %s28, 1
      %p240 = por %p238, %p239
      %p242 = scmp.ne.s32.totalorder %s227, %s241
      %p243 = scmp.eq.s32.totalorder %s28, 0
      %p244 = por %p242, %p243
      %s246 = sadd.s32 %s245, 1
      %p249 = scmp.eq.s32.totalorder %s22, 1
      %p250 = scmp.ne.s32.totalorder %s245, %s247
      %p251 = scmp.eq.s32.totalorder %s22, 0
      %p252 = por %p250, %p251
      %p253 = scmp.ne.s32.totalorder %s245, %s247
      %p254 = scmp.eq.s32.totalorder %s27, 1
      %p255 = por %p253, %p254
      %p256 = scmp.ne.s32.totalorder %s247, %s248
      %p257 = scmp.eq.s32.totalorder %s27, 0
      %p258 = por %p256, %p257
      %p259 = scmp.ne.s32.totalorder %s247, %s248
      %p260 = scmp.eq.s32.totalorder %s28, 1
      %p261 = por %p259, %p260
      %p263 = scmp.ne.s32.totalorder %s248, %s262
      %p264 = scmp.eq.s32.totalorder %s28, 0
      %p265 = por %p263, %p264
      %s267 = sadd.s32 %s266, 1
      %p270 = scmp.eq.s32.totalorder %s22, 1
      %p271 = scmp.ne.s32.totalorder %s266, %s268
      %p272 = scmp.eq.s32.totalorder %s22, 0
      %p273 = por %p271, %p272
      %p274 = scmp.ne.s32.totalorder %s266, %s268
      %p275 = scmp.eq.s32.totalorder %s27, 1
      %p276 = por %p274, %p275
      %p277 = scmp.ne.s32.totalorder %s268, %s269
      %p278 = scmp.eq.s32.totalorder %s27, 0
      %p279 = por %p277, %p278
      %p280 = scmp.ne.s32.totalorder %s268, %s269
      %p281 = scmp.eq.s32.totalorder %s28, 1
      %p282 = por %p280, %p281
      %p284 = scmp.ne.s32.totalorder %s269, %s283
      %p285 = scmp.eq.s32.totalorder %s28, 0
      %p286 = por %p284, %p285
      %s288 = sadd.s32 %s287, 1
      %p291 = scmp.eq.s32.totalorder %s22, 1
      %p292 = scmp.ne.s32.totalorder %s287, %s289
      %p293 = scmp.eq.s32.totalorder %s22, 0
      %p294 = por %p292, %p293
      %p295 = scmp.ne.s32.totalorder %s287, %s289
      %p296 = scmp.eq.s32.totalorder %s27, 1
      %p297 = por %p295, %p296
      %p298 = scmp.ne.s32.totalorder %s289, %s290
      %p299 = scmp.eq.s32.totalorder %s27, 0
      %p300 = por %p298, %p299
      %p301 = scmp.ne.s32.totalorder %s289, %s290
      %p302 = scmp.eq.s32.totalorder %s28, 1
      %p303 = por %p301, %p302
      %p305 = scmp.ne.s32.totalorder %s290, %s304
      %p306 = scmp.eq.s32.totalorder %s28, 0
      %p307 = por %p305, %p306
      %s308 = ssub.s32 %s22, %s29
      %p309 = scmp.eq.s32.totalorder %s308, 0
      %s311 = sadd.s32 %s310, 1
      %s312 = scalar_select %p309, %s310, %s311
      %p315 = pneg %p309
      %p316 = scmp.eq.s32.totalorder %s22, 1
      %p317 = por %p315, %p316
      %p318 = scmp.ne.s32.totalorder %s310, %s313
      %p319 = scmp.eq.s32.totalorder %s22, 0
      %p320 = por %p318, %p319
      %p321 = scmp.ne.s32.totalorder %s310, %s313
      %p322 = scmp.eq.s32.totalorder %s27, 1
      %p323 = por %p321, %p322
      %p324 = scmp.ne.s32.totalorder %s313, %s314
      %p325 = scmp.eq.s32.totalorder %s27, 0
      %p326 = por %p324, %p325
      %p327 = scmp.ne.s32.totalorder %s313, %s314
      %p328 = scmp.eq.s32.totalorder %s28, 1
      %p329 = por %p327, %p328
      %p331 = scmp.ne.s32.totalorder %s314, %s330
      %p332 = scmp.eq.s32.totalorder %s28, 0
      %p333 = por %p331, %p332
      %p334 = scmp.le.s32.totalorder 1, %s22
      %p335 = scmp.lt.s32.totalorder %s22, 3
      %p336 = pnand %p334, %p335
      %p337 = pneg %p336
      // Predicated region
      $region9: #{encoder_forward.1} parent=5 // pred_check
        _
      $region10: #{encoder_forward.1} parent=5 // pred_check_branch
        %339 = sbr.rel (%p336) target = $region12
      $region11: #{encoder_forward.1} parent=5 // pred_region
        %s340 = ssub.s32 %s22, 1
        // Predicated region
        $region13: #{encoder_forward.1} parent=11 // pred_check
          %p341 = pneg %p69
        $region14: #{encoder_forward.1} parent=11 // pred_check_branch
          %343 = sbr.rel (%p341) target = $region16
        $region15: #{encoder_forward.1} parent=11 // pred_region
          _
        $region16: #{encoder_forward.1} parent=11 // pred_fallthru
          _
        // Predicated region
        $region17: #{encoder_forward.1} parent=11 // pred_check
          %p344 = pneg %p90
        $region18: #{encoder_forward.1} parent=11 // pred_check_branch
          %346 = sbr.rel (%p344) target = $region20
        $region19: #{encoder_forward.1} parent=11 // pred_region
          _
        $region20: #{encoder_forward.1} parent=11 // pred_fallthru
          _
        // Predicated region
        $region21: #{encoder_forward.1} parent=11 // pred_check
          %p347 = pneg %p111
        $region22: #{encoder_forward.1} parent=11 // pred_check_branch
          %349 = sbr.rel (%p347) target = $region24
        $region23: #{encoder_forward.1} parent=11 // pred_region
          _
        $region24: #{encoder_forward.1} parent=11 // pred_fallthru
          _
        // Predicated region
        $region25: #{encoder_forward.1} parent=11 // pred_check
          %p350 = pneg %p132
        $region26: #{encoder_forward.1} parent=11 // pred_check_branch
          %352 = sbr.rel (%p350) target = $region28
        $region27: #{encoder_forward.1} parent=11 // pred_region
          _
        $region28: #{encoder_forward.1} parent=11 // pred_fallthru
          _
        // Predicated region
        $region29: #{encoder_forward.1} parent=11 // pred_check
          %p353 = pneg %p153
        $region30: #{encoder_forward.1} parent=11 // pred_check_branch
          %355 = sbr.rel (%p353) target = $region32
        $region31: #{encoder_forward.1} parent=11 // pred_region
          _
        $region32: #{encoder_forward.1} parent=11 // pred_fallthru
          _
        // Predicated region
        $region33: #{encoder_forward.1} parent=11 // pred_check
          %p356 = pneg %p174
        $region34: #{encoder_forward.1} parent=11 // pred_check_branch
          %358 = sbr.rel (%p356) target = $region36
        $region35: #{encoder_forward.1} parent=11 // pred_region
          _
        $region36: #{encoder_forward.1} parent=11 // pred_fallthru
          _
        // Predicated region
        $region37: #{encoder_forward.1} parent=11 // pred_check
          %p359 = pneg %p195
        $region38: #{encoder_forward.1} parent=11 // pred_check_branch
          %361 = sbr.rel (%p359) target = $region40
        $region39: #{encoder_forward.1} parent=11 // pred_region
          _
        $region40: #{encoder_forward.1} parent=11 // pred_fallthru
          _
        // Predicated region
        $region41: #{encoder_forward.1} parent=11 // pred_check
          %p362 = pneg %p216
        $region42: #{encoder_forward.1} parent=11 // pred_check_branch
          %364 = sbr.rel (%p362) target = $region44
        $region43: #{encoder_forward.1} parent=11 // pred_region
          _
        $region44: #{encoder_forward.1} parent=11 // pred_fallthru
          _
        // Predicated region
        $region45: #{encoder_forward.1} parent=11 // pred_check
          %p365 = pneg %p237
        $region46: #{encoder_forward.1} parent=11 // pred_check_branch
          %367 = sbr.rel (%p365) target = $region48
        $region47: #{encoder_forward.1} parent=11 // pred_region
          _
        $region48: #{encoder_forward.1} parent=11 // pred_fallthru
          _
        // Predicated region
        $region49: #{encoder_forward.1} parent=11 // pred_check
          %p368 = pneg %p258
        $region50: #{encoder_forward.1} parent=11 // pred_check_branch
          %370 = sbr.rel (%p368) target = $region52
        $region51: #{encoder_forward.1} parent=11 // pred_region
          _
        $region52: #{encoder_forward.1} parent=11 // pred_fallthru
          _
        // Predicated region
        $region53: #{encoder_forward.1} parent=11 // pred_check
          %p371 = pneg %p279
        $region54: #{encoder_forward.1} parent=11 // pred_check_branch
          %373 = sbr.rel (%p371) target = $region56
        $region55: #{encoder_forward.1} parent=11 // pred_region
          _
        $region56: #{encoder_forward.1} parent=11 // pred_fallthru
          _
        // Predicated region
        $region57: #{encoder_forward.1} parent=11 // pred_check
          %p374 = pneg %p300
        $region58: #{encoder_forward.1} parent=11 // pred_check_branch
          %376 = sbr.rel (%p374) target = $region60
        $region59: #{encoder_forward.1} parent=11 // pred_region
          _
        $region60: #{encoder_forward.1} parent=11 // pred_fallthru
          _
      $region12: #{encoder_forward.1} parent=5 // pred_fallthru
        _
      %p377 = scmp.lt.s32.totalorder %s22, 2
      // Predicated region
      $region61: #{encoder_forward.1} parent=5 // pred_check
        %p378 = pneg %p377
      $region62: #{encoder_forward.1} parent=5 // pred_check_branch
        %380 = sbr.rel (%p378) target = $region64
      $region63: #{encoder_forward.1} parent=5 // pred_region
        // Predicated region
        $region65: #{encoder_forward.1} parent=63 // pred_check
          %p381 = pneg %p42
        $region66: #{encoder_forward.1} parent=63 // pred_check_branch
          %383 = sbr.rel (%p381) target = $region68
        $region67: #{encoder_forward.1} parent=63 // pred_region
          %p384 = scmp.lt.s32.totalorder %s22, 1
          %s385 = scalar_select %p384, %s22, 1
          %s386 = smul.addr %s385, 8
          %s387 = scalar_lea.vmem %s0, %s386
        $region68: #{encoder_forward.1} parent=63 // pred_fallthru
          _
      $region64: #{encoder_forward.1} parent=5 // pred_fallthru
        _
      %p388 = scmp.le.s32.totalorder 1, %s22
      %p389 = scmp.lt.s32.totalorder %s22, 3
      %p390 = pnand %p388, %p389
      %p391 = pneg %p390
      // Predicated region
      $region69: #{encoder_forward.1} parent=5 // pred_check
        _
      $region70: #{encoder_forward.1} parent=5 // pred_check_branch
        %393 = sbr.rel (%p390) target = $region72
      $region71: #{encoder_forward.1} parent=5 // pred_region
        %s394 = ssub.s32 %s22, 1
        %p395 = scmp.lt.s32.totalorder %s27, 1
        %s396 = scalar_select %p395, %s27, 1
        %s397 = smul.addr %s396, 8
        %s398 = scalar_lea.vmem %s0, %s397
        %p399 = pneg %p48
        %p400 = pneg %p45
        %p401 = pneg %p69
        %p402 = pneg %p66
        %p403 = pneg %p90
        %p404 = pneg %p87
        %p405 = pneg %p111
        %p406 = pneg %p108
        %p407 = pneg %p132
        %p408 = pneg %p129
        %p409 = pneg %p153
        %p410 = pneg %p150
        %p411 = pneg %p174
        %p412 = pneg %p171
        %p413 = pneg %p195
        %p414 = pneg %p192
        %p415 = pneg %p216
        %p416 = pneg %p213
        %p417 = pneg %p237
        %p418 = pneg %p234
        %p419 = pneg %p258
        %p420 = pneg %p255
        %p421 = pneg %p279
        %p422 = pneg %p276
        %p423 = pneg %p300
        %p424 = pneg %p297
        %p425 = pneg %p326
        %p426 = pneg %p323
        %s427 = sand.u32 %s313, 1
        %s428 = scalar_lea.sflag [#allocation3], %s427
        %s429 = sand.u32 %s313, 1
        %s430 = smul.addr %s429, 8
        %s431 = scalar_lea.vmem [#allocation2], %s430
        %p432 = scmp.lt.s32.totalorder %s27, 1
        %s433 = scalar_select %p432, %s27, 1
        %s434 = smul.addr %s433, 8
        %s435 = scalar_lea.vmem %s0, %s434
        %v436 = vld [vmem:[%s435] sm:$0xff]
        %v437 = vld [vmem:[%s1] sm:$0xf]
        %v438 = vld [vmem:[%s2] sm:$0x1]
        %v440 = vlaneseq
        %v441 = vshrl.u32 %v440, 7
        %v442 = vsub.s32 0, %v441
        %v443 = vrot.slane %v438, %v442
        %vm445 = vcmask 31744
        %v447 = vsel %vm445, %v436, 0
        %vm449 = vcmask 1043456
        %v451 = vsel %vm449, %v437, 0
        %453 = vmatprep.subr.mxu0 0.0
        %454 = vmatpush1.msra.mxu0 0.0
        %455 = vmatprep.subr.mxu0 0.0
        %456 = vmatpush1.msra.mxu0 0.0
        %457 = vmatprep.subr.mxu0 0.0
        %458 = vmatpush1.msra.mxu0 0.0
        %459 = vmatprep.subr.mxu0 0.0
        %460 = vmatpush1.msra.mxu0 0.0
        %461 = vmatprep.subr.mxu0 0.0
        %462 = vmatpush1.msra.mxu0 0.0
        %463 = vmatprep.subr.mxu0 0.0
        %464 = vmatpush1.msra.mxu0 0.0
        %465 = vmatprep.subr.mxu0 0.0
        %466 = vmatpush1.msra.mxu0 0.0
        %467 = vmatprep.subr.mxu0 0.0
        %468 = vmatpush1.msra.mxu0 0.0
        %469 = vmatprep.subr.mxu0 0.0
        %470 = vmatpush1.msra.mxu0 0.0
        %471 = vmatprep.subr.mxu0 0.0
        %472 = vmatpush1.msra.mxu0 0.0
        %473 = vmatprep.subr.mxu0 0.0
        %474 = vmatpush1.msra.mxu0 0.0
        %475 = vmatprep.subr.mxu0 0.0
        %476 = vmatpush1.msra.mxu0 0.0
        %477 = vmatprep.subr.mxu0 0.0
        %478 = vmatpush1.msra.mxu0 0.0
        %479 = vmatprep.subr.mxu0 0.0
        %480 = vmatpush1.msra.mxu0 0.0
        %481 = vmatprep.subr.mxu0 0.0
        %482 = vmatpush1.msra.mxu0 0.0
        %483 = vmatprep.subr.mxu0 0.0
        %484 = vmatpush1.msra.mxu0 %v451
        %485 = vmatprep.subr.mxu0 0.0
        %486 = vmatpush2.msra.mxu0 0.0
        %487 = vmatprep.subr.mxu0 0.0
        %488 = vmatpush2.msra.mxu0 0.0
        %489 = vmatprep.subr.mxu0 0.0
        %490 = vmatpush2.msra.mxu0 0.0
        %491 = vmatprep.subr.mxu0 0.0
        %492 = vmatpush2.msra.mxu0 0.0
        %493 = vmatprep.subr.mxu0 0.0
        %494 = vmatpush2.msra.mxu0 0.0
        %495 = vmatprep.subr.mxu0 0.0
        %496 = vmatpush2.msra.mxu0 0.0
        %497 = vmatprep.subr.mxu0 0.0
        %498 = vmatpush2.msra.mxu0 0.0
        %499 = vmatprep.subr.mxu0 0.0
        %500 = vmatpush2.msra.mxu0 0.0
        %501 = vmatprep.subr.mxu0 0.0
        %502 = vmatpush2.msra.mxu0 0.0
        %503 = vmatprep.subr.mxu0 0.0
        %504 = vmatpush2.msra.mxu0 0.0
        %505 = vmatprep.subr.mxu0 0.0
        %506 = vmatpush2.msra.mxu0 0.0
        %507 = vmatprep.subr.mxu0 0.0
        %508 = vmatpush2.msra.mxu0 0.0
        %509 = vmatprep.subr.mxu0 0.0
        %510 = vmatpush2.msra.mxu0 0.0
        %511 = vmatprep.subr.mxu0 0.0
        %512 = vmatpush2.msra.mxu0 0.0
        %513 = vmatprep.subr.mxu0 0.0
        %514 = vmatpush2.msra.mxu0 0.0
        %515 = vmatprep.subr.mxu0 0.0
        %516 = vmatpush2.msra.mxu0 0.0
        %517 = vmatprep.mubr.f32.mxu0 0.0
        %518 = vmatmul.mubr.f32.gmra.mxu0 %v447
        %v519 = vpop.f32.mrf.mxu0
        %v520 = vadd.f32 %v443, %v519
        %v521 = vpop.f32.mrf.mxu0
        %522 = vdwg.mxu0
        %v523 = vld [vmem:[%s3] sm:$0xff]
        %v524 = vld [vmem:[%s3 + $0x8] sm:$0xff]
        %v525 = vld [vmem:[%s3 + $0x10] sm:$0xff]
        %v526 = vld [vmem:[%s3 + $0x18] sm:$0xff]
        %v527 = vld [vmem:[%s3 + $0x20] sm:$0xff]
        %v528 = vld [vmem:[%s3 + $0x28] sm:$0xff]
        %v529 = vld [vmem:[%s3 + $0x30] sm:$0xff]
        %v530 = vld [vmem:[%s3 + $0x38] sm:$0xff]
        %v531 = vld [vmem:[%s3 + $0x40] sm:$0xff]
        %v532 = vld [vmem:[%s3 + $0x48] sm:$0xff]
        %v533 = vld [vmem:[%s3 + $0x50] sm:$0xff]
        %v534 = vld [vmem:[%s3 + $0x58] sm:$0xff]
        %v535 = vld [vmem:[%s3 + $0x60] sm:$0xff]
        %v536 = vld [vmem:[%s3 + $0x68] sm:$0xff]
        %v537 = vld [vmem:[%s3 + $0x70] sm:$0xff]
        %v538 = vld [vmem:[%s3 + $0x78] sm:$0xff]
        %vm539 = vcmask 261120
        %v541 = vsel %vm539, %v520, 0
        %543 = vmatprep.subr.mxu0 0.0
        %544 = vmatpush1.msra.mxu0 0.0
        %545 = vmatprep.subr.mxu0 0.0
        %546 = vmatpush1.msra.mxu0 0.0
        %547 = vmatprep.subr.mxu0 0.0
        %548 = vmatpush1.msra.mxu0 0.0
        %549 = vmatprep.subr.mxu0 0.0
        %550 = vmatpush1.msra.mxu0 0.0
        %551 = vmatprep.subr.mxu0 0.0
        %552 = vmatpush1.msra.mxu0 0.0
        %553 = vmatprep.subr.mxu0 0.0
        %554 = vmatpush1.msra.mxu0 0.0
        %555 = vmatprep.subr.mxu0 0.0
        %556 = vmatpush1.msra.mxu0 0.0
        %557 = vmatprep.subr.mxu0 0.0
        %558 = vmatpush1.msra.mxu0 0.0
        %559 = vmatprep.subr.mxu0 0.0
        %560 = vmatpush1.msra.mxu0 0.0
        %561 = vmatprep.subr.mxu0 0.0
        %562 = vmatpush1.msra.mxu0 0.0
        %563 = vmatprep.subr.mxu0 0.0
        %564 = vmatpush1.msra.mxu0 0.0
        %565 = vmatprep.subr.mxu0 0.0
        %566 = vmatpush1.msra.mxu0 0.0
        %567 = vmatprep.subr.mxu0 0.0
        %568 = vmatpush1.msra.mxu0 %v526
        %569 = vmatprep.subr.mxu0 0.0
        %570 = vmatpush1.msra.mxu0 %v525
        %571 = vmatprep.subr.mxu0 0.0
        %572 = vmatpush1.msra.mxu0 %v524
        %573 = vmatprep.subr.mxu0 0.0
        %574 = vmatpush1.msra.mxu0 %v523
        %575 = vmatprep.subr.mxu0 0.0
        %576 = vmatpush2.msra.mxu0 0.0
        %577 = vmatprep.subr.mxu0 0.0
        %578 = vmatpush2.msra.mxu0 0.0
        %579 = vmatprep.subr.mxu0 0.0
        %580 = vmatpush2.msra.mxu0 0.0
        %581 = vmatprep.subr.mxu0 0.0
        %582 = vmatpush2.msra.mxu0 0.0
        %583 = vmatprep.subr.mxu0 0.0
        %584 = vmatpush2.msra.mxu0 0.0
        %585 = vmatprep.subr.mxu0 0.0
        %586 = vmatpush2.msra.mxu0 0.0
        %587 = vmatprep.subr.mxu0 0.0
        %588 = vmatpush2.msra.mxu0 0.0
        %589 = vmatprep.subr.mxu0 0.0
        %590 = vmatpush2.msra.mxu0 0.0
        %591 = vmatprep.subr.mxu0 0.0
        %592 = vmatpush2.msra.mxu0 0.0
        %593 = vmatprep.subr.mxu0 0.0
        %594 = vmatpush2.msra.mxu0 0.0
        %595 = vmatprep.subr.mxu0 0.0
        %596 = vmatpush2.msra.mxu0 0.0
        %597 = vmatprep.subr.mxu0 0.0
        %598 = vmatpush2.msra.mxu0 0.0
        %599 = vmatprep.subr.mxu0 0.0
        %600 = vmatpush2.msra.mxu0 0.0
        %601 = vmatprep.subr.mxu0 0.0
        %602 = vmatpush2.msra.mxu0 0.0
        %603 = vmatprep.subr.mxu0 0.0
        %604 = vmatpush2.msra.mxu0 0.0
        %605 = vmatprep.subr.mxu0 0.0
        %606 = vmatpush2.msra.mxu0 0.0
        %607 = vmatprep.mubr.f32.mxu0 0.0
        %608 = vmatmul.mubr.f32.gmra.mxu0 %v541
        %v609 = vpop.f32.mrf.mxu0
        %v610 = vadd.f32 0.0, %v609
        %v611 = vpop.f32.mrf.mxu0
        %612 = vdwg.mxu0
        %613 = vmatprep.subr.mxu0 0.0
        %614 = vmatpush1.msra.mxu0 0.0
        %615 = vmatprep.subr.mxu0 0.0
        %616 = vmatpush1.msra.mxu0 0.0
        %617 = vmatprep.subr.mxu0 0.0
        %618 = vmatpush1.msra.mxu0 0.0
        %619 = vmatprep.subr.mxu0 0.0
        %620 = vmatpush1.msra.mxu0 0.0
        %621 = vmatprep.subr.mxu0 0.0
        %622 = vmatpush1.msra.mxu0 0.0
        %623 = vmatprep.subr.mxu0 0.0
        %624 = vmatpush1.msra.mxu0 0.0
        %625 = vmatprep.subr.mxu0 0.0
        %626 = vmatpush1.msra.mxu0 0.0
        %627 = vmatprep.subr.mxu0 0.0
        %628 = vmatpush1.msra.mxu0 0.0
        %629 = vmatprep.subr.mxu0 0.0
        %630 = vmatpush1.msra.mxu0 0.0
        %631 = vmatprep.subr.mxu0 0.0
        %632 = vmatpush1.msra.mxu0 0.0
        %633 = vmatprep.subr.mxu0 0.0
        %634 = vmatpush1.msra.mxu0 0.0
        %635 = vmatprep.subr.mxu0 0.0
        %636 = vmatpush1.msra.mxu0 0.0
        %637 = vmatprep.subr.mxu0 0.0
        %638 = vmatpush1.msra.mxu0 %v530
        %639 = vmatprep.subr.mxu0 0.0
        %640 = vmatpush1.msra.mxu0 %v529
        %641 = vmatprep.subr.mxu0 0.0
        %642 = vmatpush1.msra.mxu0 %v528
        %643 = vmatprep.subr.mxu0 0.0
        %644 = vmatpush1.msra.mxu0 %v527
        %645 = vmatprep.subr.mxu0 0.0
        %646 = vmatpush2.msra.mxu0 0.0
        %647 = vmatprep.subr.mxu0 0.0
        %648 = vmatpush2.msra.mxu0 0.0
        %649 = vmatprep.subr.mxu0 0.0
        %650 = vmatpush2.msra.mxu0 0.0
        %651 = vmatprep.subr.mxu0 0.0
        %652 = vmatpush2.msra.mxu0 0.0
        %653 = vmatprep.subr.mxu0 0.0
        %654 = vmatpush2.msra.mxu0 0.0
        %655 = vmatprep.subr.mxu0 0.0
        %656 = vmatpush2.msra.mxu0 0.0
        %657 = vmatprep.subr.mxu0 0.0
        %658 = vmatpush2.msra.mxu0 0.0
        %659 = vmatprep.subr.mxu0 0.0
        %660 = vmatpush2.msra.mxu0 0.0
        %661 = vmatprep.subr.mxu0 0.0
        %662 = vmatpush2.msra.mxu0 0.0
        %663 = vmatprep.subr.mxu0 0.0
        %664 = vmatpush2.msra.mxu0 0.0
        %665 = vmatprep.subr.mxu0 0.0
        %666 = vmatpush2.msra.mxu0 0.0
        %667 = vmatprep.subr.mxu0 0.0
        %668 = vmatpush2.msra.mxu0 0.0
        %669 = vmatprep.subr.mxu0 0.0
        %670 = vmatpush2.msra.mxu0 0.0
        %671 = vmatprep.subr.mxu0 0.0
        %672 = vmatpush2.msra.mxu0 0.0
        %673 = vmatprep.subr.mxu0 0.0
        %674 = vmatpush2.msra.mxu0 0.0
        %675 = vmatprep.subr.mxu0 0.0
        %676 = vmatpush2.msra.mxu0 0.0
        %677 = vmatprep.mubr.f32.mxu0 0.0
        %678 = vmatmul.mubr.f32.gmra.mxu0 %v541
        %v679 = vpop.f32.mrf.mxu0
        %v680 = vadd.f32 0.0, %v679
        %v681 = vpop.f32.mrf.mxu0
        %682 = vdwg.mxu0
        %683 = vmatprep.subr.mxu0 0.0
        %684 = vmatpush1.msra.mxu0 0.0
        %685 = vmatprep.subr.mxu0 0.0
        %686 = vmatpush1.msra.mxu0 0.0
        %687 = vmatprep.subr.mxu0 0.0
        %688 = vmatpush1.msra.mxu0 0.0
        %689 = vmatprep.subr.mxu0 0.0
        %690 = vmatpush1.msra.mxu0 0.0
        %691 = vmatprep.subr.mxu0 0.0
        %692 = vmatpush1.msra.mxu0 0.0
        %693 = vmatprep.subr.mxu0 0.0
        %694 = vmatpush1.msra.mxu0 0.0
        %695 = vmatprep.subr.mxu0 0.0
        %696 = vmatpush1.msra.mxu0 0.0
        %697 = vmatprep.subr.mxu0 0.0
        %698 = vmatpush1.msra.mxu0 0.0
        %699 = vmatprep.subr.mxu0 0.0
        %700 = vmatpush1.msra.mxu0 0.0
        %701 = vmatprep.subr.mxu0 0.0
        %702 = vmatpush1.msra.mxu0 0.0
        %703 = vmatprep.subr.mxu0 0.0
        %704 = vmatpush1.msra.mxu0 0.0
        %705 = vmatprep.subr.mxu0 0.0
        %706 = vmatpush1.msra.mxu0 0.0
        %707 = vmatprep.subr.mxu0 0.0
        %708 = vmatpush1.msra.mxu0 %v534
        %709 = vmatprep.subr.mxu0 0.0
        %710 = vmatpush1.msra.mxu0 %v533
        %711 = vmatprep.subr.mxu0 0.0
        %712 = vmatpush1.msra.mxu0 %v532
        %713 = vmatprep.subr.mxu0 0.0
        %714 = vmatpush1.msra.mxu0 %v531
        %715 = vmatprep.subr.mxu0 0.0
        %716 = vmatpush2.msra.mxu0 0.0
        %717 = vmatprep.subr.mxu0 0.0
        %718 = vmatpush2.msra.mxu0 0.0
        %719 = vmatprep.subr.mxu0 0.0
        %720 = vmatpush2.msra.mxu0 0.0
        %721 = vmatprep.subr.mxu0 0.0
        %722 = vmatpush2.msra.mxu0 0.0
        %723 = vmatprep.subr.mxu0 0.0
        %724 = vmatpush2.msra.mxu0 0.0
        %725 = vmatprep.subr.mxu0 0.0
        %726 = vmatpush2.msra.mxu0 0.0
        %727 = vmatprep.subr.mxu0 0.0
        %728 = vmatpush2.msra.mxu0 0.0
        %729 = vmatprep.subr.mxu0 0.0
        %730 = vmatpush2.msra.mxu0 0.0
        %731 = vmatprep.subr.mxu0 0.0
        %732 = vmatpush2.msra.mxu0 0.0
        %733 = vmatprep.subr.mxu0 0.0
        %734 = vmatpush2.msra.mxu0 0.0
        %735 = vmatprep.subr.mxu0 0.0
        %736 = vmatpush2.msra.mxu0 0.0
        %737 = vmatprep.subr.mxu0 0.0
        %738 = vmatpush2.msra.mxu0 0.0
        %739 = vmatprep.subr.mxu0 0.0
        %740 = vmatpush2.msra.mxu0 0.0
        %741 = vmatprep.subr.mxu0 0.0
        %742 = vmatpush2.msra.mxu0 0.0
        %743 = vmatprep.subr.mxu0 0.0
        %744 = vmatpush2.msra.mxu0 0.0
        %745 = vmatprep.subr.mxu0 0.0
        %746 = vmatpush2.msra.mxu0 0.0
        %747 = vmatprep.mubr.f32.mxu0 0.0
        %748 = vmatmul.mubr.f32.gmra.mxu0 %v541
        %v749 = vpop.f32.mrf.mxu0
        %v750 = vadd.f32 0.0, %v749
        %v751 = vpop.f32.mrf.mxu0
        %752 = vdwg.mxu0
        %753 = vmatprep.subr.mxu0 0.0
        %754 = vmatpush1.msra.mxu0 0.0
        %755 = vmatprep.subr.mxu0 0.0
        %756 = vmatpush1.msra.mxu0 0.0
        %757 = vmatprep.subr.mxu0 0.0
        %758 = vmatpush1.msra.mxu0 0.0
        %759 = vmatprep.subr.mxu0 0.0
        %760 = vmatpush1.msra.mxu0 0.0
        %761 = vmatprep.subr.mxu0 0.0
        %762 = vmatpush1.msra.mxu0 0.0
        %763 = vmatprep.subr.mxu0 0.0
        %764 = vmatpush1.msra.mxu0 0.0
        %765 = vmatprep.subr.mxu0 0.0
        %766 = vmatpush1.msra.mxu0 0.0
        %767 = vmatprep.subr.mxu0 0.0
        %768 = vmatpush1.msra.mxu0 0.0
        %769 = vmatprep.subr.mxu0 0.0
        %770 = vmatpush1.msra.mxu0 0.0
        %771 = vmatprep.subr.mxu0 0.0
        %772 = vmatpush1.msra.mxu0 0.0
        %773 = vmatprep.subr.mxu0 0.0
        %774 = vmatpush1.msra.mxu0 0.0
        %775 = vmatprep.subr.mxu0 0.0
        %776 = vmatpush1.msra.mxu0 0.0
        %777 = vmatprep.subr.mxu0 0.0
        %778 = vmatpush1.msra.mxu0 %v538
        %779 = vmatprep.subr.mxu0 0.0
        %780 = vmatpush1.msra.mxu0 %v537
        %781 = vmatprep.subr.mxu0 0.0
        %782 = vmatpush1.msra.mxu0 %v536
        %783 = vmatprep.subr.mxu0 0.0
        %784 = vmatpush1.msra.mxu0 %v535
        %785 = vmatprep.subr.mxu0 0.0
        %786 = vmatpush2.msra.mxu0 0.0
        %787 = vmatprep.subr.mxu0 0.0
        %788 = vmatpush2.msra.mxu0 0.0
        %789 = vmatprep.subr.mxu0 0.0
        %790 = vmatpush2.msra.mxu0 0.0
        %791 = vmatprep.subr.mxu0 0.0
        %792 = vmatpush2.msra.mxu0 0.0
        %793 = vmatprep.subr.mxu0 0.0
        %794 = vmatpush2.msra.mxu0 0.0
        %795 = vmatprep.subr.mxu0 0.0
        %796 = vmatpush2.msra.mxu0 0.0
        %797 = vmatprep.subr.mxu0 0.0
        %798 = vmatpush2.msra.mxu0 0.0
        %799 = vmatprep.subr.mxu0 0.0
        %800 = vmatpush2.msra.mxu0 0.0
        %801 = vmatprep.subr.mxu0 0.0
        %802 = vmatpush2.msra.mxu0 0.0
        %803 = vmatprep.subr.mxu0 0.0
        %804 = vmatpush2.msra.mxu0 0.0
        %805 = vmatprep.subr.mxu0 0.0
        %806 = vmatpush2.msra.mxu0 0.0
        %807 = vmatprep.subr.mxu0 0.0
        %808 = vmatpush2.msra.mxu0 0.0
        %809 = vmatprep.subr.mxu0 0.0
        %810 = vmatpush2.msra.mxu0 0.0
        %811 = vmatprep.subr.mxu0 0.0
        %812 = vmatpush2.msra.mxu0 0.0
        %813 = vmatprep.subr.mxu0 0.0
        %814 = vmatpush2.msra.mxu0 0.0
        %815 = vmatprep.subr.mxu0 0.0
        %816 = vmatpush2.msra.mxu0 0.0
        %817 = vmatprep.mubr.f32.mxu0 0.0
        %818 = vmatmul.mubr.f32.gmra.mxu0 %v541
        %v819 = vpop.f32.mrf.mxu0
        %v820 = vadd.f32 0.0, %v819
        %v821 = vpop.f32.mrf.mxu0
        %822 = vdwg.mxu0
        %v823 = vld [vmem:[%s4] sm:$0xff]
        %v824 = vld [vmem:[%s4 + $0x8] sm:$0xff]
        %v825 = vld [vmem:[%s4 + $0x10] sm:$0xff]
        %v826 = vld [vmem:[%s4 + $0x18] sm:$0xff]
        %v827 = vld [vmem:[%s4 + $0x20] sm:$0xff]
        %v828 = vld [vmem:[%s4 + $0x28] sm:$0xff]
        %v829 = vld [vmem:[%s4 + $0x30] sm:$0xff]
        %v830 = vld [vmem:[%s4 + $0x38] sm:$0xff]
        %v831 = vld [vmem:[%s4 + $0x40] sm:$0xff]
        %v832 = vld [vmem:[%s4 + $0x48] sm:$0xff]
        %v833 = vld [vmem:[%s4 + $0x50] sm:$0xff]
        %v834 = vld [vmem:[%s4 + $0x58] sm:$0xff]
        %v835 = vld [vmem:[%s4 + $0x60] sm:$0xff]
        %v836 = vld [vmem:[%s4 + $0x68] sm:$0xff]
        %v837 = vld [vmem:[%s4 + $0x70] sm:$0xff]
        %v838 = vld [vmem:[%s4 + $0x78] sm:$0xff]
        %839 = vmatprep.subr.mxu0 0.0
        %840 = vmatpush1.msra.mxu0 0.0
        %841 = vmatprep.subr.mxu0 0.0
        %842 = vmatpush1.msra.mxu0 0.0
        %843 = vmatprep.subr.mxu0 0.0
        %844 = vmatpush1.msra.mxu0 0.0
        %845 = vmatprep.subr.mxu0 0.0
        %846 = vmatpush1.msra.mxu0 0.0
        %847 = vmatprep.subr.mxu0 0.0
        %848 = vmatpush1.msra.mxu0 0.0
        %849 = vmatprep.subr.mxu0 0.0
        %850 = vmatpush1.msra.mxu0 0.0
        %851 = vmatprep.subr.mxu0 0.0
        %852 = vmatpush1.msra.mxu0 0.0
        %853 = vmatprep.subr.mxu0 0.0
        %854 = vmatpush1.msra.mxu0 0.0
        %855 = vmatprep.subr.mxu0 0.0
        %856 = vmatpush1.msra.mxu0 0.0
        %857 = vmatprep.subr.mxu0 0.0
        %858 = vmatpush1.msra.mxu0 0.0
        %859 = vmatprep.subr.mxu0 0.0
        %860 = vmatpush1.msra.mxu0 0.0
        %861 = vmatprep.subr.mxu0 0.0
        %862 = vmatpush1.msra.mxu0 0.0
        %863 = vmatprep.subr.mxu0 0.0
        %864 = vmatpush1.msra.mxu0 %v826
        %865 = vmatprep.subr.mxu0 0.0
        %866 = vmatpush1.msra.mxu0 %v825
        %867 = vmatprep.subr.mxu0 0.0
        %868 = vmatpush1.msra.mxu0 %v824
        %869 = vmatprep.subr.mxu0 0.0
        %870 = vmatpush1.msra.mxu0 %v823
        %871 = vmatprep.subr.mxu0 0.0
        %872 = vmatpush2.msra.mxu0 0.0
        %873 = vmatprep.subr.mxu0 0.0
        %874 = vmatpush2.msra.mxu0 0.0
        %875 = vmatprep.subr.mxu0 0.0
        %876 = vmatpush2.msra.mxu0 0.0
        %877 = vmatprep.subr.mxu0 0.0
        %878 = vmatpush2.msra.mxu0 0.0
        %879 = vmatprep.subr.mxu0 0.0
        %880 = vmatpush2.msra.mxu0 0.0
        %881 = vmatprep.subr.mxu0 0.0
        %882 = vmatpush2.msra.mxu0 0.0
        %883 = vmatprep.subr.mxu0 0.0
        %884 = vmatpush2.msra.mxu0 0.0
        %885 = vmatprep.subr.mxu0 0.0
        %886 = vmatpush2.msra.mxu0 0.0
        %887 = vmatprep.subr.mxu0 0.0
        %888 = vmatpush2.msra.mxu0 0.0
        %889 = vmatprep.subr.mxu0 0.0
        %890 = vmatpush2.msra.mxu0 0.0
        %891 = vmatprep.subr.mxu0 0.0
        %892 = vmatpush2.msra.mxu0 0.0
        %893 = vmatprep.subr.mxu0 0.0
        %894 = vmatpush2.msra.mxu0 0.0
        %895 = vmatprep.subr.mxu0 0.0
        %896 = vmatpush2.msra.mxu0 0.0
        %897 = vmatprep.subr.mxu0 0.0
        %898 = vmatpush2.msra.mxu0 0.0
        %899 = vmatprep.subr.mxu0 0.0
        %900 = vmatpush2.msra.mxu0 0.0
        %901 = vmatprep.subr.mxu0 0.0
        %902 = vmatpush2.msra.mxu0 0.0
        %903 = vmatprep.mubr.f32.mxu0 0.0
        %904 = vmatmul.mubr.f32.gmra.mxu0 %v541
        %v905 = vpop.f32.mrf.mxu0
        %v906 = vadd.f32 0.0, %v905
        %v907 = vpop.f32.mrf.mxu0
        %908 = vdwg.mxu0
        %909 = vmatprep.subr.mxu0 0.0
        %910 = vmatpush1.msra.mxu0 0.0
        %911 = vmatprep.subr.mxu0 0.0
        %912 = vmatpush1.msra.mxu0 0.0
        %913 = vmatprep.subr.mxu0 0.0
        %914 = vmatpush1.msra.mxu0 0.0
        %915 = vmatprep.subr.mxu0 0.0
        %916 = vmatpush1.msra.mxu0 0.0
        %917 = vmatprep.subr.mxu0 0.0
        %918 = vmatpush1.msra.mxu0 0.0
        %919 = vmatprep.subr.mxu0 0.0
        %920 = vmatpush1.msra.mxu0 0.0
        %921 = vmatprep.subr.mxu0 0.0
        %922 = vmatpush1.msra.mxu0 0.0
        %923 = vmatprep.subr.mxu0 0.0
        %924 = vmatpush1.msra.mxu0 0.0
        %925 = vmatprep.subr.mxu0 0.0
        %926 = vmatpush1.msra.mxu0 0.0
        %927 = vmatprep.subr.mxu0 0.0
        %928 = vmatpush1.msra.mxu0 0.0
        %929 = vmatprep.subr.mxu0 0.0
        %930 = vmatpush1.msra.mxu0 0.0
        %931 = vmatprep.subr.mxu0 0.0
        %932 = vmatpush1.msra.mxu0 0.0
        %933 = vmatprep.subr.mxu0 0.0
        %934 = vmatpush1.msra.mxu0 %v830
        %935 = vmatprep.subr.mxu0 0.0
        %936 = vmatpush1.msra.mxu0 %v829
        %937 = vmatprep.subr.mxu0 0.0
        %938 = vmatpush1.msra.mxu0 %v828
        %939 = vmatprep.subr.mxu0 0.0
        %940 = vmatpush1.msra.mxu0 %v827
        %941 = vmatprep.subr.mxu0 0.0
        %942 = vmatpush2.msra.mxu0 0.0
        %943 = vmatprep.subr.mxu0 0.0
        %944 = vmatpush2.msra.mxu0 0.0
        %945 = vmatprep.subr.mxu0 0.0
        %946 = vmatpush2.msra.mxu0 0.0
        %947 = vmatprep.subr.mxu0 0.0
        %948 = vmatpush2.msra.mxu0 0.0
        %949 = vmatprep.subr.mxu0 0.0
        %950 = vmatpush2.msra.mxu0 0.0
        %951 = vmatprep.subr.mxu0 0.0
        %952 = vmatpush2.msra.mxu0 0.0
        %953 = vmatprep.subr.mxu0 0.0
        %954 = vmatpush2.msra.mxu0 0.0
        %955 = vmatprep.subr.mxu0 0.0
        %956 = vmatpush2.msra.mxu0 0.0
        %957 = vmatprep.subr.mxu0 0.0
        %958 = vmatpush2.msra.mxu0 0.0
        %959 = vmatprep.subr.mxu0 0.0
        %960 = vmatpush2.msra.mxu0 0.0
        %961 = vmatprep.subr.mxu0 0.0
        %962 = vmatpush2.msra.mxu0 0.0
        %963 = vmatprep.subr.mxu0 0.0
        %964 = vmatpush2.msra.mxu0 0.0
        %965 = vmatprep.subr.mxu0 0.0
        %966 = vmatpush2.msra.mxu0 0.0
        %967 = vmatprep.subr.mxu0 0.0
        %968 = vmatpush2.msra.mxu0 0.0
        %969 = vmatprep.subr.mxu0 0.0
        %970 = vmatpush2.msra.mxu0 0.0
        %971 = vmatprep.subr.mxu0 0.0
        %972 = vmatpush2.msra.mxu0 0.0
        %973 = vmatprep.mubr.f32.mxu0 0.0
        %974 = vmatmul.mubr.f32.gmra.mxu0 %v541
        %v975 = vpop.f32.mrf.mxu0
        %v976 = vadd.f32 0.0, %v975
        %v977 = vpop.f32.mrf.mxu0
        %978 = vdwg.mxu0
        %979 = vmatprep.subr.mxu0 0.0
        %980 = vmatpush1.msra.mxu0 0.0
        %981 = vmatprep.subr.mxu0 0.0
        %982 = vmatpush1.msra.mxu0 0.0
        %983 = vmatprep.subr.mxu0 0.0
        %984 = vmatpush1.msra.mxu0 0.0
        %985 = vmatprep.subr.mxu0 0.0
        %986 = vmatpush1.msra.mxu0 0.0
        %987 = vmatprep.subr.mxu0 0.0
        %988 = vmatpush1.msra.mxu0 0.0
        %989 = vmatprep.subr.mxu0 0.0
        %990 = vmatpush1.msra.mxu0 0.0
        %991 = vmatprep.subr.mxu0 0.0
        %992 = vmatpush1.msra.mxu0 0.0
        %993 = vmatprep.subr.mxu0 0.0
        %994 = vmatpush1.msra.mxu0 0.0
        %995 = vmatprep.subr.mxu0 0.0
        %996 = vmatpush1.msra.mxu0 0.0
        %997 = vmatprep.subr.mxu0 0.0
        %998 = vmatpush1.msra.mxu0 0.0
        %999 = vmatprep.subr.mxu0 0.0
        %1000 = vmatpush1.msra.mxu0 0.0
        %1001 = vmatprep.subr.mxu0 0.0
        %1002 = vmatpush1.msra.mxu0 0.0
        %1003 = vmatprep.subr.mxu0 0.0
        %1004 = vmatpush1.msra.mxu0 %v834
        %1005 = vmatprep.subr.mxu0 0.0
        %1006 = vmatpush1.msra.mxu0 %v833
        %1007 = vmatprep.subr.mxu0 0.0
        %1008 = vmatpush1.msra.mxu0 %v832
        %1009 = vmatprep.subr.mxu0 0.0
        %1010 = vmatpush1.msra.mxu0 %v831
        %1011 = vmatprep.subr.mxu0 0.0
        %1012 = vmatpush2.msra.mxu0 0.0
        %1013 = vmatprep.subr.mxu0 0.0
        %1014 = vmatpush2.msra.mxu0 0.0
        %1015 = vmatprep.subr.mxu0 0.0
        %1016 = vmatpush2.msra.mxu0 0.0
        %1017 = vmatprep.subr.mxu0 0.0
        %1018 = vmatpush2.msra.mxu0 0.0
        %1019 = vmatprep.subr.mxu0 0.0
        %1020 = vmatpush2.msra.mxu0 0.0
        %1021 = vmatprep.subr.mxu0 0.0
        %1022 = vmatpush2.msra.mxu0 0.0
        %1023 = vmatprep.subr.mxu0 0.0
        %1024 = vmatpush2.msra.mxu0 0.0
        %1025 = vmatprep.subr.mxu0 0.0
        %1026 = vmatpush2.msra.mxu0 0.0
        %1027 = vmatprep.subr.mxu0 0.0
        %1028 = vmatpush2.msra.mxu0 0.0
        %1029 = vmatprep.subr.mxu0 0.0
        %1030 = vmatpush2.msra.mxu0 0.0
        %1031 = vmatprep.subr.mxu0 0.0
        %1032 = vmatpush2.msra.mxu0 0.0
        %1033 = vmatprep.subr.mxu0 0.0
        %1034 = vmatpush2.msra.mxu0 0.0
        %1035 = vmatprep.subr.mxu0 0.0
        %1036 = vmatpush2.msra.mxu0 0.0
        %1037 = vmatprep.subr.mxu0 0.0
        %1038 = vmatpush2.msra.mxu0 0.0
        %1039 = vmatprep.subr.mxu0 0.0
        %1040 = vmatpush2.msra.mxu0 0.0
        %1041 = vmatprep.subr.mxu0 0.0
        %1042 = vmatpush2.msra.mxu0 0.0
        %1043 = vmatprep.mubr.f32.mxu0 0.0
        %1044 = vmatmul.mubr.f32.gmra.mxu0 %v541
        %v1045 = vpop.f32.mrf.mxu0
        %v1046 = vadd.f32 0.0, %v1045
        %v1047 = vpop.f32.mrf.mxu0
        %1048 = vdwg.mxu0
        %1049 = vmatprep.subr.mxu0 0.0
        %1050 = vmatpush1.msra.mxu0 0.0
        %1051 = vmatprep.subr.mxu0 0.0
        %1052 = vmatpush1.msra.mxu0 0.0
        %1053 = vmatprep.subr.mxu0 0.0
        %1054 = vmatpush1.msra.mxu0 0.0
        %1055 = vmatprep.subr.mxu0 0.0
        %1056 = vmatpush1.msra.mxu0 0.0
        %1057 = vmatprep.subr.mxu0 0.0
        %1058 = vmatpush1.msra.mxu0 0.0
        %1059 = vmatprep.subr.mxu0 0.0
        %1060 = vmatpush1.msra.mxu0 0.0
        %1061 = vmatprep.subr.mxu0 0.0
        %1062 = vmatpush1.msra.mxu0 0.0
        %1063 = vmatprep.subr.mxu0 0.0
        %1064 = vmatpush1.msra.mxu0 0.0
        %1065 = vmatprep.subr.mxu0 0.0
        %1066 = vmatpush1.msra.mxu0 0.0
        %1067 = vmatprep.subr.mxu0 0.0
        %1068 = vmatpush1.msra.mxu0 0.0
        %1069 = vmatprep.subr.mxu0 0.0
        %1070 = vmatpush1.msra.mxu0 0.0
        %1071 = vmatprep.subr.mxu0 0.0
        %1072 = vmatpush1.msra.mxu0 0.0
        %1073 = vmatprep.subr.mxu0 0.0
        %1074 = vmatpush1.msra.mxu0 %v838
        %1075 = vmatprep.subr.mxu0 0.0
        %1076 = vmatpush1.msra.mxu0 %v837
        %1077 = vmatprep.subr.mxu0 0.0
        %1078 = vmatpush1.msra.mxu0 %v836
        %1079 = vmatprep.subr.mxu0 0.0
        %1080 = vmatpush1.msra.mxu0 %v835
        %1081 = vmatprep.subr.mxu0 0.0
        %1082 = vmatpush2.msra.mxu0 0.0
        %1083 = vmatprep.subr.mxu0 0.0
        %1084 = vmatpush2.msra.mxu0 0.0
        %1085 = vmatprep.subr.mxu0 0.0
        %1086 = vmatpush2.msra.mxu0 0.0
        %1087 = vmatprep.subr.mxu0 0.0
        %1088 = vmatpush2.msra.mxu0 0.0
        %1089 = vmatprep.subr.mxu0 0.0
        %1090 = vmatpush2.msra.mxu0 0.0
        %1091 = vmatprep.subr.mxu0 0.0
        %1092 = vmatpush2.msra.mxu0 0.0
        %1093 = vmatprep.subr.mxu0 0.0
        %1094 = vmatpush2.msra.mxu0 0.0
        %1095 = vmatprep.subr.mxu0 0.0
        %1096 = vmatpush2.msra.mxu0 0.0
        %1097 = vmatprep.subr.mxu0 0.0
        %1098 = vmatpush2.msra.mxu0 0.0
        %1099 = vmatprep.subr.mxu0 0.0
        %1100 = vmatpush2.msra.mxu0 0.0
        %1101 = vmatprep.subr.mxu0 0.0
        %1102 = vmatpush2.msra.mxu0 0.0
        %1103 = vmatprep.subr.mxu0 0.0
        %1104 = vmatpush2.msra.mxu0 0.0
        %1105 = vmatprep.subr.mxu0 0.0
        %1106 = vmatpush2.msra.mxu0 0.0
        %1107 = vmatprep.subr.mxu0 0.0
        %1108 = vmatpush2.msra.mxu0 0.0
        %1109 = vmatprep.subr.mxu0 0.0
        %1110 = vmatpush2.msra.mxu0 0.0
        %1111 = vmatprep.subr.mxu0 0.0
        %1112 = vmatpush2.msra.mxu0 0.0
        %1113 = vmatprep.mubr.f32.mxu0 0.0
        %1114 = vmatmul.mubr.f32.gmra.mxu0 %v541
        %v1115 = vpop.f32.mrf.mxu0
        %v1116 = vadd.f32 0.0, %v1115
        %v1117 = vpop.f32.mrf.mxu0
        %1118 = vdwg.mxu0
        %v1119 = vld [vmem:[%s5] sm:$0xff]
        %v1120 = vld [vmem:[%s5 + $0x8] sm:$0xff]
        %v1121 = vld [vmem:[%s5 + $0x10] sm:$0xff]
        %v1122 = vld [vmem:[%s5 + $0x18] sm:$0xff]
        %v1123 = vld [vmem:[%s5 + $0x20] sm:$0xff]
        %v1124 = vld [vmem:[%s5 + $0x28] sm:$0xff]
        %v1125 = vld [vmem:[%s5 + $0x30] sm:$0xff]
        %v1126 = vld [vmem:[%s5 + $0x38] sm:$0xff]
        %v1127 = vld [vmem:[%s5 + $0x40] sm:$0xff]
        %v1128 = vld [vmem:[%s5 + $0x48] sm:$0xff]
        %v1129 = vld [vmem:[%s5 + $0x50] sm:$0xff]
        %v1130 = vld [vmem:[%s5 + $0x58] sm:$0xff]
        %v1131 = vld [vmem:[%s5 + $0x60] sm:$0xff]
        %v1132 = vld [vmem:[%s5 + $0x68] sm:$0xff]
        %v1133 = vld [vmem:[%s5 + $0x70] sm:$0xff]
        %v1134 = vld [vmem:[%s5 + $0x78] sm:$0xff]
        %1135 = vmatprep.subr.mxu0 0.0
        %1136 = vmatpush1.msra.mxu0 0.0
        %1137 = vmatprep.subr.mxu0 0.0
        %1138 = vmatpush1.msra.mxu0 0.0
        %1139 = vmatprep.subr.mxu0 0.0
        %1140 = vmatpush1.msra.mxu0 0.0
        %1141 = vmatprep.subr.mxu0 0.0
        %1142 = vmatpush1.msra.mxu0 0.0
        %1143 = vmatprep.subr.mxu0 0.0
        %1144 = vmatpush1.msra.mxu0 0.0
        %1145 = vmatprep.subr.mxu0 0.0
        %1146 = vmatpush1.msra.mxu0 0.0
        %1147 = vmatprep.subr.mxu0 0.0
        %1148 = vmatpush1.msra.mxu0 0.0
        %1149 = vmatprep.subr.mxu0 0.0
        %1150 = vmatpush1.msra.mxu0 0.0
        %1151 = vmatprep.subr.mxu0 0.0
        %1152 = vmatpush1.msra.mxu0 0.0
        %1153 = vmatprep.subr.mxu0 0.0
        %1154 = vmatpush1.msra.mxu0 0.0
        %1155 = vmatprep.subr.mxu0 0.0
        %1156 = vmatpush1.msra.mxu0 0.0
        %1157 = vmatprep.subr.mxu0 0.0
        %1158 = vmatpush1.msra.mxu0 0.0
        %1159 = vmatprep.subr.mxu0 0.0
        %1160 = vmatpush1.msra.mxu0 %v1122
        %1161 = vmatprep.subr.mxu0 0.0
        %1162 = vmatpush1.msra.mxu0 %v1121
        %1163 = vmatprep.subr.mxu0 0.0
        %1164 = vmatpush1.msra.mxu0 %v1120
        %1165 = vmatprep.subr.mxu0 0.0
        %1166 = vmatpush1.msra.mxu0 %v1119
        %1167 = vmatprep.subr.mxu0 0.0
        %1168 = vmatpush2.msra.mxu0 0.0
        %1169 = vmatprep.subr.mxu0 0.0
        %1170 = vmatpush2.msra.mxu0 0.0
        %1171 = vmatprep.subr.mxu0 0.0
        %1172 = vmatpush2.msra.mxu0 0.0
        %1173 = vmatprep.subr.mxu0 0.0
        %1174 = vmatpush2.msra.mxu0 0.0
        %1175 = vmatprep.subr.mxu0 0.0
        %1176 = vmatpush2.msra.mxu0 0.0
        %1177 = vmatprep.subr.mxu0 0.0
        %1178 = vmatpush2.msra.mxu0 0.0
        %1179 = vmatprep.subr.mxu0 0.0
        %1180 = vmatpush2.msra.mxu0 0.0
        %1181 = vmatprep.subr.mxu0 0.0
        %1182 = vmatpush2.msra.mxu0 0.0
        %1183 = vmatprep.subr.mxu0 0.0
        %1184 = vmatpush2.msra.mxu0 0.0
        %1185 = vmatprep.subr.mxu0 0.0
        %1186 = vmatpush2.msra.mxu0 0.0
        %1187 = vmatprep.subr.mxu0 0.0
        %1188 = vmatpush2.msra.mxu0 0.0
        %1189 = vmatprep.subr.mxu0 0.0
        %1190 = vmatpush2.msra.mxu0 0.0
        %1191 = vmatprep.subr.mxu0 0.0
        %1192 = vmatpush2.msra.mxu0 0.0
        %1193 = vmatprep.subr.mxu0 0.0
        %1194 = vmatpush2.msra.mxu0 0.0
        %1195 = vmatprep.subr.mxu0 0.0
        %1196 = vmatpush2.msra.mxu0 0.0
        %1197 = vmatprep.subr.mxu0 0.0
        %1198 = vmatpush2.msra.mxu0 0.0
        %1199 = vmatprep.mubr.f32.mxu0 0.0
        %1200 = vmatmul.mubr.f32.gmra.mxu0 %v541
        %v1201 = vpop.f32.mrf.mxu0
        %v1202 = vadd.f32 0.0, %v1201
        %v1203 = vpop.f32.mrf.mxu0
        %1204 = vdwg.mxu0
        %1205 = vmatprep.subr.mxu0 0.0
        %1206 = vmatpush1.msra.mxu0 0.0
        %1207 = vmatprep.subr.mxu0 0.0
        %1208 = vmatpush1.msra.mxu0 0.0
        %1209 = vmatprep.subr.mxu0 0.0
        %1210 = vmatpush1.msra.mxu0 0.0
        %1211 = vmatprep.subr.mxu0 0.0
        %1212 = vmatpush1.msra.mxu0 0.0
        %1213 = vmatprep.subr.mxu0 0.0
        %1214 = vmatpush1.msra.mxu0 0.0
        %1215 = vmatprep.subr.mxu0 0.0
        %1216 = vmatpush1.msra.mxu0 0.0
        %1217 = vmatprep.subr.mxu0 0.0
        %1218 = vmatpush1.msra.mxu0 0.0
        %1219 = vmatprep.subr.mxu0 0.0
        %1220 = vmatpush1.msra.mxu0 0.0
        %1221 = vmatprep.subr.mxu0 0.0
        %1222 = vmatpush1.msra.mxu0 0.0
        %1223 = vmatprep.subr.mxu0 0.0
        %1224 = vmatpush1.msra.mxu0 0.0
        %1225 = vmatprep.subr.mxu0 0.0
        %1226 = vmatpush1.msra.mxu0 0.0
        %1227 = vmatprep.subr.mxu0 0.0
        %1228 = vmatpush1.msra.mxu0 0.0
        %1229 = vmatprep.subr.mxu0 0.0
        %1230 = vmatpush1.msra.mxu0 %v1126
        %1231 = vmatprep.subr.mxu0 0.0
        %1232 = vmatpush1.msra.mxu0 %v1125
        %1233 = vmatprep.subr.mxu0 0.0
        %1234 = vmatpush1.msra.mxu0 %v1124
        %1235 = vmatprep.subr.mxu0 0.0
        %1236 = vmatpush1.msra.mxu0 %v1123
        %1237 = vmatprep.subr.mxu0 0.0
        %1238 = vmatpush2.msra.mxu0 0.0
        %1239 = vmatprep.subr.mxu0 0.0
        %1240 = vmatpush2.msra.mxu0 0.0
        %1241 = vmatprep.subr.mxu0 0.0
        %1242 = vmatpush2.msra.mxu0 0.0
        %1243 = vmatprep.subr.mxu0 0.0
        %1244 = vmatpush2.msra.mxu0 0.0
        %1245 = vmatprep.subr.mxu0 0.0
        %1246 = vmatpush2.msra.mxu0 0.0
        %1247 = vmatprep.subr.mxu0 0.0
        %1248 = vmatpush2.msra.mxu0 0.0
        %1249 = vmatprep.subr.mxu0 0.0
        %1250 = vmatpush2.msra.mxu0 0.0
        %1251 = vmatprep.subr.mxu0 0.0
        %1252 = vmatpush2.msra.mxu0 0.0
        %1253 = vmatprep.subr.mxu0 0.0
        %1254 = vmatpush2.msra.mxu0 0.0
        %1255 = vmatprep.subr.mxu0 0.0
        %1256 = vmatpush2.msra.mxu0 0.0
        %1257 = vmatprep.subr.mxu0 0.0
        %1258 = vmatpush2.msra.mxu0 0.0
        %1259 = vmatprep.subr.mxu0 0.0
        %1260 = vmatpush2.msra.mxu0 0.0
        %1261 = vmatprep.subr.mxu0 0.0
        %1262 = vmatpush2.msra.mxu0 0.0
        %1263 = vmatprep.subr.mxu0 0.0
        %1264 = vmatpush2.msra.mxu0 0.0
        %1265 = vmatprep.subr.mxu0 0.0
        %1266 = vmatpush2.msra.mxu0 0.0
        %1267 = vmatprep.subr.mxu0 0.0
        %1268 = vmatpush2.msra.mxu0 0.0
        %1269 = vmatprep.mubr.f32.mxu0 0.0
        %1270 = vmatmul.mubr.f32.gmra.mxu0 %v541
        %v1271 = vpop.f32.mrf.mxu0
        %v1272 = vadd.f32 0.0, %v1271
        %v1273 = vpop.f32.mrf.mxu0
        %1274 = vdwg.mxu0
        %1275 = vmatprep.subr.mxu0 0.0
        %1276 = vmatpush1.msra.mxu0 0.0
        %1277 = vmatprep.subr.mxu0 0.0
        %1278 = vmatpush1.msra.mxu0 0.0
        %1279 = vmatprep.subr.mxu0 0.0
        %1280 = vmatpush1.msra.mxu0 0.0
        %1281 = vmatprep.subr.mxu0 0.0
        %1282 = vmatpush1.msra.mxu0 0.0
        %1283 = vmatprep.subr.mxu0 0.0
        %1284 = vmatpush1.msra.mxu0 0.0
        %1285 = vmatprep.subr.mxu0 0.0
        %1286 = vmatpush1.msra.mxu0 0.0
        %1287 = vmatprep.subr.mxu0 0.0
        %1288 = vmatpush1.msra.mxu0 0.0
        %1289 = vmatprep.subr.mxu0 0.0
        %1290 = vmatpush1.msra.mxu0 0.0
        %1291 = vmatprep.subr.mxu0 0.0
        %1292 = vmatpush1.msra.mxu0 0.0
        %1293 = vmatprep.subr.mxu0 0.0
        %1294 = vmatpush1.msra.mxu0 0.0
        %1295 = vmatprep.subr.mxu0 0.0
        %1296 = vmatpush1.msra.mxu0 0.0
        %1297 = vmatprep.subr.mxu0 0.0
        %1298 = vmatpush1.msra.mxu0 0.0
        %1299 = vmatprep.subr.mxu0 0.0
        %1300 = vmatpush1.msra.mxu0 %v1130
        %1301 = vmatprep.subr.mxu0 0.0
        %1302 = vmatpush1.msra.mxu0 %v1129
        %1303 = vmatprep.subr.mxu0 0.0
        %1304 = vmatpush1.msra.mxu0 %v1128
        %1305 = vmatprep.subr.mxu0 0.0
        %1306 = vmatpush1.msra.mxu0 %v1127
        %1307 = vmatprep.subr.mxu0 0.0
        %1308 = vmatpush2.msra.mxu0 0.0
        %1309 = vmatprep.subr.mxu0 0.0
        %1310 = vmatpush2.msra.mxu0 0.0
        %1311 = vmatprep.subr.mxu0 0.0
        %1312 = vmatpush2.msra.mxu0 0.0
        %1313 = vmatprep.subr.mxu0 0.0
        %1314 = vmatpush2.msra.mxu0 0.0
        %1315 = vmatprep.subr.mxu0 0.0
        %1316 = vmatpush2.msra.mxu0 0.0
        %1317 = vmatprep.subr.mxu0 0.0
        %1318 = vmatpush2.msra.mxu0 0.0
        %1319 = vmatprep.subr.mxu0 0.0
        %1320 = vmatpush2.msra.mxu0 0.0
        %1321 = vmatprep.subr.mxu0 0.0
        %1322 = vmatpush2.msra.mxu0 0.0
        %1323 = vmatprep.subr.mxu0 0.0
        %1324 = vmatpush2.msra.mxu0 0.0
        %1325 = vmatprep.subr.mxu0 0.0
        %1326 = vmatpush2.msra.mxu0 0.0
        %1327 = vmatprep.subr.mxu0 0.0
        %1328 = vmatpush2.msra.mxu0 0.0
        %1329 = vmatprep.subr.mxu0 0.0
        %1330 = vmatpush2.msra.mxu0 0.0
        %1331 = vmatprep.subr.mxu0 0.0
        %1332 = vmatpush2.msra.mxu0 0.0
        %1333 = vmatprep.subr.mxu0 0.0
        %1334 = vmatpush2.msra.mxu0 0.0
        %1335 = vmatprep.subr.mxu0 0.0
        %1336 = vmatpush2.msra.mxu0 0.0
        %1337 = vmatprep.subr.mxu0 0.0
        %1338 = vmatpush2.msra.mxu0 0.0
        %1339 = vmatprep.mubr.f32.mxu0 0.0
        %1340 = vmatmul.mubr.f32.gmra.mxu0 %v541
        %v1341 = vpop.f32.mrf.mxu0
        %v1342 = vadd.f32 0.0, %v1341
        %v1343 = vpop.f32.mrf.mxu0
        %1344 = vdwg.mxu0
        %1345 = vmatprep.subr.mxu0 0.0
        %1346 = vmatpush1.msra.mxu0 0.0
        %1347 = vmatprep.subr.mxu0 0.0
        %1348 = vmatpush1.msra.mxu0 0.0
        %1349 = vmatprep.subr.mxu0 0.0
        %1350 = vmatpush1.msra.mxu0 0.0
        %1351 = vmatprep.subr.mxu0 0.0
        %1352 = vmatpush1.msra.mxu0 0.0
        %1353 = vmatprep.subr.mxu0 0.0
        %1354 = vmatpush1.msra.mxu0 0.0
        %1355 = vmatprep.subr.mxu0 0.0
        %1356 = vmatpush1.msra.mxu0 0.0
        %1357 = vmatprep.subr.mxu0 0.0
        %1358 = vmatpush1.msra.mxu0 0.0
        %1359 = vmatprep.subr.mxu0 0.0
        %1360 = vmatpush1.msra.mxu0 0.0
        %1361 = vmatprep.subr.mxu0 0.0
        %1362 = vmatpush1.msra.mxu0 0.0
        %1363 = vmatprep.subr.mxu0 0.0
        %1364 = vmatpush1.msra.mxu0 0.0
        %1365 = vmatprep.subr.mxu0 0.0
        %1366 = vmatpush1.msra.mxu0 0.0
        %1367 = vmatprep.subr.mxu0 0.0
        %1368 = vmatpush1.msra.mxu0 0.0
        %1369 = vmatprep.subr.mxu0 0.0
        %1370 = vmatpush1.msra.mxu0 %v1134
        %1371 = vmatprep.subr.mxu0 0.0
        %1372 = vmatpush1.msra.mxu0 %v1133
        %1373 = vmatprep.subr.mxu0 0.0
        %1374 = vmatpush1.msra.mxu0 %v1132
        %1375 = vmatprep.subr.mxu0 0.0
        %1376 = vmatpush1.msra.mxu0 %v1131
        %1377 = vmatprep.subr.mxu0 0.0
        %1378 = vmatpush2.msra.mxu0 0.0
        %1379 = vmatprep.subr.mxu0 0.0
        %1380 = vmatpush2.msra.mxu0 0.0
        %1381 = vmatprep.subr.mxu0 0.0
        %1382 = vmatpush2.msra.mxu0 0.0
        %1383 = vmatprep.subr.mxu0 0.0
        %1384 = vmatpush2.msra.mxu0 0.0
        %1385 = vmatprep.subr.mxu0 0.0
        %1386 = vmatpush2.msra.mxu0 0.0
        %1387 = vmatprep.subr.mxu0 0.0
        %1388 = vmatpush2.msra.mxu0 0.0
        %1389 = vmatprep.subr.mxu0 0.0
        %1390 = vmatpush2.msra.mxu0 0.0
        %1391 = vmatprep.subr.mxu0 0.0
        %1392 = vmatpush2.msra.mxu0 0.0
        %1393 = vmatprep.subr.mxu0 0.0
        %1394 = vmatpush2.msra.mxu0 0.0
        %1395 = vmatprep.subr.mxu0 0.0
        %1396 = vmatpush2.msra.mxu0 0.0
        %1397 = vmatprep.subr.mxu0 0.0
        %1398 = vmatpush2.msra.mxu0 0.0
        %1399 = vmatprep.subr.mxu0 0.0
        %1400 = vmatpush2.msra.mxu0 0.0
        %1401 = vmatprep.subr.mxu0 0.0
        %1402 = vmatpush2.msra.mxu0 0.0
        %1403 = vmatprep.subr.mxu0 0.0
        %1404 = vmatpush2.msra.mxu0 0.0
        %1405 = vmatprep.subr.mxu0 0.0
        %1406 = vmatpush2.msra.mxu0 0.0
        %1407 = vmatprep.subr.mxu0 0.0
        %1408 = vmatpush2.msra.mxu0 0.0
        %1409 = vmatprep.mubr.f32.mxu0 0.0
        %1410 = vmatmul.mubr.f32.gmra.mxu0 %v541
        %v1411 = vpop.f32.mrf.mxu0
        %v1412 = vadd.f32 0.0, %v1411
        %v1413 = vpop.f32.mrf.mxu0
        %1414 = vdwg.mxu0
        %vm1415 = vcmask 64512
        %v1417 = vsel %vm1415, %v610, 0
        %v1420 = vsel %vm1415, %v906, 0
        %1422 = vmatprep.subr.mxu0 0.0
        %1423 = vmatpush1.xpose.msra.mxu0 0.0
        %1424 = vmatprep.subr.mxu0 0.0
        %1425 = vmatpush1.xpose.msra.mxu0 0.0
        %1426 = vmatprep.subr.mxu0 0.0
        %1427 = vmatpush1.xpose.msra.mxu0 0.0
        %1428 = vmatprep.subr.mxu0 0.0
        %1429 = vmatpush1.xpose.msra.mxu0 0.0
        %1430 = vmatprep.subr.mxu0 0.0
        %1431 = vmatpush1.xpose.msra.mxu0 0.0
        %1432 = vmatprep.subr.mxu0 0.0
        %1433 = vmatpush1.xpose.msra.mxu0 0.0
        %1434 = vmatprep.subr.mxu0 0.0
        %1435 = vmatpush1.xpose.msra.mxu0 0.0
        %1436 = vmatprep.subr.mxu0 0.0
        %1437 = vmatpush1.xpose.msra.mxu0 0.0
        %1438 = vmatprep.subr.mxu0 0.0
        %1439 = vmatpush1.xpose.msra.mxu0 0.0
        %1440 = vmatprep.subr.mxu0 0.0
        %1441 = vmatpush1.xpose.msra.mxu0 0.0
        %1442 = vmatprep.subr.mxu0 0.0
        %1443 = vmatpush1.xpose.msra.mxu0 0.0
        %1444 = vmatprep.subr.mxu0 0.0
        %1445 = vmatpush1.xpose.msra.mxu0 0.0
        %1446 = vmatprep.subr.mxu0 0.0
        %1447 = vmatpush1.xpose.msra.mxu0 0.0
        %1448 = vmatprep.subr.mxu0 0.0
        %1449 = vmatpush1.xpose.msra.mxu0 0.0
        %1450 = vmatprep.subr.mxu0 0.0
        %1451 = vmatpush1.xpose.msra.mxu0 0.0
        %1452 = vmatprep.subr.mxu0 0.0
        %1453 = vmatpush1.xpose.msra.mxu0 %v1420
        %1454 = vmatprep.subr.mxu0 0.0
        %1455 = vmatpush2.xpose.msra.mxu0 0.0
        %1456 = vmatprep.subr.mxu0 0.0
        %1457 = vmatpush2.xpose.msra.mxu0 0.0
        %1458 = vmatprep.subr.mxu0 0.0
        %1459 = vmatpush2.xpose.msra.mxu0 0.0
        %1460 = vmatprep.subr.mxu0 0.0
        %1461 = vmatpush2.xpose.msra.mxu0 0.0
        %1462 = vmatprep.subr.mxu0 0.0
        %1463 = vmatpush2.xpose.msra.mxu0 0.0
        %1464 = vmatprep.subr.mxu0 0.0
        %1465 = vmatpush2.xpose.msra.mxu0 0.0
        %1466 = vmatprep.subr.mxu0 0.0
        %1467 = vmatpush2.xpose.msra.mxu0 0.0
        %1468 = vmatprep.subr.mxu0 0.0
        %1469 = vmatpush2.xpose.msra.mxu0 0.0
        %1470 = vmatprep.subr.mxu0 0.0
        %1471 = vmatpush2.xpose.msra.mxu0 0.0
        %1472 = vmatprep.subr.mxu0 0.0
        %1473 = vmatpush2.xpose.msra.mxu0 0.0
        %1474 = vmatprep.subr.mxu0 0.0
        %1475 = vmatpush2.xpose.msra.mxu0 0.0
        %1476 = vmatprep.subr.mxu0 0.0
        %1477 = vmatpush2.xpose.msra.mxu0 0.0
        %1478 = vmatprep.subr.mxu0 0.0
        %1479 = vmatpush2.xpose.msra.mxu0 0.0
        %1480 = vmatprep.subr.mxu0 0.0
        %1481 = vmatpush2.xpose.msra.mxu0 0.0
        %1482 = vmatprep.subr.mxu0 0.0
        %1483 = vmatpush2.xpose.msra.mxu0 0.0
        %1484 = vmatprep.subr.mxu0 0.0
        %1485 = vmatpush2.xpose.msra.mxu0 0.0
        %1486 = vmatprep.mubr.f32.mxu0 0.0
        %1487 = vmatmul.mubr.f32.gmra.mxu0 %v1417
        %v1488 = vpop.f32.mrf.mxu0
        %v1489 = vadd.f32 0.0, %v1488
        %v1490 = vpop.f32.mrf.mxu0
        %1491 = vdwg.mxu0
        %v1493 = vsel %vm1415, %v680, 0
        %v1496 = vsel %vm1415, %v976, 0
        %1498 = vmatprep.subr.mxu0 0.0
        %1499 = vmatpush1.xpose.msra.mxu0 0.0
        %1500 = vmatprep.subr.mxu0 0.0
        %1501 = vmatpush1.xpose.msra.mxu0 0.0
        %1502 = vmatprep.subr.mxu0 0.0
        %1503 = vmatpush1.xpose.msra.mxu0 0.0
        %1504 = vmatprep.subr.mxu0 0.0
        %1505 = vmatpush1.xpose.msra.mxu0 0.0
        %1506 = vmatprep.subr.mxu0 0.0
        %1507 = vmatpush1.xpose.msra.mxu0 0.0
        %1508 = vmatprep.subr.mxu0 0.0
        %1509 = vmatpush1.xpose.msra.mxu0 0.0
        %1510 = vmatprep.subr.mxu0 0.0
        %1511 = vmatpush1.xpose.msra.mxu0 0.0
        %1512 = vmatprep.subr.mxu0 0.0
        %1513 = vmatpush1.xpose.msra.mxu0 0.0
        %1514 = vmatprep.subr.mxu0 0.0
        %1515 = vmatpush1.xpose.msra.mxu0 0.0
        %1516 = vmatprep.subr.mxu0 0.0
        %1517 = vmatpush1.xpose.msra.mxu0 0.0
        %1518 = vmatprep.subr.mxu0 0.0
        %1519 = vmatpush1.xpose.msra.mxu0 0.0
        %1520 = vmatprep.subr.mxu0 0.0
        %1521 = vmatpush1.xpose.msra.mxu0 0.0
        %1522 = vmatprep.subr.mxu0 0.0
        %1523 = vmatpush1.xpose.msra.mxu0 0.0
        %1524 = vmatprep.subr.mxu0 0.0
        %1525 = vmatpush1.xpose.msra.mxu0 0.0
        %1526 = vmatprep.subr.mxu0 0.0
        %1527 = vmatpush1.xpose.msra.mxu0 0.0
        %1528 = vmatprep.subr.mxu0 0.0
        %1529 = vmatpush1.xpose.msra.mxu0 %v1496
        %1530 = vmatprep.subr.mxu0 0.0
        %1531 = vmatpush2.xpose.msra.mxu0 0.0
        %1532 = vmatprep.subr.mxu0 0.0
        %1533 = vmatpush2.xpose.msra.mxu0 0.0
        %1534 = vmatprep.subr.mxu0 0.0
        %1535 = vmatpush2.xpose.msra.mxu0 0.0
        %1536 = vmatprep.subr.mxu0 0.0
        %1537 = vmatpush2.xpose.msra.mxu0 0.0
        %1538 = vmatprep.subr.mxu0 0.0
        %1539 = vmatpush2.xpose.msra.mxu0 0.0
        %1540 = vmatprep.subr.mxu0 0.0
        %1541 = vmatpush2.xpose.msra.mxu0 0.0
        %1542 = vmatprep.subr.mxu0 0.0
        %1543 = vmatpush2.xpose.msra.mxu0 0.0
        %1544 = vmatprep.subr.mxu0 0.0
        %1545 = vmatpush2.xpose.msra.mxu0 0.0
        %1546 = vmatprep.subr.mxu0 0.0
        %1547 = vmatpush2.xpose.msra.mxu0 0.0
        %1548 = vmatprep.subr.mxu0 0.0
        %1549 = vmatpush2.xpose.msra.mxu0 0.0
        %1550 = vmatprep.subr.mxu0 0.0
        %1551 = vmatpush2.xpose.msra.mxu0 0.0
        %1552 = vmatprep.subr.mxu0 0.0
        %1553 = vmatpush2.xpose.msra.mxu0 0.0
        %1554 = vmatprep.subr.mxu0 0.0
        %1555 = vmatpush2.xpose.msra.mxu0 0.0
        %1556 = vmatprep.subr.mxu0 0.0
        %1557 = vmatpush2.xpose.msra.mxu0 0.0
        %1558 = vmatprep.subr.mxu0 0.0
        %1559 = vmatpush2.xpose.msra.mxu0 0.0
        %1560 = vmatprep.subr.mxu0 0.0
        %1561 = vmatpush2.xpose.msra.mxu0 0.0
        %1562 = vmatprep.mubr.f32.mxu0 0.0
        %1563 = vmatmul.mubr.f32.gmra.mxu0 %v1493
        %v1564 = vpop.f32.mrf.mxu0
        %v1565 = vadd.f32 0.0, %v1564
        %v1566 = vpop.f32.mrf.mxu0
        %1567 = vdwg.mxu0
        %v1569 = vsel %vm1415, %v750, 0
        %v1572 = vsel %vm1415, %v1046, 0
        %1574 = vmatprep.subr.mxu0 0.0
        %1575 = vmatpush1.xpose.msra.mxu0 0.0
        %1576 = vmatprep.subr.mxu0 0.0
        %1577 = vmatpush1.xpose.msra.mxu0 0.0
        %1578 = vmatprep.subr.mxu0 0.0
        %1579 = vmatpush1.xpose.msra.mxu0 0.0
        %1580 = vmatprep.subr.mxu0 0.0
        %1581 = vmatpush1.xpose.msra.mxu0 0.0
        %1582 = vmatprep.subr.mxu0 0.0
        %1583 = vmatpush1.xpose.msra.mxu0 0.0
        %1584 = vmatprep.subr.mxu0 0.0
        %1585 = vmatpush1.xpose.msra.mxu0 0.0
        %1586 = vmatprep.subr.mxu0 0.0
        %1587 = vmatpush1.xpose.msra.mxu0 0.0
        %1588 = vmatprep.subr.mxu0 0.0
        %1589 = vmatpush1.xpose.msra.mxu0 0.0
        %1590 = vmatprep.subr.mxu0 0.0
        %1591 = vmatpush1.xpose.msra.mxu0 0.0
        %1592 = vmatprep.subr.mxu0 0.0
        %1593 = vmatpush1.xpose.msra.mxu0 0.0
        %1594 = vmatprep.subr.mxu0 0.0
        %1595 = vmatpush1.xpose.msra.mxu0 0.0
        %1596 = vmatprep.subr.mxu0 0.0
        %1597 = vmatpush1.xpose.msra.mxu0 0.0
        %1598 = vmatprep.subr.mxu0 0.0
        %1599 = vmatpush1.xpose.msra.mxu0 0.0
        %1600 = vmatprep.subr.mxu0 0.0
        %1601 = vmatpush1.xpose.msra.mxu0 0.0
        %1602 = vmatprep.subr.mxu0 0.0
        %1603 = vmatpush1.xpose.msra.mxu0 0.0
        %1604 = vmatprep.subr.mxu0 0.0
        %1605 = vmatpush1.xpose.msra.mxu0 %v1572
        %1606 = vmatprep.subr.mxu0 0.0
        %1607 = vmatpush2.xpose.msra.mxu0 0.0
        %1608 = vmatprep.subr.mxu0 0.0
        %1609 = vmatpush2.xpose.msra.mxu0 0.0
        %1610 = vmatprep.subr.mxu0 0.0
        %1611 = vmatpush2.xpose.msra.mxu0 0.0
        %1612 = vmatprep.subr.mxu0 0.0
        %1613 = vmatpush2.xpose.msra.mxu0 0.0
        %1614 = vmatprep.subr.mxu0 0.0
        %1615 = vmatpush2.xpose.msra.mxu0 0.0
        %1616 = vmatprep.subr.mxu0 0.0
        %1617 = vmatpush2.xpose.msra.mxu0 0.0
        %1618 = vmatprep.subr.mxu0 0.0
        %1619 = vmatpush2.xpose.msra.mxu0 0.0
        %1620 = vmatprep.subr.mxu0 0.0
        %1621 = vmatpush2.xpose.msra.mxu0 0.0
        %1622 = vmatprep.subr.mxu0 0.0
        %1623 = vmatpush2.xpose.msra.mxu0 0.0
        %1624 = vmatprep.subr.mxu0 0.0
        %1625 = vmatpush2.xpose.msra.mxu0 0.0
        %1626 = vmatprep.subr.mxu0 0.0
        %1627 = vmatpush2.xpose.msra.mxu0 0.0
        %1628 = vmatprep.subr.mxu0 0.0
        %1629 = vmatpush2.xpose.msra.mxu0 0.0
        %1630 = vmatprep.subr.mxu0 0.0
        %1631 = vmatpush2.xpose.msra.mxu0 0.0
        %1632 = vmatprep.subr.mxu0 0.0
        %1633 = vmatpush2.xpose.msra.mxu0 0.0
        %1634 = vmatprep.subr.mxu0 0.0
        %1635 = vmatpush2.xpose.msra.mxu0 0.0
        %1636 = vmatprep.subr.mxu0 0.0
        %1637 = vmatpush2.xpose.msra.mxu0 0.0
        %1638 = vmatprep.mubr.f32.mxu0 0.0
        %1639 = vmatmul.mubr.f32.gmra.mxu0 %v1569
        %v1640 = vpop.f32.mrf.mxu0
        %v1641 = vadd.f32 0.0, %v1640
        %v1642 = vpop.f32.mrf.mxu0
        %1643 = vdwg.mxu0
        %v1645 = vsel %vm1415, %v820, 0
        %v1648 = vsel %vm1415, %v1116, 0
        %1650 = vmatprep.subr.mxu0 0.0
        %1651 = vmatpush1.xpose.msra.mxu0 0.0
        %1652 = vmatprep.subr.mxu0 0.0
        %1653 = vmatpush1.xpose.msra.mxu0 0.0
        %1654 = vmatprep.subr.mxu0 0.0
        %1655 = vmatpush1.xpose.msra.mxu0 0.0
        %1656 = vmatprep.subr.mxu0 0.0
        %1657 = vmatpush1.xpose.msra.mxu0 0.0
        %1658 = vmatprep.subr.mxu0 0.0
        %1659 = vmatpush1.xpose.msra.mxu0 0.0
        %1660 = vmatprep.subr.mxu0 0.0
        %1661 = vmatpush1.xpose.msra.mxu0 0.0
        %1662 = vmatprep.subr.mxu0 0.0
        %1663 = vmatpush1.xpose.msra.mxu0 0.0
        %1664 = vmatprep.subr.mxu0 0.0
        %1665 = vmatpush1.xpose.msra.mxu0 0.0
        %1666 = vmatprep.subr.mxu0 0.0
        %1667 = vmatpush1.xpose.msra.mxu0 0.0
        %1668 = vmatprep.subr.mxu0 0.0
        %1669 = vmatpush1.xpose.msra.mxu0 0.0
        %1670 = vmatprep.subr.mxu0 0.0
        %1671 = vmatpush1.xpose.msra.mxu0 0.0
        %1672 = vmatprep.subr.mxu0 0.0
        %1673 = vmatpush1.xpose.msra.mxu0 0.0
        %1674 = vmatprep.subr.mxu0 0.0
        %1675 = vmatpush1.xpose.msra.mxu0 0.0
        %1676 = vmatprep.subr.mxu0 0.0
        %1677 = vmatpush1.xpose.msra.mxu0 0.0
        %1678 = vmatprep.subr.mxu0 0.0
        %1679 = vmatpush1.xpose.msra.mxu0 0.0
        %1680 = vmatprep.subr.mxu0 0.0
        %1681 = vmatpush1.xpose.msra.mxu0 %v1648
        %1682 = vmatprep.subr.mxu0 0.0
        %1683 = vmatpush2.xpose.msra.mxu0 0.0
        %1684 = vmatprep.subr.mxu0 0.0
        %1685 = vmatpush2.xpose.msra.mxu0 0.0
        %1686 = vmatprep.subr.mxu0 0.0
        %1687 = vmatpush2.xpose.msra.mxu0 0.0
        %1688 = vmatprep.subr.mxu0 0.0
        %1689 = vmatpush2.xpose.msra.mxu0 0.0
        %1690 = vmatprep.subr.mxu0 0.0
        %1691 = vmatpush2.xpose.msra.mxu0 0.0
        %1692 = vmatprep.subr.mxu0 0.0
        %1693 = vmatpush2.xpose.msra.mxu0 0.0
        %1694 = vmatprep.subr.mxu0 0.0
        %1695 = vmatpush2.xpose.msra.mxu0 0.0
        %1696 = vmatprep.subr.mxu0 0.0
        %1697 = vmatpush2.xpose.msra.mxu0 0.0
        %1698 = vmatprep.subr.mxu0 0.0
        %1699 = vmatpush2.xpose.msra.mxu0 0.0
        %1700 = vmatprep.subr.mxu0 0.0
        %1701 = vmatpush2.xpose.msra.mxu0 0.0
        %1702 = vmatprep.subr.mxu0 0.0
        %1703 = vmatpush2.xpose.msra.mxu0 0.0
        %1704 = vmatprep.subr.mxu0 0.0
        %1705 = vmatpush2.xpose.msra.mxu0 0.0
        %1706 = vmatprep.subr.mxu0 0.0
        %1707 = vmatpush2.xpose.msra.mxu0 0.0
        %1708 = vmatprep.subr.mxu0 0.0
        %1709 = vmatpush2.xpose.msra.mxu0 0.0
        %1710 = vmatprep.subr.mxu0 0.0
        %1711 = vmatpush2.xpose.msra.mxu0 0.0
        %1712 = vmatprep.subr.mxu0 0.0
        %1713 = vmatpush2.xpose.msra.mxu0 0.0
        %1714 = vmatprep.mubr.f32.mxu0 0.0
        %1715 = vmatmul.mubr.f32.gmra.mxu0 %v1645
        %v1716 = vpop.f32.mrf.mxu0
        %v1717 = vadd.f32 0.0, %v1716
        %v1718 = vpop.f32.mrf.mxu0
        %1719 = vdwg.mxu0
        %v1720 = vmul.f32 %v1489, 0.35355338
        %v1721 = vmul.f32 %v1565, 0.35355338
        %v1722 = vmul.f32 %v1641, 0.35355338
        %v1723 = vmul.f32 %v1717, 0.35355338
        %v1724 = vsel %vm1415, %v1720, -inf
        %1725 = vmax.xlane.f32.xlu0 %v1724
        %v1726 = vpop.xlane.xlu0 %1725
        %v1727 = vsel %vm1415, %v1721, -inf
        %1728 = vmax.xlane.f32.xlu0 %v1727
        %v1729 = vpop.xlane.xlu0 %1728
        %v1730 = vsel %vm1415, %v1722, -inf
        %1731 = vmax.xlane.f32.xlu0 %v1730
        %v1732 = vpop.xlane.xlu0 %1731
        %v1733 = vsel %vm1415, %v1723, -inf
        %1734 = vmax.xlane.f32.xlu0 %v1733
        %v1735 = vpop.xlane.xlu0 %1734
        %v1736 = vsub.f32 %v1720, %v1726
        %v1737 = vsub.f32 %v1721, %v1729
        %v1738 = vsub.f32 %v1722, %v1732
        %v1739 = vsub.f32 %v1723, %v1735
        %v1740 = vmul.f32 %v1736, 1.442695
        %v1741 = vpow.pop %v1740
        %v1742 = vmul.f32 %v1737, 1.442695
        %v1743 = vpow.pop %v1742
        %v1744 = vmul.f32 %v1738, 1.442695
        %v1745 = vpow.pop %v1744
        %v1746 = vmul.f32 %v1739, 1.442695
        %v1747 = vpow.pop %v1746
        %v1748 = vsel %vm1415, %v1741, 0.0
        %1749 = vadd.xlane.f32.xlu0 %v1748
        %v1750 = vpop.xlane.xlu0 %1749
        %v1751 = vsel %vm1415, %v1743, 0.0
        %1752 = vadd.xlane.f32.xlu0 %v1751
        %v1753 = vpop.xlane.xlu0 %1752
        %v1754 = vsel %vm1415, %v1745, 0.0
        %1755 = vadd.xlane.f32.xlu0 %v1754
        %v1756 = vpop.xlane.xlu0 %1755
        %v1757 = vsel %vm1415, %v1747, 0.0
        %1758 = vadd.xlane.f32.xlu0 %v1757
        %v1759 = vpop.xlane.xlu0 %1758
        %v1760 = vrcp.pop %v1750
        %v1761 = vmul.f32 %v1741, %v1760
        %v1762 = vrcp.pop %v1753
        %v1763 = vmul.f32 %v1743, %v1762
        %v1764 = vrcp.pop %v1756
        %v1765 = vmul.f32 %v1745, %v1764
        %v1766 = vrcp.pop %v1759
        %v1767 = vmul.f32 %v1747, %v1766
        %v1769 = vsel %vm1415, %v1761, 0
        %1771 = vmatprep.subr.mxu0 0.0
        %1772 = vmatpush1.msra.mxu0 0.0
        %1773 = vmatprep.subr.mxu0 0.0
        %1774 = vmatpush1.msra.mxu0 0.0
        %1775 = vmatprep.subr.mxu0 0.0
        %1776 = vmatpush1.msra.mxu0 0.0
        %1777 = vmatprep.subr.mxu0 0.0
        %1778 = vmatpush1.msra.mxu0 0.0
        %1779 = vmatprep.subr.mxu0 0.0
        %1780 = vmatpush1.msra.mxu0 0.0
        %1781 = vmatprep.subr.mxu0 0.0
        %1782 = vmatpush1.msra.mxu0 0.0
        %1783 = vmatprep.subr.mxu0 0.0
        %1784 = vmatpush1.msra.mxu0 0.0
        %1785 = vmatprep.subr.mxu0 0.0
        %1786 = vmatpush1.msra.mxu0 0.0
        %1787 = vmatprep.subr.mxu0 0.0
        %1788 = vmatpush1.msra.mxu0 0.0
        %1789 = vmatprep.subr.mxu0 0.0
        %1790 = vmatpush1.msra.mxu0 0.0
        %1791 = vmatprep.subr.mxu0 0.0
        %1792 = vmatpush1.msra.mxu0 0.0
        %1793 = vmatprep.subr.mxu0 0.0
        %1794 = vmatpush1.msra.mxu0 0.0
        %1795 = vmatprep.subr.mxu0 0.0
        %1796 = vmatpush1.msra.mxu0 0.0
        %1797 = vmatprep.subr.mxu0 0.0
        %1798 = vmatpush1.msra.mxu0 0.0
        %1799 = vmatprep.subr.mxu0 0.0
        %1800 = vmatpush1.msra.mxu0 0.0
        %1801 = vmatprep.subr.mxu0 0.0
        %1802 = vmatpush1.msra.mxu0 %v1202
        %1803 = vmatprep.subr.mxu0 0.0
        %1804 = vmatpush2.msra.mxu0 0.0
        %1805 = vmatprep.subr.mxu0 0.0
        %1806 = vmatpush2.msra.mxu0 0.0
        %1807 = vmatprep.subr.mxu0 0.0
        %1808 = vmatpush2.msra.mxu0 0.0
        %1809 = vmatprep.subr.mxu0 0.0
        %1810 = vmatpush2.msra.mxu0 0.0
        %1811 = vmatprep.subr.mxu0 0.0
        %1812 = vmatpush2.msra.mxu0 0.0
        %1813 = vmatprep.subr.mxu0 0.0
        %1814 = vmatpush2.msra.mxu0 0.0
        %1815 = vmatprep.subr.mxu0 0.0
        %1816 = vmatpush2.msra.mxu0 0.0
        %1817 = vmatprep.subr.mxu0 0.0
        %1818 = vmatpush2.msra.mxu0 0.0
        %1819 = vmatprep.subr.mxu0 0.0
        %1820 = vmatpush2.msra.mxu0 0.0
        %1821 = vmatprep.subr.mxu0 0.0
        %1822 = vmatpush2.msra.mxu0 0.0
        %1823 = vmatprep.subr.mxu0 0.0
        %1824 = vmatpush2.msra.mxu0 0.0
        %1825 = vmatprep.subr.mxu0 0.0
        %1826 = vmatpush2.msra.mxu0 0.0
        %1827 = vmatprep.subr.mxu0 0.0
        %1828 = vmatpush2.msra.mxu0 0.0
        %1829 = vmatprep.subr.mxu0 0.0
        %1830 = vmatpush2.msra.mxu0 0.0
        %1831 = vmatprep.subr.mxu0 0.0
        %1832 = vmatpush2.msra.mxu0 0.0
        %1833 = vmatprep.subr.mxu0 0.0
        %1834 = vmatpush2.msra.mxu0 0.0
        %1835 = vmatprep.mubr.f32.mxu0 0.0
        %1836 = vmatmul.mubr.f32.gmra.mxu0 %v1769
        %v1837 = vpop.f32.mrf.mxu0
        %v1838 = vadd.f32 0.0, %v1837
        %v1839 = vpop.f32.mrf.mxu0
        %1840 = vdwg.mxu0
        %v1842 = vsel %vm1415, %v1763, 0
        %1844 = vmatprep.subr.mxu0 0.0
        %1845 = vmatpush1.msra.mxu0 0.0
        %1846 = vmatprep.subr.mxu0 0.0
        %1847 = vmatpush1.msra.mxu0 0.0
        %1848 = vmatprep.subr.mxu0 0.0
        %1849 = vmatpush1.msra.mxu0 0.0
        %1850 = vmatprep.subr.mxu0 0.0
        %1851 = vmatpush1.msra.mxu0 0.0
        %1852 = vmatprep.subr.mxu0 0.0
        %1853 = vmatpush1.msra.mxu0 0.0
        %1854 = vmatprep.subr.mxu0 0.0
        %1855 = vmatpush1.msra.mxu0 0.0
        %1856 = vmatprep.subr.mxu0 0.0
        %1857 = vmatpush1.msra.mxu0 0.0
        %1858 = vmatprep.subr.mxu0 0.0
        %1859 = vmatpush1.msra.mxu0 0.0
        %1860 = vmatprep.subr.mxu0 0.0
        %1861 = vmatpush1.msra.mxu0 0.0
        %1862 = vmatprep.subr.mxu0 0.0
        %1863 = vmatpush1.msra.mxu0 0.0
        %1864 = vmatprep.subr.mxu0 0.0
        %1865 = vmatpush1.msra.mxu0 0.0
        %1866 = vmatprep.subr.mxu0 0.0
        %1867 = vmatpush1.msra.mxu0 0.0
        %1868 = vmatprep.subr.mxu0 0.0
        %1869 = vmatpush1.msra.mxu0 0.0
        %1870 = vmatprep.subr.mxu0 0.0
        %1871 = vmatpush1.msra.mxu0 0.0
        %1872 = vmatprep.subr.mxu0 0.0
        %1873 = vmatpush1.msra.mxu0 0.0
        %1874 = vmatprep.subr.mxu0 0.0
        %1875 = vmatpush1.msra.mxu0 %v1272
        %1876 = vmatprep.subr.mxu0 0.0
        %1877 = vmatpush2.msra.mxu0 0.0
        %1878 = vmatprep.subr.mxu0 0.0
        %1879 = vmatpush2.msra.mxu0 0.0
        %1880 = vmatprep.subr.mxu0 0.0
        %1881 = vmatpush2.msra.mxu0 0.0
        %1882 = vmatprep.subr.mxu0 0.0
        %1883 = vmatpush2.msra.mxu0 0.0
        %1884 = vmatprep.subr.mxu0 0.0
        %1885 = vmatpush2.msra.mxu0 0.0
        %1886 = vmatprep.subr.mxu0 0.0
        %1887 = vmatpush2.msra.mxu0 0.0
        %1888 = vmatprep.subr.mxu0 0.0
        %1889 = vmatpush2.msra.mxu0 0.0
        %1890 = vmatprep.subr.mxu0 0.0
        %1891 = vmatpush2.msra.mxu0 0.0
        %1892 = vmatprep.subr.mxu0 0.0
        %1893 = vmatpush2.msra.mxu0 0.0
        %1894 = vmatprep.subr.mxu0 0.0
        %1895 = vmatpush2.msra.mxu0 0.0
        %1896 = vmatprep.subr.mxu0 0.0
        %1897 = vmatpush2.msra.mxu0 0.0
        %1898 = vmatprep.subr.mxu0 0.0
        %1899 = vmatpush2.msra.mxu0 0.0
        %1900 = vmatprep.subr.mxu0 0.0
        %1901 = vmatpush2.msra.mxu0 0.0
        %1902 = vmatprep.subr.mxu0 0.0
        %1903 = vmatpush2.msra.mxu0 0.0
        %1904 = vmatprep.subr.mxu0 0.0
        %1905 = vmatpush2.msra.mxu0 0.0
        %1906 = vmatprep.subr.mxu0 0.0
        %1907 = vmatpush2.msra.mxu0 0.0
        %1908 = vmatprep.mubr.f32.mxu0 0.0
        %1909 = vmatmul.mubr.f32.gmra.mxu0 %v1842
        %v1910 = vpop.f32.mrf.mxu0
        %v1911 = vadd.f32 0.0, %v1910
        %v1912 = vpop.f32.mrf.mxu0
        %1913 = vdwg.mxu0
        %v1915 = vsel %vm1415, %v1765, 0
        %1917 = vmatprep.subr.mxu0 0.0
        %1918 = vmatpush1.msra.mxu0 0.0
        %1919 = vmatprep.subr.mxu0 0.0
        %1920 = vmatpush1.msra.mxu0 0.0
        %1921 = vmatprep.subr.mxu0 0.0
        %1922 = vmatpush1.msra.mxu0 0.0
        %1923 = vmatprep.subr.mxu0 0.0
        %1924 = vmatpush1.msra.mxu0 0.0
        %1925 = vmatprep.subr.mxu0 0.0
        %1926 = vmatpush1.msra.mxu0 0.0
        %1927 = vmatprep.subr.mxu0 0.0
        %1928 = vmatpush1.msra.mxu0 0.0
        %1929 = vmatprep.subr.mxu0 0.0
        %1930 = vmatpush1.msra.mxu0 0.0
        %1931 = vmatprep.subr.mxu0 0.0
        %1932 = vmatpush1.msra.mxu0 0.0
        %1933 = vmatprep.subr.mxu0 0.0
        %1934 = vmatpush1.msra.mxu0 0.0
        %1935 = vmatprep.subr.mxu0 0.0
        %1936 = vmatpush1.msra.mxu0 0.0
        %1937 = vmatprep.subr.mxu0 0.0
        %1938 = vmatpush1.msra.mxu0 0.0
        %1939 = vmatprep.subr.mxu0 0.0
        %1940 = vmatpush1.msra.mxu0 0.0
        %1941 = vmatprep.subr.mxu0 0.0
        %1942 = vmatpush1.msra.mxu0 0.0
        %1943 = vmatprep.subr.mxu0 0.0
        %1944 = vmatpush1.msra.mxu0 0.0
        %1945 = vmatprep.subr.mxu0 0.0
        %1946 = vmatpush1.msra.mxu0 0.0
        %1947 = vmatprep.subr.mxu0 0.0
        %1948 = vmatpush1.msra.mxu0 %v1342
        %1949 = vmatprep.subr.mxu0 0.0
        %1950 = vmatpush2.msra.mxu0 0.0
        %1951 = vmatprep.subr.mxu0 0.0
        %1952 = vmatpush2.msra.mxu0 0.0
        %1953 = vmatprep.subr.mxu0 0.0
        %1954 = vmatpush2.msra.mxu0 0.0
        %1955 = vmatprep.subr.mxu0 0.0
        %1956 = vmatpush2.msra.mxu0 0.0
        %1957 = vmatprep.subr.mxu0 0.0
        %1958 = vmatpush2.msra.mxu0 0.0
        %1959 = vmatprep.subr.mxu0 0.0
        %1960 = vmatpush2.msra.mxu0 0.0
        %1961 = vmatprep.subr.mxu0 0.0
        %1962 = vmatpush2.msra.mxu0 0.0
        %1963 = vmatprep.subr.mxu0 0.0
        %1964 = vmatpush2.msra.mxu0 0.0
        %1965 = vmatprep.subr.mxu0 0.0
        %1966 = vmatpush2.msra.mxu0 0.0
        %1967 = vmatprep.subr.mxu0 0.0
        %1968 = vmatpush2.msra.mxu0 0.0
        %1969 = vmatprep.subr.mxu0 0.0
        %1970 = vmatpush2.msra.mxu0 0.0
        %1971 = vmatprep.subr.mxu0 0.0
        %1972 = vmatpush2.msra.mxu0 0.0
        %1973 = vmatprep.subr.mxu0 0.0
        %1974 = vmatpush2.msra.mxu0 0.0
        %1975 = vmatprep.subr.mxu0 0.0
        %1976 = vmatpush2.msra.mxu0 0.0
        %1977 = vmatprep.subr.mxu0 0.0
        %1978 = vmatpush2.msra.mxu0 0.0
        %1979 = vmatprep.subr.mxu0 0.0
        %1980 = vmatpush2.msra.mxu0 0.0
        %1981 = vmatprep.mubr.f32.mxu0 0.0
        %1982 = vmatmul.mubr.f32.gmra.mxu0 %v1915
        %v1983 = vpop.f32.mrf.mxu0
        %v1984 = vadd.f32 0.0, %v1983
        %v1985 = vpop.f32.mrf.mxu0
        %1986 = vdwg.mxu0
        %v1988 = vsel %vm1415, %v1767, 0
        %1990 = vmatprep.subr.mxu0 0.0
        %1991 = vmatpush1.msra.mxu0 0.0
        %1992 = vmatprep.subr.mxu0 0.0
        %1993 = vmatpush1.msra.mxu0 0.0
        %1994 = vmatprep.subr.mxu0 0.0
        %1995 = vmatpush1.msra.mxu0 0.0
        %1996 = vmatprep.subr.mxu0 0.0
        %1997 = vmatpush1.msra.mxu0 0.0
        %1998 = vmatprep.subr.mxu0 0.0
        %1999 = vmatpush1.msra.mxu0 0.0
        %2000 = vmatprep.subr.mxu0 0.0
        %2001 = vmatpush1.msra.mxu0 0.0
        %2002 = vmatprep.subr.mxu0 0.0
        %2003 = vmatpush1.msra.mxu0 0.0
        %2004 = vmatprep.subr.mxu0 0.0
        %2005 = vmatpush1.msra.mxu0 0.0
        %2006 = vmatprep.subr.mxu0 0.0
        %2007 = vmatpush1.msra.mxu0 0.0
        %2008 = vmatprep.subr.mxu0 0.0
        %2009 = vmatpush1.msra.mxu0 0.0
        %2010 = vmatprep.subr.mxu0 0.0
        %2011 = vmatpush1.msra.mxu0 0.0
        %2012 = vmatprep.subr.mxu0 0.0
        %2013 = vmatpush1.msra.mxu0 0.0
        %2014 = vmatprep.subr.mxu0 0.0
        %2015 = vmatpush1.msra.mxu0 0.0
        %2016 = vmatprep.subr.mxu0 0.0
        %2017 = vmatpush1.msra.mxu0 0.0
        %2018 = vmatprep.subr.mxu0 0.0
        %2019 = vmatpush1.msra.mxu0 0.0
        %2020 = vmatprep.subr.mxu0 0.0
        %2021 = vmatpush1.msra.mxu0 %v1412
        %2022 = vmatprep.subr.mxu0 0.0
        %2023 = vmatpush2.msra.mxu0 0.0
        %2024 = vmatprep.subr.mxu0 0.0
        %2025 = vmatpush2.msra.mxu0 0.0
        %2026 = vmatprep.subr.mxu0 0.0
        %2027 = vmatpush2.msra.mxu0 0.0
        %2028 = vmatprep.subr.mxu0 0.0
        %2029 = vmatpush2.msra.mxu0 0.0
        %2030 = vmatprep.subr.mxu0 0.0
        %2031 = vmatpush2.msra.mxu0 0.0
        %2032 = vmatprep.subr.mxu0 0.0
        %2033 = vmatpush2.msra.mxu0 0.0
        %2034 = vmatprep.subr.mxu0 0.0
        %2035 = vmatpush2.msra.mxu0 0.0
        %2036 = vmatprep.subr.mxu0 0.0
        %2037 = vmatpush2.msra.mxu0 0.0
        %2038 = vmatprep.subr.mxu0 0.0
        %2039 = vmatpush2.msra.mxu0 0.0
        %2040 = vmatprep.subr.mxu0 0.0
        %2041 = vmatpush2.msra.mxu0 0.0
        %2042 = vmatprep.subr.mxu0 0.0
        %2043 = vmatpush2.msra.mxu0 0.0
        %2044 = vmatprep.subr.mxu0 0.0
        %2045 = vmatpush2.msra.mxu0 0.0
        %2046 = vmatprep.subr.mxu0 0.0
        %2047 = vmatpush2.msra.mxu0 0.0
        %2048 = vmatprep.subr.mxu0 0.0
        %2049 = vmatpush2.msra.mxu0 0.0
        %2050 = vmatprep.subr.mxu0 0.0
        %2051 = vmatpush2.msra.mxu0 0.0
        %2052 = vmatprep.subr.mxu0 0.0
        %2053 = vmatpush2.msra.mxu0 0.0
        %2054 = vmatprep.mubr.f32.mxu0 0.0
        %2055 = vmatmul.mubr.f32.gmra.mxu0 %v1988
        %v2056 = vpop.f32.mrf.mxu0
        %v2057 = vadd.f32 0.0, %v2056
        %v2058 = vpop.f32.mrf.mxu0
        %2059 = vdwg.mxu0
        %v2060 = vld [vmem:[%s6] sm:$0xff]
        %v2061 = vld [vmem:[%s6 + $0x8] sm:$0xff]
        %v2062 = vld [vmem:[%s6 + $0x10] sm:$0xff]
        %v2063 = vld [vmem:[%s6 + $0x18] sm:$0xff]
        %v2065 = vsel %vm1415, %v1838, 0
        %2067 = vmatprep.subr.mxu0 0.0
        %2068 = vmatpush1.msra.mxu0 0.0
        %2069 = vmatprep.subr.mxu0 0.0
        %2070 = vmatpush1.msra.mxu0 0.0
        %2071 = vmatprep.subr.mxu0 0.0
        %2072 = vmatpush1.msra.mxu0 0.0
        %2073 = vmatprep.subr.mxu0 0.0
        %2074 = vmatpush1.msra.mxu0 0.0
        %2075 = vmatprep.subr.mxu0 0.0
        %2076 = vmatpush1.msra.mxu0 0.0
        %2077 = vmatprep.subr.mxu0 0.0
        %2078 = vmatpush1.msra.mxu0 0.0
        %2079 = vmatprep.subr.mxu0 0.0
        %2080 = vmatpush1.msra.mxu0 0.0
        %2081 = vmatprep.subr.mxu0 0.0
        %2082 = vmatpush1.msra.mxu0 0.0
        %2083 = vmatprep.subr.mxu0 0.0
        %2084 = vmatpush1.msra.mxu0 0.0
        %2085 = vmatprep.subr.mxu0 0.0
        %2086 = vmatpush1.msra.mxu0 0.0
        %2087 = vmatprep.subr.mxu0 0.0
        %2088 = vmatpush1.msra.mxu0 0.0
        %2089 = vmatprep.subr.mxu0 0.0
        %2090 = vmatpush1.msra.mxu0 0.0
        %2091 = vmatprep.subr.mxu0 0.0
        %2092 = vmatpush1.msra.mxu0 0.0
        %2093 = vmatprep.subr.mxu0 0.0
        %2094 = vmatpush1.msra.mxu0 0.0
        %2095 = vmatprep.subr.mxu0 0.0
        %2096 = vmatpush1.msra.mxu0 0.0
        %2097 = vmatprep.subr.mxu0 0.0
        %2098 = vmatpush1.msra.mxu0 %v2060
        %2099 = vmatprep.subr.mxu0 0.0
        %2100 = vmatpush2.msra.mxu0 0.0
        %2101 = vmatprep.subr.mxu0 0.0
        %2102 = vmatpush2.msra.mxu0 0.0
        %2103 = vmatprep.subr.mxu0 0.0
        %2104 = vmatpush2.msra.mxu0 0.0
        %2105 = vmatprep.subr.mxu0 0.0
        %2106 = vmatpush2.msra.mxu0 0.0
        %2107 = vmatprep.subr.mxu0 0.0
        %2108 = vmatpush2.msra.mxu0 0.0
        %2109 = vmatprep.subr.mxu0 0.0
        %2110 = vmatpush2.msra.mxu0 0.0
        %2111 = vmatprep.subr.mxu0 0.0
        %2112 = vmatpush2.msra.mxu0 0.0
        %2113 = vmatprep.subr.mxu0 0.0
        %2114 = vmatpush2.msra.mxu0 0.0
        %2115 = vmatprep.subr.mxu0 0.0
        %2116 = vmatpush2.msra.mxu0 0.0
        %2117 = vmatprep.subr.mxu0 0.0
        %2118 = vmatpush2.msra.mxu0 0.0
        %2119 = vmatprep.subr.mxu0 0.0
        %2120 = vmatpush2.msra.mxu0 0.0
        %2121 = vmatprep.subr.mxu0 0.0
        %2122 = vmatpush2.msra.mxu0 0.0
        %2123 = vmatprep.subr.mxu0 0.0
        %2124 = vmatpush2.msra.mxu0 0.0
        %2125 = vmatprep.subr.mxu0 0.0
        %2126 = vmatpush2.msra.mxu0 0.0
        %2127 = vmatprep.subr.mxu0 0.0
        %2128 = vmatpush2.msra.mxu0 0.0
        %2129 = vmatprep.subr.mxu0 0.0
        %2130 = vmatpush2.msra.mxu0 0.0
        %2131 = vmatprep.mubr.f32.mxu0 0.0
        %2132 = vmatmul.mubr.f32.gmra.mxu0 %v2065
        %v2133 = vpop.f32.mrf.mxu0
        %v2134 = vadd.f32 0.0, %v2133
        %v2135 = vpop.f32.mrf.mxu0
        %2136 = vdwg.mxu0
        %v2138 = vsel %vm1415, %v1911, 0
        %2140 = vmatprep.subr.mxu0 0.0
        %2141 = vmatpush1.msra.mxu0 0.0
        %2142 = vmatprep.subr.mxu0 0.0
        %2143 = vmatpush1.msra.mxu0 0.0
        %2144 = vmatprep.subr.mxu0 0.0
        %2145 = vmatpush1.msra.mxu0 0.0
        %2146 = vmatprep.subr.mxu0 0.0
        %2147 = vmatpush1.msra.mxu0 0.0
        %2148 = vmatprep.subr.mxu0 0.0
        %2149 = vmatpush1.msra.mxu0 0.0
        %2150 = vmatprep.subr.mxu0 0.0
        %2151 = vmatpush1.msra.mxu0 0.0
        %2152 = vmatprep.subr.mxu0 0.0
        %2153 = vmatpush1.msra.mxu0 0.0
        %2154 = vmatprep.subr.mxu0 0.0
        %2155 = vmatpush1.msra.mxu0 0.0
        %2156 = vmatprep.subr.mxu0 0.0
        %2157 = vmatpush1.msra.mxu0 0.0
        %2158 = vmatprep.subr.mxu0 0.0
        %2159 = vmatpush1.msra.mxu0 0.0
        %2160 = vmatprep.subr.mxu0 0.0
        %2161 = vmatpush1.msra.mxu0 0.0
        %2162 = vmatprep.subr.mxu0 0.0
        %2163 = vmatpush1.msra.mxu0 0.0
        %2164 = vmatprep.subr.mxu0 0.0
        %2165 = vmatpush1.msra.mxu0 0.0
        %2166 = vmatprep.subr.mxu0 0.0
        %2167 = vmatpush1.msra.mxu0 0.0
        %2168 = vmatprep.subr.mxu0 0.0
        %2169 = vmatpush1.msra.mxu0 0.0
        %2170 = vmatprep.subr.mxu0 0.0
        %2171 = vmatpush1.msra.mxu0 %v2061
        %2172 = vmatprep.subr.mxu0 0.0
        %2173 = vmatpush2.msra.mxu0 0.0
        %2174 = vmatprep.subr.mxu0 0.0
        %2175 = vmatpush2.msra.mxu0 0.0
        %2176 = vmatprep.subr.mxu0 0.0
        %2177 = vmatpush2.msra.mxu0 0.0
        %2178 = vmatprep.subr.mxu0 0.0
        %2179 = vmatpush2.msra.mxu0 0.0
        %2180 = vmatprep.subr.mxu0 0.0
        %2181 = vmatpush2.msra.mxu0 0.0
        %2182 = vmatprep.subr.mxu0 0.0
        %2183 = vmatpush2.msra.mxu0 0.0
        %2184 = vmatprep.subr.mxu0 0.0
        %2185 = vmatpush2.msra.mxu0 0.0
        %2186 = vmatprep.subr.mxu0 0.0
        %2187 = vmatpush2.msra.mxu0 0.0
        %2188 = vmatprep.subr.mxu0 0.0
        %2189 = vmatpush2.msra.mxu0 0.0
        %2190 = vmatprep.subr.mxu0 0.0
        %2191 = vmatpush2.msra.mxu0 0.0
        %2192 = vmatprep.subr.mxu0 0.0
        %2193 = vmatpush2.msra.mxu0 0.0
        %2194 = vmatprep.subr.mxu0 0.0
        %2195 = vmatpush2.msra.mxu0 0.0
        %2196 = vmatprep.subr.mxu0 0.0
        %2197 = vmatpush2.msra.mxu0 0.0
        %2198 = vmatprep.subr.mxu0 0.0
        %2199 = vmatpush2.msra.mxu0 0.0
        %2200 = vmatprep.subr.mxu0 0.0
        %2201 = vmatpush2.msra.mxu0 0.0
        %2202 = vmatprep.subr.mxu0 0.0
        %2203 = vmatpush2.msra.mxu0 0.0
        %2204 = vmatprep.mubr.f32.mxu0 0.0
        %2205 = vmatmul.mubr.f32.gmra.mxu0 %v2138
        %v2206 = vpop.f32.mrf.mxu0
        %v2207 = vadd.f32 0.0, %v2206
        %v2208 = vpop.f32.mrf.mxu0
        %2209 = vdwg.mxu0
        %v2211 = vsel %vm1415, %v1984, 0
        %2213 = vmatprep.subr.mxu0 0.0
        %2214 = vmatpush1.msra.mxu0 0.0
        %2215 = vmatprep.subr.mxu0 0.0
        %2216 = vmatpush1.msra.mxu0 0.0
        %2217 = vmatprep.subr.mxu0 0.0
        %2218 = vmatpush1.msra.mxu0 0.0
        %2219 = vmatprep.subr.mxu0 0.0
        %2220 = vmatpush1.msra.mxu0 0.0
        %2221 = vmatprep.subr.mxu0 0.0
        %2222 = vmatpush1.msra.mxu0 0.0
        %2223 = vmatprep.subr.mxu0 0.0
        %2224 = vmatpush1.msra.mxu0 0.0
        %2225 = vmatprep.subr.mxu0 0.0
        %2226 = vmatpush1.msra.mxu0 0.0
        %2227 = vmatprep.subr.mxu0 0.0
        %2228 = vmatpush1.msra.mxu0 0.0
        %2229 = vmatprep.subr.mxu0 0.0
        %2230 = vmatpush1.msra.mxu0 0.0
        %2231 = vmatprep.subr.mxu0 0.0
        %2232 = vmatpush1.msra.mxu0 0.0
        %2233 = vmatprep.subr.mxu0 0.0
        %2234 = vmatpush1.msra.mxu0 0.0
        %2235 = vmatprep.subr.mxu0 0.0
        %2236 = vmatpush1.msra.mxu0 0.0
        %2237 = vmatprep.subr.mxu0 0.0
        %2238 = vmatpush1.msra.mxu0 0.0
        %2239 = vmatprep.subr.mxu0 0.0
        %2240 = vmatpush1.msra.mxu0 0.0
        %2241 = vmatprep.subr.mxu0 0.0
        %2242 = vmatpush1.msra.mxu0 0.0
        %2243 = vmatprep.subr.mxu0 0.0
        %2244 = vmatpush1.msra.mxu0 %v2062
        %2245 = vmatprep.subr.mxu0 0.0
        %2246 = vmatpush2.msra.mxu0 0.0
        %2247 = vmatprep.subr.mxu0 0.0
        %2248 = vmatpush2.msra.mxu0 0.0
        %2249 = vmatprep.subr.mxu0 0.0
        %2250 = vmatpush2.msra.mxu0 0.0
        %2251 = vmatprep.subr.mxu0 0.0
        %2252 = vmatpush2.msra.mxu0 0.0
        %2253 = vmatprep.subr.mxu0 0.0
        %2254 = vmatpush2.msra.mxu0 0.0
        %2255 = vmatprep.subr.mxu0 0.0
        %2256 = vmatpush2.msra.mxu0 0.0
        %2257 = vmatprep.subr.mxu0 0.0
        %2258 = vmatpush2.msra.mxu0 0.0
        %2259 = vmatprep.subr.mxu0 0.0
        %2260 = vmatpush2.msra.mxu0 0.0
        %2261 = vmatprep.subr.mxu0 0.0
        %2262 = vmatpush2.msra.mxu0 0.0
        %2263 = vmatprep.subr.mxu0 0.0
        %2264 = vmatpush2.msra.mxu0 0.0
        %2265 = vmatprep.subr.mxu0 0.0
        %2266 = vmatpush2.msra.mxu0 0.0
        %2267 = vmatprep.subr.mxu0 0.0
        %2268 = vmatpush2.msra.mxu0 0.0
        %2269 = vmatprep.subr.mxu0 0.0
        %2270 = vmatpush2.msra.mxu0 0.0
        %2271 = vmatprep.subr.mxu0 0.0
        %2272 = vmatpush2.msra.mxu0 0.0
        %2273 = vmatprep.subr.mxu0 0.0
        %2274 = vmatpush2.msra.mxu0 0.0
        %2275 = vmatprep.subr.mxu0 0.0
        %2276 = vmatpush2.msra.mxu0 0.0
        %2277 = vmatprep.mubr.f32.mxu0 0.0
        %2278 = vmatmul.mubr.f32.gmra.mxu0 %v2211
        %v2279 = vpop.f32.mrf.mxu0
        %v2280 = vadd.f32 0.0, %v2279
        %v2281 = vpop.f32.mrf.mxu0
        %2282 = vdwg.mxu0
        %v2284 = vsel %vm1415, %v2057, 0
        %2286 = vmatprep.subr.mxu0 0.0
        %2287 = vmatpush1.msra.mxu0 0.0
        %2288 = vmatprep.subr.mxu0 0.0
        %2289 = vmatpush1.msra.mxu0 0.0
        %2290 = vmatprep.subr.mxu0 0.0
        %2291 = vmatpush1.msra.mxu0 0.0
        %2292 = vmatprep.subr.mxu0 0.0
        %2293 = vmatpush1.msra.mxu0 0.0
        %2294 = vmatprep.subr.mxu0 0.0
        %2295 = vmatpush1.msra.mxu0 0.0
        %2296 = vmatprep.subr.mxu0 0.0
        %2297 = vmatpush1.msra.mxu0 0.0
        %2298 = vmatprep.subr.mxu0 0.0
        %2299 = vmatpush1.msra.mxu0 0.0
        %2300 = vmatprep.subr.mxu0 0.0
        %2301 = vmatpush1.msra.mxu0 0.0
        %2302 = vmatprep.subr.mxu0 0.0
        %2303 = vmatpush1.msra.mxu0 0.0
        %2304 = vmatprep.subr.mxu0 0.0
        %2305 = vmatpush1.msra.mxu0 0.0
        %2306 = vmatprep.subr.mxu0 0.0
        %2307 = vmatpush1.msra.mxu0 0.0
        %2308 = vmatprep.subr.mxu0 0.0
        %2309 = vmatpush1.msra.mxu0 0.0
        %2310 = vmatprep.subr.mxu0 0.0
        %2311 = vmatpush1.msra.mxu0 0.0
        %2312 = vmatprep.subr.mxu0 0.0
        %2313 = vmatpush1.msra.mxu0 0.0
        %2314 = vmatprep.subr.mxu0 0.0
        %2315 = vmatpush1.msra.mxu0 0.0
        %2316 = vmatprep.subr.mxu0 0.0
        %2317 = vmatpush1.msra.mxu0 %v2063
        %2318 = vmatprep.subr.mxu0 0.0
        %2319 = vmatpush2.msra.mxu0 0.0
        %2320 = vmatprep.subr.mxu0 0.0
        %2321 = vmatpush2.msra.mxu0 0.0
        %2322 = vmatprep.subr.mxu0 0.0
        %2323 = vmatpush2.msra.mxu0 0.0
        %2324 = vmatprep.subr.mxu0 0.0
        %2325 = vmatpush2.msra.mxu0 0.0
        %2326 = vmatprep.subr.mxu0 0.0
        %2327 = vmatpush2.msra.mxu0 0.0
        %2328 = vmatprep.subr.mxu0 0.0
        %2329 = vmatpush2.msra.mxu0 0.0
        %2330 = vmatprep.subr.mxu0 0.0
        %2331 = vmatpush2.msra.mxu0 0.0
        %2332 = vmatprep.subr.mxu0 0.0
        %2333 = vmatpush2.msra.mxu0 0.0
        %2334 = vmatprep.subr.mxu0 0.0
        %2335 = vmatpush2.msra.mxu0 0.0
        %2336 = vmatprep.subr.mxu0 0.0
        %2337 = vmatpush2.msra.mxu0 0.0
        %2338 = vmatprep.subr.mxu0 0.0
        %2339 = vmatpush2.msra.mxu0 0.0
        %2340 = vmatprep.subr.mxu0 0.0
        %2341 = vmatpush2.msra.mxu0 0.0
        %2342 = vmatprep.subr.mxu0 0.0
        %2343 = vmatpush2.msra.mxu0 0.0
        %2344 = vmatprep.subr.mxu0 0.0
        %2345 = vmatpush2.msra.mxu0 0.0
        %2346 = vmatprep.subr.mxu0 0.0
        %2347 = vmatpush2.msra.mxu0 0.0
        %2348 = vmatprep.subr.mxu0 0.0
        %2349 = vmatpush2.msra.mxu0 0.0
        %2350 = vmatprep.mubr.f32.mxu0 0.0
        %2351 = vmatmul.mubr.f32.gmra.mxu0 %v2284
        %v2352 = vpop.f32.mrf.mxu0
        %v2353 = vadd.f32 0.0, %v2352
        %v2354 = vpop.f32.mrf.mxu0
        %2355 = vdwg.mxu0
        %v2356 = vsel %vm539, %v2134, 0.0
        %v2357 = vsel %vm539, %v2207, 0.0
        %v2358 = vadd.f32 %v2356, %v2357
        %v2359 = vsel %vm539, %v2280, 0.0
        %v2360 = vadd.f32 %v2358, %v2359
        %v2361 = vsel %vm539, %v2353, 0.0
        %v2362 = vadd.f32 %v2360, %v2361
        %v2363 = vadd.f32 %v2362, %v520
        %v2364 = vld [vmem:[%s11] sm:$0x1]
        %s2365 = scalar_lea.vmem %s11, 1
        %v2366 = vld [vmem:[%s2365] sm:$0x1]
        %v2367 = vsel %vm539, %v2363, 0.0
        %2368 = vadd.xlane.f32.xlu0 %v2367
        %v2369 = vpop.xlane.xlu0 %2368
        %v2370 = vrcp.pop 32.0
        %v2371 = vmul.f32 %v2369, %v2370
        %v2372 = vsub.f32 %v2363, %v2371
        %v2373 = vmul.f32 %v2372, %v2372
        %v2374 = vsel %vm539, %v2373, 0.0
        %2375 = vadd.xlane.f32.xlu0 %v2374
        %v2376 = vpop.xlane.xlu0 %2375
        %v2377 = vmul.f32 %v2376, %v2370
        %v2378 = vadd.f32 %v2377, 1e-06
        %v2379 = vrsqrt.pop %v2378
        %v2380 = vmul.f32 %v2372, %v2379
        %v2382 = vlaneseq
        %v2383 = vshrl.u32 %v2382, 7
        %v2384 = vsub.s32 0, %v2383
        %v2385 = vrot.slane %v2364, %v2384
        %v2387 = vmul.f32 %v2380, %v2385
        %v2389 = vlaneseq
        %v2390 = vshrl.u32 %v2389, 7
        %v2391 = vsub.s32 0, %v2390
        %v2392 = vrot.slane %v2366, %v2391
        %v2394 = vadd.f32 %v2387, %v2392
        %v2395 = vadd.f32 %v520, %v2394
        %s2396 = scalar_lea.vmem %s11, 2
        %v2397 = vld [vmem:[%s2396] sm:$0x1]
        %s2398 = scalar_lea.vmem %s11, 3
        %v2399 = vld [vmem:[%s2398] sm:$0x1]
        %v2400 = vsel %vm539, %v2395, 0.0
        %2401 = vadd.xlane.f32.xlu0 %v2400
        %v2402 = vpop.xlane.xlu0 %2401
        %v2403 = vmul.f32 %v2402, %v2370
        %v2404 = vsub.f32 %v2395, %v2403
        %v2405 = vmul.f32 %v2404, %v2404
        %v2406 = vsel %vm539, %v2405, 0.0
        %2407 = vadd.xlane.f32.xlu0 %v2406
        %v2408 = vpop.xlane.xlu0 %2407
        %v2409 = vmul.f32 %v2408, %v2370
        %v2410 = vadd.f32 %v2409, 1e-05
        %v2411 = vrsqrt.pop %v2410
        %v2412 = vmul.f32 %v2404, %v2411
        %v2414 = vlaneseq
        %v2415 = vshrl.u32 %v2414, 7
        %v2416 = vsub.s32 0, %v2415
        %v2417 = vrot.slane %v2397, %v2416
        %v2419 = vmul.f32 %v2412, %v2417
        %v2421 = vlaneseq
        %v2422 = vshrl.u32 %v2421, 7
        %v2423 = vsub.s32 0, %v2422
        %v2424 = vrot.slane %v2399, %v2423
        %v2426 = vadd.f32 %v2419, %v2424
        %v2427 = vld [vmem:[%s7] sm:$0xff]
        %v2428 = vld [vmem:[%s7 + $0x8] sm:$0xff]
        %v2429 = vld [vmem:[%s7 + $0x10] sm:$0xff]
        %v2430 = vld [vmem:[%s7 + $0x18] sm:$0xff]
        %v2431 = vld [vmem:[%s8] sm:$0x1]
        %v2433 = vlaneseq
        %v2434 = vshrl.u32 %v2433, 7
        %v2435 = vsub.s32 0, %v2434
        %v2436 = vrot.slane %v2431, %v2435
        %v2439 = vsel %vm539, %v2426, 0
        %2441 = vmatprep.subr.mxu0 0.0
        %2442 = vmatpush1.msra.mxu0 0.0
        %2443 = vmatprep.subr.mxu0 0.0
        %2444 = vmatpush1.msra.mxu0 0.0
        %2445 = vmatprep.subr.mxu0 0.0
        %2446 = vmatpush1.msra.mxu0 0.0
        %2447 = vmatprep.subr.mxu0 0.0
        %2448 = vmatpush1.msra.mxu0 0.0
        %2449 = vmatprep.subr.mxu0 0.0
        %2450 = vmatpush1.msra.mxu0 0.0
        %2451 = vmatprep.subr.mxu0 0.0
        %2452 = vmatpush1.msra.mxu0 0.0
        %2453 = vmatprep.subr.mxu0 0.0
        %2454 = vmatpush1.msra.mxu0 0.0
        %2455 = vmatprep.subr.mxu0 0.0
        %2456 = vmatpush1.msra.mxu0 0.0
        %2457 = vmatprep.subr.mxu0 0.0
        %2458 = vmatpush1.msra.mxu0 0.0
        %2459 = vmatprep.subr.mxu0 0.0
        %2460 = vmatpush1.msra.mxu0 0.0
        %2461 = vmatprep.subr.mxu0 0.0
        %2462 = vmatpush1.msra.mxu0 0.0
        %2463 = vmatprep.subr.mxu0 0.0
        %2464 = vmatpush1.msra.mxu0 0.0
        %2465 = vmatprep.subr.mxu0 0.0
        %2466 = vmatpush1.msra.mxu0 %v2430
        %2467 = vmatprep.subr.mxu0 0.0
        %2468 = vmatpush1.msra.mxu0 %v2429
        %2469 = vmatprep.subr.mxu0 0.0
        %2470 = vmatpush1.msra.mxu0 %v2428
        %2471 = vmatprep.subr.mxu0 0.0
        %2472 = vmatpush1.msra.mxu0 %v2427
        %2473 = vmatprep.subr.mxu0 0.0
        %2474 = vmatpush2.msra.mxu0 0.0
        %2475 = vmatprep.subr.mxu0 0.0
        %2476 = vmatpush2.msra.mxu0 0.0
        %2477 = vmatprep.subr.mxu0 0.0
        %2478 = vmatpush2.msra.mxu0 0.0
        %2479 = vmatprep.subr.mxu0 0.0
        %2480 = vmatpush2.msra.mxu0 0.0
        %2481 = vmatprep.subr.mxu0 0.0
        %2482 = vmatpush2.msra.mxu0 0.0
        %2483 = vmatprep.subr.mxu0 0.0
        %2484 = vmatpush2.msra.mxu0 0.0
        %2485 = vmatprep.subr.mxu0 0.0
        %2486 = vmatpush2.msra.mxu0 0.0
        %2487 = vmatprep.subr.mxu0 0.0
        %2488 = vmatpush2.msra.mxu0 0.0
        %2489 = vmatprep.subr.mxu0 0.0
        %2490 = vmatpush2.msra.mxu0 0.0
        %2491 = vmatprep.subr.mxu0 0.0
        %2492 = vmatpush2.msra.mxu0 0.0
        %2493 = vmatprep.subr.mxu0 0.0
        %2494 = vmatpush2.msra.mxu0 0.0
        %2495 = vmatprep.subr.mxu0 0.0
        %2496 = vmatpush2.msra.mxu0 0.0
        %2497 = vmatprep.subr.mxu0 0.0
        %2498 = vmatpush2.msra.mxu0 0.0
        %2499 = vmatprep.subr.mxu0 0.0
        %2500 = vmatpush2.msra.mxu0 0.0
        %2501 = vmatprep.subr.mxu0 0.0
        %2502 = vmatpush2.msra.mxu0 0.0
        %2503 = vmatprep.subr.mxu0 0.0
        %2504 = vmatpush2.msra.mxu0 0.0
        %2505 = vmatprep.mubr.f32.mxu0 0.0
        %2506 = vmatmul.mubr.f32.gmra.mxu0 %v2439
        %v2507 = vpop.f32.mrf.mxu0
        %v2508 = vadd.f32 %v2436, %v2507
        %v2509 = vpop.f32.mrf.mxu0
        %2510 = vdwg.mxu0
        %v2511 = vmax.f32 %v2508, 0.0
        %v2512 = vld [vmem:[%s9] sm:$0xff]
        %v2513 = vld [vmem:[%s9 + $0x8] sm:$0xff]
        %v2514 = vld [vmem:[%s9 + $0x10] sm:$0xff]
        %v2515 = vld [vmem:[%s9 + $0x18] sm:$0xff]
        %v2516 = vld [vmem:[%s9 + $0x20] sm:$0xff]
        %v2517 = vld [vmem:[%s9 + $0x28] sm:$0xff]
        %v2518 = vld [vmem:[%s9 + $0x30] sm:$0xff]
        %v2519 = vld [vmem:[%s9 + $0x38] sm:$0xff]
        %v2520 = vld [vmem:[%s10] sm:$0x1]
        %v2522 = vlaneseq
        %v2523 = vshrl.u32 %v2522, 7
        %v2524 = vsub.s32 0, %v2523
        %v2525 = vrot.slane %v2520, %v2524
        %vm2527 = vcmask 523264
        %v2529 = vsel %vm2527, %v2511, 0
        %2531 = vmatprep.subr.mxu0 0.0
        %2532 = vmatpush1.msra.mxu0 0.0
        %2533 = vmatprep.subr.mxu0 0.0
        %2534 = vmatpush1.msra.mxu0 0.0
        %2535 = vmatprep.subr.mxu0 0.0
        %2536 = vmatpush1.msra.mxu0 0.0
        %2537 = vmatprep.subr.mxu0 0.0
        %2538 = vmatpush1.msra.mxu0 0.0
        %2539 = vmatprep.subr.mxu0 0.0
        %2540 = vmatpush1.msra.mxu0 0.0
        %2541 = vmatprep.subr.mxu0 0.0
        %2542 = vmatpush1.msra.mxu0 0.0
        %2543 = vmatprep.subr.mxu0 0.0
        %2544 = vmatpush1.msra.mxu0 0.0
        %2545 = vmatprep.subr.mxu0 0.0
        %2546 = vmatpush1.msra.mxu0 0.0
        %2547 = vmatprep.subr.mxu0 0.0
        %2548 = vmatpush1.msra.mxu0 %v2519
        %2549 = vmatprep.subr.mxu0 0.0
        %2550 = vmatpush1.msra.mxu0 %v2518
        %2551 = vmatprep.subr.mxu0 0.0
        %2552 = vmatpush1.msra.mxu0 %v2517
        %2553 = vmatprep.subr.mxu0 0.0
        %2554 = vmatpush1.msra.mxu0 %v2516
        %2555 = vmatprep.subr.mxu0 0.0
        %2556 = vmatpush1.msra.mxu0 %v2515
        %2557 = vmatprep.subr.mxu0 0.0
        %2558 = vmatpush1.msra.mxu0 %v2514
        %2559 = vmatprep.subr.mxu0 0.0
        %2560 = vmatpush1.msra.mxu0 %v2513
        %2561 = vmatprep.subr.mxu0 0.0
        %2562 = vmatpush1.msra.mxu0 %v2512
        %2563 = vmatprep.subr.mxu0 0.0
        %2564 = vmatpush2.msra.mxu0 0.0
        %2565 = vmatprep.subr.mxu0 0.0
        %2566 = vmatpush2.msra.mxu0 0.0
        %2567 = vmatprep.subr.mxu0 0.0
        %2568 = vmatpush2.msra.mxu0 0.0
        %2569 = vmatprep.subr.mxu0 0.0
        %2570 = vmatpush2.msra.mxu0 0.0
        %2571 = vmatprep.subr.mxu0 0.0
        %2572 = vmatpush2.msra.mxu0 0.0
        %2573 = vmatprep.subr.mxu0 0.0
        %2574 = vmatpush2.msra.mxu0 0.0
        %2575 = vmatprep.subr.mxu0 0.0
        %2576 = vmatpush2.msra.mxu0 0.0
        %2577 = vmatprep.subr.mxu0 0.0
        %2578 = vmatpush2.msra.mxu0 0.0
        %2579 = vmatprep.subr.mxu0 0.0
        %2580 = vmatpush2.msra.mxu0 0.0
        %2581 = vmatprep.subr.mxu0 0.0
        %2582 = vmatpush2.msra.mxu0 0.0
        %2583 = vmatprep.subr.mxu0 0.0
        %2584 = vmatpush2.msra.mxu0 0.0
        %2585 = vmatprep.subr.mxu0 0.0
        %2586 = vmatpush2.msra.mxu0 0.0
        %2587 = vmatprep.subr.mxu0 0.0
        %2588 = vmatpush2.msra.mxu0 0.0
        %2589 = vmatprep.subr.mxu0 0.0
        %2590 = vmatpush2.msra.mxu0 0.0
        %2591 = vmatprep.subr.mxu0 0.0
        %2592 = vmatpush2.msra.mxu0 0.0
        %2593 = vmatprep.subr.mxu0 0.0
        %2594 = vmatpush2.msra.mxu0 0.0
        %2595 = vmatprep.mubr.f32.mxu0 0.0
        %2596 = vmatmul.mubr.f32.gmra.mxu0 %v2529
        %v2597 = vpop.f32.mrf.mxu0
        %v2598 = vadd.f32 %v2525, %v2597
        %v2599 = vpop.f32.mrf.mxu0
        %2600 = vdwg.mxu0
        %v2601 = vadd.f32 %v2426, %v2598
        %s2602 = scalar_lea.vmem %s11, 4
        %v2603 = vld [vmem:[%s2602] sm:$0x1]
        %s2604 = scalar_lea.vmem %s11, 5
        %v2605 = vld [vmem:[%s2604] sm:$0x1]
        %v2606 = vsel %vm539, %v2601, 0.0
        %2607 = vadd.xlane.f32.xlu0 %v2606
        %v2608 = vpop.xlane.xlu0 %2607
        %v2609 = vmul.f32 %v2608, %v2370
        %v2610 = vsub.f32 %v2601, %v2609
        %v2611 = vmul.f32 %v2610, %v2610
        %v2612 = vsel %vm539, %v2611, 0.0
        %2613 = vadd.xlane.f32.xlu0 %v2612
        %v2614 = vpop.xlane.xlu0 %2613
        %v2615 = vmul.f32 %v2614, %v2370
        %v2616 = vadd.f32 %v2615, 1e-05
        %v2617 = vrsqrt.pop %v2616
        %v2618 = vmul.f32 %v2610, %v2617
        %v2620 = vlaneseq
        %v2621 = vshrl.u32 %v2620, 7
        %v2622 = vsub.s32 0, %v2621
        %v2623 = vrot.slane %v2603, %v2622
        %v2625 = vmul.f32 %v2618, %v2623
        %v2627 = vlaneseq
        %v2628 = vshrl.u32 %v2627, 7
        %v2629 = vsub.s32 0, %v2628
        %v2630 = vrot.slane %v2605, %v2629
        %v2632 = vadd.f32 %v2625, %v2630
        %s2633 = scalar_lea.vmem %s3, 128
        %v2634 = vld [vmem:[%s2633] sm:$0xff]
        %v2635 = vld [vmem:[%s2633 + $0x8] sm:$0xff]
        %v2636 = vld [vmem:[%s2633 + $0x10] sm:$0xff]
        %v2637 = vld [vmem:[%s2633 + $0x18] sm:$0xff]
        %v2638 = vld [vmem:[%s2633 + $0x20] sm:$0xff]
        %v2639 = vld [vmem:[%s2633 + $0x28] sm:$0xff]
        %v2640 = vld [vmem:[%s2633 + $0x30] sm:$0xff]
        %v2641 = vld [vmem:[%s2633 + $0x38] sm:$0xff]
        %v2642 = vld [vmem:[%s2633 + $0x40] sm:$0xff]
        %v2643 = vld [vmem:[%s2633 + $0x48] sm:$0xff]
        %v2644 = vld [vmem:[%s2633 + $0x50] sm:$0xff]
        %v2645 = vld [vmem:[%s2633 + $0x58] sm:$0xff]
        %v2646 = vld [vmem:[%s2633 + $0x60] sm:$0xff]
        %v2647 = vld [vmem:[%s2633 + $0x68] sm:$0xff]
        %v2648 = vld [vmem:[%s2633 + $0x70] sm:$0xff]
        %v2649 = vld [vmem:[%s2633 + $0x78] sm:$0xff]
        %v2651 = vsel %vm539, %v2632, 0
        %2653 = vmatprep.subr.mxu0 0.0
        %2654 = vmatpush1.msra.mxu0 0.0
        %2655 = vmatprep.subr.mxu0 0.0
        %2656 = vmatpush1.msra.mxu0 0.0
        %2657 = vmatprep.subr.mxu0 0.0
        %2658 = vmatpush1.msra.mxu0 0.0
        %2659 = vmatprep.subr.mxu0 0.0
        %2660 = vmatpush1.msra.mxu0 0.0
        %2661 = vmatprep.subr.mxu0 0.0
        %2662 = vmatpush1.msra.mxu0 0.0
        %2663 = vmatprep.subr.mxu0 0.0
        %2664 = vmatpush1.msra.mxu0 0.0
        %2665 = vmatprep.subr.mxu0 0.0
        %2666 = vmatpush1.msra.mxu0 0.0
        %2667 = vmatprep.subr.mxu0 0.0
        %2668 = vmatpush1.msra.mxu0 0.0
        %2669 = vmatprep.subr.mxu0 0.0
        %2670 = vmatpush1.msra.mxu0 0.0
        %2671 = vmatprep.subr.mxu0 0.0
        %2672 = vmatpush1.msra.mxu0 0.0
        %2673 = vmatprep.subr.mxu0 0.0
        %2674 = vmatpush1.msra.mxu0 0.0
        %2675 = vmatprep.subr.mxu0 0.0
        %2676 = vmatpush1.msra.mxu0 0.0
        %2677 = vmatprep.subr.mxu0 0.0
        %2678 = vmatpush1.msra.mxu0 %v2637
        %2679 = vmatprep.subr.mxu0 0.0
        %2680 = vmatpush1.msra.mxu0 %v2636
        %2681 = vmatprep.subr.mxu0 0.0
        %2682 = vmatpush1.msra.mxu0 %v2635
        %2683 = vmatprep.subr.mxu0 0.0
        %2684 = vmatpush1.msra.mxu0 %v2634
        %2685 = vmatprep.subr.mxu0 0.0
        %2686 = vmatpush2.msra.mxu0 0.0
        %2687 = vmatprep.subr.mxu0 0.0
        %2688 = vmatpush2.msra.mxu0 0.0
        %2689 = vmatprep.subr.mxu0 0.0
        %2690 = vmatpush2.msra.mxu0 0.0
        %2691 = vmatprep.subr.mxu0 0.0
        %2692 = vmatpush2.msra.mxu0 0.0
        %2693 = vmatprep.subr.mxu0 0.0
        %2694 = vmatpush2.msra.mxu0 0.0
        %2695 = vmatprep.subr.mxu0 0.0
        %2696 = vmatpush2.msra.mxu0 0.0
        %2697 = vmatprep.subr.mxu0 0.0
        %2698 = vmatpush2.msra.mxu0 0.0
        %2699 = vmatprep.subr.mxu0 0.0
        %2700 = vmatpush2.msra.mxu0 0.0
        %2701 = vmatprep.subr.mxu0 0.0
        %2702 = vmatpush2.msra.mxu0 0.0
        %2703 = vmatprep.subr.mxu0 0.0
        %2704 = vmatpush2.msra.mxu0 0.0
        %2705 = vmatprep.subr.mxu0 0.0
        %2706 = vmatpush2.msra.mxu0 0.0
        %2707 = vmatprep.subr.mxu0 0.0
        %2708 = vmatpush2.msra.mxu0 0.0
        %2709 = vmatprep.subr.mxu0 0.0
        %2710 = vmatpush2.msra.mxu0 0.0
        %2711 = vmatprep.subr.mxu0 0.0
        %2712 = vmatpush2.msra.mxu0 0.0
        %2713 = vmatprep.subr.mxu0 0.0
        %2714 = vmatpush2.msra.mxu0 0.0
        %2715 = vmatprep.subr.mxu0 0.0
        %2716 = vmatpush2.msra.mxu0 0.0
        %2717 = vmatprep.mubr.f32.mxu0 0.0
        %2718 = vmatmul.mubr.f32.gmra.mxu0 %v2651
        %v2719 = vpop.f32.mrf.mxu0
        %v2720 = vadd.f32 0.0, %v2719
        %v2721 = vpop.f32.mrf.mxu0
        %2722 = vdwg.mxu0
        %2723 = vmatprep.subr.mxu0 0.0
        %2724 = vmatpush1.msra.mxu0 0.0
        %2725 = vmatprep.subr.mxu0 0.0
        %2726 = vmatpush1.msra.mxu0 0.0
        %2727 = vmatprep.subr.mxu0 0.0
        %2728 = vmatpush1.msra.mxu0 0.0
        %2729 = vmatprep.subr.mxu0 0.0
        %2730 = vmatpush1.msra.mxu0 0.0
        %2731 = vmatprep.subr.mxu0 0.0
        %2732 = vmatpush1.msra.mxu0 0.0
        %2733 = vmatprep.subr.mxu0 0.0
        %2734 = vmatpush1.msra.mxu0 0.0
        %2735 = vmatprep.subr.mxu0 0.0
        %2736 = vmatpush1.msra.mxu0 0.0
        %2737 = vmatprep.subr.mxu0 0.0
        %2738 = vmatpush1.msra.mxu0 0.0
        %2739 = vmatprep.subr.mxu0 0.0
        %2740 = vmatpush1.msra.mxu0 0.0
        %2741 = vmatprep.subr.mxu0 0.0
        %2742 = vmatpush1.msra.mxu0 0.0
        %2743 = vmatprep.subr.mxu0 0.0
        %2744 = vmatpush1.msra.mxu0 0.0
        %2745 = vmatprep.subr.mxu0 0.0
        %2746 = vmatpush1.msra.mxu0 0.0
        %2747 = vmatprep.subr.mxu0 0.0
        %2748 = vmatpush1.msra.mxu0 %v2641
        %2749 = vmatprep.subr.mxu0 0.0
        %2750 = vmatpush1.msra.mxu0 %v2640
        %2751 = vmatprep.subr.mxu0 0.0
        %2752 = vmatpush1.msra.mxu0 %v2639
        %2753 = vmatprep.subr.mxu0 0.0
        %2754 = vmatpush1.msra.mxu0 %v2638
        %2755 = vmatprep.subr.mxu0 0.0
        %2756 = vmatpush2.msra.mxu0 0.0
        %2757 = vmatprep.subr.mxu0 0.0
        %2758 = vmatpush2.msra.mxu0 0.0
        %2759 = vmatprep.subr.mxu0 0.0
        %2760 = vmatpush2.msra.mxu0 0.0
        %2761 = vmatprep.subr.mxu0 0.0
        %2762 = vmatpush2.msra.mxu0 0.0
        %2763 = vmatprep.subr.mxu0 0.0
        %2764 = vmatpush2.msra.mxu0 0.0
        %2765 = vmatprep.subr.mxu0 0.0
        %2766 = vmatpush2.msra.mxu0 0.0
        %2767 = vmatprep.subr.mxu0 0.0
        %2768 = vmatpush2.msra.mxu0 0.0
        %2769 = vmatprep.subr.mxu0 0.0
        %2770 = vmatpush2.msra.mxu0 0.0
        %2771 = vmatprep.subr.mxu0 0.0
        %2772 = vmatpush2.msra.mxu0 0.0
        %2773 = vmatprep.subr.mxu0 0.0
        %2774 = vmatpush2.msra.mxu0 0.0
        %2775 = vmatprep.subr.mxu0 0.0
        %2776 = vmatpush2.msra.mxu0 0.0
        %2777 = vmatprep.subr.mxu0 0.0
        %2778 = vmatpush2.msra.mxu0 0.0
        %2779 = vmatprep.subr.mxu0 0.0
        %2780 = vmatpush2.msra.mxu0 0.0
        %2781 = vmatprep.subr.mxu0 0.0
        %2782 = vmatpush2.msra.mxu0 0.0
        %2783 = vmatprep.subr.mxu0 0.0
        %2784 = vmatpush2.msra.mxu0 0.0
        %2785 = vmatprep.subr.mxu0 0.0
        %2786 = vmatpush2.msra.mxu0 0.0
        %2787 = vmatprep.mubr.f32.mxu0 0.0
        %2788 = vmatmul.mubr.f32.gmra.mxu0 %v2651
        %v2789 = vpop.f32.mrf.mxu0
        %v2790 = vadd.f32 0.0, %v2789
        %v2791 = vpop.f32.mrf.mxu0
        %2792 = vdwg.mxu0
        %2793 = vmatprep.subr.mxu0 0.0
        %2794 = vmatpush1.msra.mxu0 0.0
        %2795 = vmatprep.subr.mxu0 0.0
        %2796 = vmatpush1.msra.mxu0 0.0
        %2797 = vmatprep.subr.mxu0 0.0
        %2798 = vmatpush1.msra.mxu0 0.0
        %2799 = vmatprep.subr.mxu0 0.0
        %2800 = vmatpush1.msra.mxu0 0.0
        %2801 = vmatprep.subr.mxu0 0.0
        %2802 = vmatpush1.msra.mxu0 0.0
        %2803 = vmatprep.subr.mxu0 0.0
        %2804 = vmatpush1.msra.mxu0 0.0
        %2805 = vmatprep.subr.mxu0 0.0
        %2806 = vmatpush1.msra.mxu0 0.0
        %2807 = vmatprep.subr.mxu0 0.0
        %2808 = vmatpush1.msra.mxu0 0.0
        %2809 = vmatprep.subr.mxu0 0.0
        %2810 = vmatpush1.msra.mxu0 0.0
        %2811 = vmatprep.subr.mxu0 0.0
        %2812 = vmatpush1.msra.mxu0 0.0
        %2813 = vmatprep.subr.mxu0 0.0
        %2814 = vmatpush1.msra.mxu0 0.0
        %2815 = vmatprep.subr.mxu0 0.0
        %2816 = vmatpush1.msra.mxu0 0.0
        %2817 = vmatprep.subr.mxu0 0.0
        %2818 = vmatpush1.msra.mxu0 %v2645
        %2819 = vmatprep.subr.mxu0 0.0
        %2820 = vmatpush1.msra.mxu0 %v2644
        %2821 = vmatprep.subr.mxu0 0.0
        %2822 = vmatpush1.msra.mxu0 %v2643
        %2823 = vmatprep.subr.mxu0 0.0
        %2824 = vmatpush1.msra.mxu0 %v2642
        %2825 = vmatprep.subr.mxu0 0.0
        %2826 = vmatpush2.msra.mxu0 0.0
        %2827 = vmatprep.subr.mxu0 0.0
        %2828 = vmatpush2.msra.mxu0 0.0
        %2829 = vmatprep.subr.mxu0 0.0
        %2830 = vmatpush2.msra.mxu0 0.0
        %2831 = vmatprep.subr.mxu0 0.0
        %2832 = vmatpush2.msra.mxu0 0.0
        %2833 = vmatprep.subr.mxu0 0.0
        %2834 = vmatpush2.msra.mxu0 0.0
        %2835 = vmatprep.subr.mxu0 0.0
        %2836 = vmatpush2.msra.mxu0 0.0
        %2837 = vmatprep.subr.mxu0 0.0
        %2838 = vmatpush2.msra.mxu0 0.0
        %2839 = vmatprep.subr.mxu0 0.0
        %2840 = vmatpush2.msra.mxu0 0.0
        %2841 = vmatprep.subr.mxu0 0.0
        %2842 = vmatpush2.msra.mxu0 0.0
        %2843 = vmatprep.subr.mxu0 0.0
        %2844 = vmatpush2.msra.mxu0 0.0
        %2845 = vmatprep.subr.mxu0 0.0
        %2846 = vmatpush2.msra.mxu0 0.0
        %2847 = vmatprep.subr.mxu0 0.0
        %2848 = vmatpush2.msra.mxu0 0.0
        %2849 = vmatprep.subr.mxu0 0.0
        %2850 = vmatpush2.msra.mxu0 0.0
        %2851 = vmatprep.subr.mxu0 0.0
        %2852 = vmatpush2.msra.mxu0 0.0
        %2853 = vmatprep.subr.mxu0 0.0
        %2854 = vmatpush2.msra.mxu0 0.0
        %2855 = vmatprep.subr.mxu0 0.0
        %2856 = vmatpush2.msra.mxu0 0.0
        %2857 = vmatprep.mubr.f32.mxu0 0.0
        %2858 = vmatmul.mubr.f32.gmra.mxu0 %v2651
        %v2859 = vpop.f32.mrf.mxu0
        %v2860 = vadd.f32 0.0, %v2859
        %v2861 = vpop.f32.mrf.mxu0
        %2862 = vdwg.mxu0
        %2863 = vmatprep.subr.mxu0 0.0
        %2864 = vmatpush1.msra.mxu0 0.0
        %2865 = vmatprep.subr.mxu0 0.0
        %2866 = vmatpush1.msra.mxu0 0.0
        %2867 = vmatprep.subr.mxu0 0.0
        %2868 = vmatpush1.msra.mxu0 0.0
        %2869 = vmatprep.subr.mxu0 0.0
        %2870 = vmatpush1.msra.mxu0 0.0
        %2871 = vmatprep.subr.mxu0 0.0
        %2872 = vmatpush1.msra.mxu0 0.0
        %2873 = vmatprep.subr.mxu0 0.0
        %2874 = vmatpush1.msra.mxu0 0.0
        %2875 = vmatprep.subr.mxu0 0.0
        %2876 = vmatpush1.msra.mxu0 0.0
        %2877 = vmatprep.subr.mxu0 0.0
        %2878 = vmatpush1.msra.mxu0 0.0
        %2879 = vmatprep.subr.mxu0 0.0
        %2880 = vmatpush1.msra.mxu0 0.0
        %2881 = vmatprep.subr.mxu0 0.0
        %2882 = vmatpush1.msra.mxu0 0.0
        %2883 = vmatprep.subr.mxu0 0.0
        %2884 = vmatpush1.msra.mxu0 0.0
        %2885 = vmatprep.subr.mxu0 0.0
        %2886 = vmatpush1.msra.mxu0 0.0
        %2887 = vmatprep.subr.mxu0 0.0
        %2888 = vmatpush1.msra.mxu0 %v2649
        %2889 = vmatprep.subr.mxu0 0.0
        %2890 = vmatpush1.msra.mxu0 %v2648
        %2891 = vmatprep.subr.mxu0 0.0
        %2892 = vmatpush1.msra.mxu0 %v2647
        %2893 = vmatprep.subr.mxu0 0.0
        %2894 = vmatpush1.msra.mxu0 %v2646
        %2895 = vmatprep.subr.mxu0 0.0
        %2896 = vmatpush2.msra.mxu0 0.0
        %2897 = vmatprep.subr.mxu0 0.0
        %2898 = vmatpush2.msra.mxu0 0.0
        %2899 = vmatprep.subr.mxu0 0.0
        %2900 = vmatpush2.msra.mxu0 0.0
        %2901 = vmatprep.subr.mxu0 0.0
        %2902 = vmatpush2.msra.mxu0 0.0
        %2903 = vmatprep.subr.mxu0 0.0
        %2904 = vmatpush2.msra.mxu0 0.0
        %2905 = vmatprep.subr.mxu0 0.0
        %2906 = vmatpush2.msra.mxu0 0.0
        %2907 = vmatprep.subr.mxu0 0.0
        %2908 = vmatpush2.msra.mxu0 0.0
        %2909 = vmatprep.subr.mxu0 0.0
        %2910 = vmatpush2.msra.mxu0 0.0
        %2911 = vmatprep.subr.mxu0 0.0
        %2912 = vmatpush2.msra.mxu0 0.0
        %2913 = vmatprep.subr.mxu0 0.0
        %2914 = vmatpush2.msra.mxu0 0.0
        %2915 = vmatprep.subr.mxu0 0.0
        %2916 = vmatpush2.msra.mxu0 0.0
        %2917 = vmatprep.subr.mxu0 0.0
        %2918 = vmatpush2.msra.mxu0 0.0
        %2919 = vmatprep.subr.mxu0 0.0
        %2920 = vmatpush2.msra.mxu0 0.0
        %2921 = vmatprep.subr.mxu0 0.0
        %2922 = vmatpush2.msra.mxu0 0.0
        %2923 = vmatprep.subr.mxu0 0.0
        %2924 = vmatpush2.msra.mxu0 0.0
        %2925 = vmatprep.subr.mxu0 0.0
        %2926 = vmatpush2.msra.mxu0 0.0
        %2927 = vmatprep.mubr.f32.mxu0 0.0
        %2928 = vmatmul.mubr.f32.gmra.mxu0 %v2651
        %v2929 = vpop.f32.mrf.mxu0
        %v2930 = vadd.f32 0.0, %v2929
        %v2931 = vpop.f32.mrf.mxu0
        %2932 = vdwg.mxu0
        %s2933 = scalar_lea.vmem %s4, 128
        %v2934 = vld [vmem:[%s2933] sm:$0xff]
        %v2935 = vld [vmem:[%s2933 + $0x8] sm:$0xff]
        %v2936 = vld [vmem:[%s2933 + $0x10] sm:$0xff]
        %v2937 = vld [vmem:[%s2933 + $0x18] sm:$0xff]
        %v2938 = vld [vmem:[%s2933 + $0x20] sm:$0xff]
        %v2939 = vld [vmem:[%s2933 + $0x28] sm:$0xff]
        %v2940 = vld [vmem:[%s2933 + $0x30] sm:$0xff]
        %v2941 = vld [vmem:[%s2933 + $0x38] sm:$0xff]
        %v2942 = vld [vmem:[%s2933 + $0x40] sm:$0xff]
        %v2943 = vld [vmem:[%s2933 + $0x48] sm:$0xff]
        %v2944 = vld [vmem:[%s2933 + $0x50] sm:$0xff]
        %v2945 = vld [vmem:[%s2933 + $0x58] sm:$0xff]
        %v2946 = vld [vmem:[%s2933 + $0x60] sm:$0xff]
        %v2947 = vld [vmem:[%s2933 + $0x68] sm:$0xff]
        %v2948 = vld [vmem:[%s2933 + $0x70] sm:$0xff]
        %v2949 = vld [vmem:[%s2933 + $0x78] sm:$0xff]
        %2950 = vmatprep.subr.mxu0 0.0
        %2951 = vmatpush1.msra.mxu0 0.0
        %2952 = vmatprep.subr.mxu0 0.0
        %2953 = vmatpush1.msra.mxu0 0.0
        %2954 = vmatprep.subr.mxu0 0.0
        %2955 = vmatpush1.msra.mxu0 0.0
        %2956 = vmatprep.subr.mxu0 0.0
        %2957 = vmatpush1.msra.mxu0 0.0
        %2958 = vmatprep.subr.mxu0 0.0
        %2959 = vmatpush1.msra.mxu0 0.0
        %2960 = vmatprep.subr.mxu0 0.0
        %2961 = vmatpush1.msra.mxu0 0.0
        %2962 = vmatprep.subr.mxu0 0.0
        %2963 = vmatpush1.msra.mxu0 0.0
        %2964 = vmatprep.subr.mxu0 0.0
        %2965 = vmatpush1.msra.mxu0 0.0
        %2966 = vmatprep.subr.mxu0 0.0
        %2967 = vmatpush1.msra.mxu0 0.0
        %2968 = vmatprep.subr.mxu0 0.0
        %2969 = vmatpush1.msra.mxu0 0.0
        %2970 = vmatprep.subr.mxu0 0.0
        %2971 = vmatpush1.msra.mxu0 0.0
        %2972 = vmatprep.subr.mxu0 0.0
        %2973 = vmatpush1.msra.mxu0 0.0
        %2974 = vmatprep.subr.mxu0 0.0
        %2975 = vmatpush1.msra.mxu0 %v2937
        %2976 = vmatprep.subr.mxu0 0.0
        %2977 = vmatpush1.msra.mxu0 %v2936
        %2978 = vmatprep.subr.mxu0 0.0
        %2979 = vmatpush1.msra.mxu0 %v2935
        %2980 = vmatprep.subr.mxu0 0.0
        %2981 = vmatpush1.msra.mxu0 %v2934
        %2982 = vmatprep.subr.mxu0 0.0
        %2983 = vmatpush2.msra.mxu0 0.0
        %2984 = vmatprep.subr.mxu0 0.0
        %2985 = vmatpush2.msra.mxu0 0.0
        %2986 = vmatprep.subr.mxu0 0.0
        %2987 = vmatpush2.msra.mxu0 0.0
        %2988 = vmatprep.subr.mxu0 0.0
        %2989 = vmatpush2.msra.mxu0 0.0
        %2990 = vmatprep.subr.mxu0 0.0
        %2991 = vmatpush2.msra.mxu0 0.0
        %2992 = vmatprep.subr.mxu0 0.0
        %2993 = vmatpush2.msra.mxu0 0.0
        %2994 = vmatprep.subr.mxu0 0.0
        %2995 = vmatpush2.msra.mxu0 0.0
        %2996 = vmatprep.subr.mxu0 0.0
        %2997 = vmatpush2.msra.mxu0 0.0
        %2998 = vmatprep.subr.mxu0 0.0
        %2999 = vmatpush2.msra.mxu0 0.0
        %3000 = vmatprep.subr.mxu0 0.0
        %3001 = vmatpush2.msra.mxu0 0.0
        %3002 = vmatprep.subr.mxu0 0.0
        %3003 = vmatpush2.msra.mxu0 0.0
        %3004 = vmatprep.subr.mxu0 0.0
        %3005 = vmatpush2.msra.mxu0 0.0
        %3006 = vmatprep.subr.mxu0 0.0
        %3007 = vmatpush2.msra.mxu0 0.0
        %3008 = vmatprep.subr.mxu0 0.0
        %3009 = vmatpush2.msra.mxu0 0.0
        %3010 = vmatprep.subr.mxu0 0.0
        %3011 = vmatpush2.msra.mxu0 0.0
        %3012 = vmatprep.subr.mxu0 0.0
        %3013 = vmatpush2.msra.mxu0 0.0
        %3014 = vmatprep.mubr.f32.mxu0 0.0
        %3015 = vmatmul.mubr.f32.gmra.mxu0 %v2651
        %v3016 = vpop.f32.mrf.mxu0
        %v3017 = vadd.f32 0.0, %v3016
        %v3018 = vpop.f32.mrf.mxu0
        %3019 = vdwg.mxu0
        %3020 = vmatprep.subr.mxu0 0.0
        %3021 = vmatpush1.msra.mxu0 0.0
        %3022 = vmatprep.subr.mxu0 0.0
        %3023 = vmatpush1.msra.mxu0 0.0
        %3024 = vmatprep.subr.mxu0 0.0
        %3025 = vmatpush1.msra.mxu0 0.0
        %3026 = vmatprep.subr.mxu0 0.0
        %3027 = vmatpush1.msra.mxu0 0.0
        %3028 = vmatprep.subr.mxu0 0.0
        %3029 = vmatpush1.msra.mxu0 0.0
        %3030 = vmatprep.subr.mxu0 0.0
        %3031 = vmatpush1.msra.mxu0 0.0
        %3032 = vmatprep.subr.mxu0 0.0
        %3033 = vmatpush1.msra.mxu0 0.0
        %3034 = vmatprep.subr.mxu0 0.0
        %3035 = vmatpush1.msra.mxu0 0.0
        %3036 = vmatprep.subr.mxu0 0.0
        %3037 = vmatpush1.msra.mxu0 0.0
        %3038 = vmatprep.subr.mxu0 0.0
        %3039 = vmatpush1.msra.mxu0 0.0
        %3040 = vmatprep.subr.mxu0 0.0
        %3041 = vmatpush1.msra.mxu0 0.0
        %3042 = vmatprep.subr.mxu0 0.0
        %3043 = vmatpush1.msra.mxu0 0.0
        %3044 = vmatprep.subr.mxu0 0.0
        %3045 = vmatpush1.msra.mxu0 %v2941
        %3046 = vmatprep.subr.mxu0 0.0
        %3047 = vmatpush1.msra.mxu0 %v2940
        %3048 = vmatprep.subr.mxu0 0.0
        %3049 = vmatpush1.msra.mxu0 %v2939
        %3050 = vmatprep.subr.mxu0 0.0
        %3051 = vmatpush1.msra.mxu0 %v2938
        %3052 = vmatprep.subr.mxu0 0.0
        %3053 = vmatpush2.msra.mxu0 0.0
        %3054 = vmatprep.subr.mxu0 0.0
        %3055 = vmatpush2.msra.mxu0 0.0
        %3056 = vmatprep.subr.mxu0 0.0
        %3057 = vmatpush2.msra.mxu0 0.0
        %3058 = vmatprep.subr.mxu0 0.0
        %3059 = vmatpush2.msra.mxu0 0.0
        %3060 = vmatprep.subr.mxu0 0.0
        %3061 = vmatpush2.msra.mxu0 0.0
        %3062 = vmatprep.subr.mxu0 0.0
        %3063 = vmatpush2.msra.mxu0 0.0
        %3064 = vmatprep.subr.mxu0 0.0
        %3065 = vmatpush2.msra.mxu0 0.0
        %3066 = vmatprep.subr.mxu0 0.0
        %3067 = vmatpush2.msra.mxu0 0.0
        %3068 = vmatprep.subr.mxu0 0.0
        %3069 = vmatpush2.msra.mxu0 0.0
        %3070 = vmatprep.subr.mxu0 0.0
        %3071 = vmatpush2.msra.mxu0 0.0
        %3072 = vmatprep.subr.mxu0 0.0
        %3073 = vmatpush2.msra.mxu0 0.0
        %3074 = vmatprep.subr.mxu0 0.0
        %3075 = vmatpush2.msra.mxu0 0.0
        %3076 = vmatprep.subr.mxu0 0.0
        %3077 = vmatpush2.msra.mxu0 0.0
        %3078 = vmatprep.subr.mxu0 0.0
        %3079 = vmatpush2.msra.mxu0 0.0
        %3080 = vmatprep.subr.mxu0 0.0
        %3081 = vmatpush2.msra.mxu0 0.0
        %3082 = vmatprep.subr.mxu0 0.0
        %3083 = vmatpush2.msra.mxu0 0.0
        %3084 = vmatprep.mubr.f32.mxu0 0.0
        %3085 = vmatmul.mubr.f32.gmra.mxu0 %v2651
        %v3086 = vpop.f32.mrf.mxu0
        %v3087 = vadd.f32 0.0, %v3086
        %v3088 = vpop.f32.mrf.mxu0
        %3089 = vdwg.mxu0
        %3090 = vmatprep.subr.mxu0 0.0
        %3091 = vmatpush1.msra.mxu0 0.0
        %3092 = vmatprep.subr.mxu0 0.0
        %3093 = vmatpush1.msra.mxu0 0.0
        %3094 = vmatprep.subr.mxu0 0.0
        %3095 = vmatpush1.msra.mxu0 0.0
        %3096 = vmatprep.subr.mxu0 0.0
        %3097 = vmatpush1.msra.mxu0 0.0
        %3098 = vmatprep.subr.mxu0 0.0
        %3099 = vmatpush1.msra.mxu0 0.0
        %3100 = vmatprep.subr.mxu0 0.0
        %3101 = vmatpush1.msra.mxu0 0.0
        %3102 = vmatprep.subr.mxu0 0.0
        %3103 = vmatpush1.msra.mxu0 0.0
        %3104 = vmatprep.subr.mxu0 0.0
        %3105 = vmatpush1.msra.mxu0 0.0
        %3106 = vmatprep.subr.mxu0 0.0
        %3107 = vmatpush1.msra.mxu0 0.0
        %3108 = vmatprep.subr.mxu0 0.0
        %3109 = vmatpush1.msra.mxu0 0.0
        %3110 = vmatprep.subr.mxu0 0.0
        %3111 = vmatpush1.msra.mxu0 0.0
        %3112 = vmatprep.subr.mxu0 0.0
        %3113 = vmatpush1.msra.mxu0 0.0
        %3114 = vmatprep.subr.mxu0 0.0
        %3115 = vmatpush1.msra.mxu0 %v2945
        %3116 = vmatprep.subr.mxu0 0.0
        %3117 = vmatpush1.msra.mxu0 %v2944
        %3118 = vmatprep.subr.mxu0 0.0
        %3119 = vmatpush1.msra.mxu0 %v2943
        %3120 = vmatprep.subr.mxu0 0.0
        %3121 = vmatpush1.msra.mxu0 %v2942
        %3122 = vmatprep.subr.mxu0 0.0
        %3123 = vmatpush2.msra.mxu0 0.0
        %3124 = vmatprep.subr.mxu0 0.0
        %3125 = vmatpush2.msra.mxu0 0.0
        %3126 = vmatprep.subr.mxu0 0.0
        %3127 = vmatpush2.msra.mxu0 0.0
        %3128 = vmatprep.subr.mxu0 0.0
        %3129 = vmatpush2.msra.mxu0 0.0
        %3130 = vmatprep.subr.mxu0 0.0
        %3131 = vmatpush2.msra.mxu0 0.0
        %3132 = vmatprep.subr.mxu0 0.0
        %3133 = vmatpush2.msra.mxu0 0.0
        %3134 = vmatprep.subr.mxu0 0.0
        %3135 = vmatpush2.msra.mxu0 0.0
        %3136 = vmatprep.subr.mxu0 0.0
        %3137 = vmatpush2.msra.mxu0 0.0
        %3138 = vmatprep.subr.mxu0 0.0
        %3139 = vmatpush2.msra.mxu0 0.0
        %3140 = vmatprep.subr.mxu0 0.0
        %3141 = vmatpush2.msra.mxu0 0.0
        %3142 = vmatprep.subr.mxu0 0.0
        %3143 = vmatpush2.msra.mxu0 0.0
        %3144 = vmatprep.subr.mxu0 0.0
        %3145 = vmatpush2.msra.mxu0 0.0
        %3146 = vmatprep.subr.mxu0 0.0
        %3147 = vmatpush2.msra.mxu0 0.0
        %3148 = vmatprep.subr.mxu0 0.0
        %3149 = vmatpush2.msra.mxu0 0.0
        %3150 = vmatprep.subr.mxu0 0.0
        %3151 = vmatpush2.msra.mxu0 0.0
        %3152 = vmatprep.subr.mxu0 0.0
        %3153 = vmatpush2.msra.mxu0 0.0
        %3154 = vmatprep.mubr.f32.mxu0 0.0
        %3155 = vmatmul.mubr.f32.gmra.mxu0 %v2651
        %v3156 = vpop.f32.mrf.mxu0
        %v3157 = vadd.f32 0.0, %v3156
        %v3158 = vpop.f32.mrf.mxu0
        %3159 = vdwg.mxu0
        %3160 = vmatprep.subr.mxu0 0.0
        %3161 = vmatpush1.msra.mxu0 0.0
        %3162 = vmatprep.subr.mxu0 0.0
        %3163 = vmatpush1.msra.mxu0 0.0
        %3164 = vmatprep.subr.mxu0 0.0
        %3165 = vmatpush1.msra.mxu0 0.0
        %3166 = vmatprep.subr.mxu0 0.0
        %3167 = vmatpush1.msra.mxu0 0.0
        %3168 = vmatprep.subr.mxu0 0.0
        %3169 = vmatpush1.msra.mxu0 0.0
        %3170 = vmatprep.subr.mxu0 0.0
        %3171 = vmatpush1.msra.mxu0 0.0
        %3172 = vmatprep.subr.mxu0 0.0
        %3173 = vmatpush1.msra.mxu0 0.0
        %3174 = vmatprep.subr.mxu0 0.0
        %3175 = vmatpush1.msra.mxu0 0.0
        %3176 = vmatprep.subr.mxu0 0.0
        %3177 = vmatpush1.msra.mxu0 0.0
        %3178 = vmatprep.subr.mxu0 0.0
        %3179 = vmatpush1.msra.mxu0 0.0
        %3180 = vmatprep.subr.mxu0 0.0
        %3181 = vmatpush1.msra.mxu0 0.0
        %3182 = vmatprep.subr.mxu0 0.0
        %3183 = vmatpush1.msra.mxu0 0.0
        %3184 = vmatprep.subr.mxu0 0.0
        %3185 = vmatpush1.msra.mxu0 %v2949
        %3186 = vmatprep.subr.mxu0 0.0
        %3187 = vmatpush1.msra.mxu0 %v2948
        %3188 = vmatprep.subr.mxu0 0.0
        %3189 = vmatpush1.msra.mxu0 %v2947
        %3190 = vmatprep.subr.mxu0 0.0
        %3191 = vmatpush1.msra.mxu0 %v2946
        %3192 = vmatprep.subr.mxu0 0.0
        %3193 = vmatpush2.msra.mxu0 0.0
        %3194 = vmatprep.subr.mxu0 0.0
        %3195 = vmatpush2.msra.mxu0 0.0
        %3196 = vmatprep.subr.mxu0 0.0
        %3197 = vmatpush2.msra.mxu0 0.0
        %3198 = vmatprep.subr.mxu0 0.0
        %3199 = vmatpush2.msra.mxu0 0.0
        %3200 = vmatprep.subr.mxu0 0.0
        %3201 = vmatpush2.msra.mxu0 0.0
        %3202 = vmatprep.subr.mxu0 0.0
        %3203 = vmatpush2.msra.mxu0 0.0
        %3204 = vmatprep.subr.mxu0 0.0
        %3205 = vmatpush2.msra.mxu0 0.0
        %3206 = vmatprep.subr.mxu0 0.0
        %3207 = vmatpush2.msra.mxu0 0.0
        %3208 = vmatprep.subr.mxu0 0.0
        %3209 = vmatpush2.msra.mxu0 0.0
        %3210 = vmatprep.subr.mxu0 0.0
        %3211 = vmatpush2.msra.mxu0 0.0
        %3212 = vmatprep.subr.mxu0 0.0
        %3213 = vmatpush2.msra.mxu0 0.0
        %3214 = vmatprep.subr.mxu0 0.0
        %3215 = vmatpush2.msra.mxu0 0.0
        %3216 = vmatprep.subr.mxu0 0.0
        %3217 = vmatpush2.msra.mxu0 0.0
        %3218 = vmatprep.subr.mxu0 0.0
        %3219 = vmatpush2.msra.mxu0 0.0
        %3220 = vmatprep.subr.mxu0 0.0
        %3221 = vmatpush2.msra.mxu0 0.0
        %3222 = vmatprep.subr.mxu0 0.0
        %3223 = vmatpush2.msra.mxu0 0.0
        %3224 = vmatprep.mubr.f32.mxu0 0.0
        %3225 = vmatmul.mubr.f32.gmra.mxu0 %v2651
        %v3226 = vpop.f32.mrf.mxu0
        %v3227 = vadd.f32 0.0, %v3226
        %v3228 = vpop.f32.mrf.mxu0
        %3229 = vdwg.mxu0
        %s3230 = scalar_lea.vmem %s5, 128
        %v3231 = vld [vmem:[%s3230] sm:$0xff]
        %v3232 = vld [vmem:[%s3230 + $0x8] sm:$0xff]
        %v3233 = vld [vmem:[%s3230 + $0x10] sm:$0xff]
        %v3234 = vld [vmem:[%s3230 + $0x18] sm:$0xff]
        %v3235 = vld [vmem:[%s3230 + $0x20] sm:$0xff]
        %v3236 = vld [vmem:[%s3230 + $0x28] sm:$0xff]
        %v3237 = vld [vmem:[%s3230 + $0x30] sm:$0xff]
        %v3238 = vld [vmem:[%s3230 + $0x38] sm:$0xff]
        %v3239 = vld [vmem:[%s3230 + $0x40] sm:$0xff]
        %v3240 = vld [vmem:[%s3230 + $0x48] sm:$0xff]
        %v3241 = vld [vmem:[%s3230 + $0x50] sm:$0xff]
        %v3242 = vld [vmem:[%s3230 + $0x58] sm:$0xff]
        %v3243 = vld [vmem:[%s3230 + $0x60] sm:$0xff]
        %v3244 = vld [vmem:[%s3230 + $0x68] sm:$0xff]
        %v3245 = vld [vmem:[%s3230 + $0x70] sm:$0xff]
        %v3246 = vld [vmem:[%s3230 + $0x78] sm:$0xff]
        %3247 = vmatprep.subr.mxu0 0.0
        %3248 = vmatpush1.msra.mxu0 0.0
        %3249 = vmatprep.subr.mxu0 0.0
        %3250 = vmatpush1.msra.mxu0 0.0
        %3251 = vmatprep.subr.mxu0 0.0
        %3252 = vmatpush1.msra.mxu0 0.0
        %3253 = vmatprep.subr.mxu0 0.0
        %3254 = vmatpush1.msra.mxu0 0.0
        %3255 = vmatprep.subr.mxu0 0.0
        %3256 = vmatpush1.msra.mxu0 0.0
        %3257 = vmatprep.subr.mxu0 0.0
        %3258 = vmatpush1.msra.mxu0 0.0
        %3259 = vmatprep.subr.mxu0 0.0
        %3260 = vmatpush1.msra.mxu0 0.0
        %3261 = vmatprep.subr.mxu0 0.0
        %3262 = vmatpush1.msra.mxu0 0.0
        %3263 = vmatprep.subr.mxu0 0.0
        %3264 = vmatpush1.msra.mxu0 0.0
        %3265 = vmatprep.subr.mxu0 0.0
        %3266 = vmatpush1.msra.mxu0 0.0
        %3267 = vmatprep.subr.mxu0 0.0
        %3268 = vmatpush1.msra.mxu0 0.0
        %3269 = vmatprep.subr.mxu0 0.0
        %3270 = vmatpush1.msra.mxu0 0.0
        %3271 = vmatprep.subr.mxu0 0.0
        %3272 = vmatpush1.msra.mxu0 %v3234
        %3273 = vmatprep.subr.mxu0 0.0
        %3274 = vmatpush1.msra.mxu0 %v3233
        %3275 = vmatprep.subr.mxu0 0.0
        %3276 = vmatpush1.msra.mxu0 %v3232
        %3277 = vmatprep.subr.mxu0 0.0
        %3278 = vmatpush1.msra.mxu0 %v3231
        %3279 = vmatprep.subr.mxu0 0.0
        %3280 = vmatpush2.msra.mxu0 0.0
        %3281 = vmatprep.subr.mxu0 0.0
        %3282 = vmatpush2.msra.mxu0 0.0
        %3283 = vmatprep.subr.mxu0 0.0
        %3284 = vmatpush2.msra.mxu0 0.0
        %3285 = vmatprep.subr.mxu0 0.0
        %3286 = vmatpush2.msra.mxu0 0.0
        %3287 = vmatprep.subr.mxu0 0.0
        %3288 = vmatpush2.msra.mxu0 0.0
        %3289 = vmatprep.subr.mxu0 0.0
        %3290 = vmatpush2.msra.mxu0 0.0
        %3291 = vmatprep.subr.mxu0 0.0
        %3292 = vmatpush2.msra.mxu0 0.0
        %3293 = vmatprep.subr.mxu0 0.0
        %3294 = vmatpush2.msra.mxu0 0.0
        %3295 = vmatprep.subr.mxu0 0.0
        %3296 = vmatpush2.msra.mxu0 0.0
        %3297 = vmatprep.subr.mxu0 0.0
        %3298 = vmatpush2.msra.mxu0 0.0
        %3299 = vmatprep.subr.mxu0 0.0
        %3300 = vmatpush2.msra.mxu0 0.0
        %3301 = vmatprep.subr.mxu0 0.0
        %3302 = vmatpush2.msra.mxu0 0.0
        %3303 = vmatprep.subr.mxu0 0.0
        %3304 = vmatpush2.msra.mxu0 0.0
        %3305 = vmatprep.subr.mxu0 0.0
        %3306 = vmatpush2.msra.mxu0 0.0
        %3307 = vmatprep.subr.mxu0 0.0
        %3308 = vmatpush2.msra.mxu0 0.0
        %3309 = vmatprep.subr.mxu0 0.0
        %3310 = vmatpush2.msra.mxu0 0.0
        %3311 = vmatprep.mubr.f32.mxu0 0.0
        %3312 = vmatmul.mubr.f32.gmra.mxu0 %v2651
        %v3313 = vpop.f32.mrf.mxu0
        %v3314 = vadd.f32 0.0, %v3313
        %v3315 = vpop.f32.mrf.mxu0
        %3316 = vdwg.mxu0
        %3317 = vmatprep.subr.mxu0 0.0
        %3318 = vmatpush1.msra.mxu0 0.0
        %3319 = vmatprep.subr.mxu0 0.0
        %3320 = vmatpush1.msra.mxu0 0.0
        %3321 = vmatprep.subr.mxu0 0.0
        %3322 = vmatpush1.msra.mxu0 0.0
        %3323 = vmatprep.subr.mxu0 0.0
        %3324 = vmatpush1.msra.mxu0 0.0
        %3325 = vmatprep.subr.mxu0 0.0
        %3326 = vmatpush1.msra.mxu0 0.0
        %3327 = vmatprep.subr.mxu0 0.0
        %3328 = vmatpush1.msra.mxu0 0.0
        %3329 = vmatprep.subr.mxu0 0.0
        %3330 = vmatpush1.msra.mxu0 0.0
        %3331 = vmatprep.subr.mxu0 0.0
        %3332 = vmatpush1.msra.mxu0 0.0
        %3333 = vmatprep.subr.mxu0 0.0
        %3334 = vmatpush1.msra.mxu0 0.0
        %3335 = vmatprep.subr.mxu0 0.0
        %3336 = vmatpush1.msra.mxu0 0.0
        %3337 = vmatprep.subr.mxu0 0.0
        %3338 = vmatpush1.msra.mxu0 0.0
        %3339 = vmatprep.subr.mxu0 0.0
        %3340 = vmatpush1.msra.mxu0 0.0
        %3341 = vmatprep.subr.mxu0 0.0
        %3342 = vmatpush1.msra.mxu0 %v3238
        %3343 = vmatprep.subr.mxu0 0.0
        %3344 = vmatpush1.msra.mxu0 %v3237
        %3345 = vmatprep.subr.mxu0 0.0
        %3346 = vmatpush1.msra.mxu0 %v3236
        %3347 = vmatprep.subr.mxu0 0.0
        %3348 = vmatpush1.msra.mxu0 %v3235
        %3349 = vmatprep.subr.mxu0 0.0
        %3350 = vmatpush2.msra.mxu0 0.0
        %3351 = vmatprep.subr.mxu0 0.0
        %3352 = vmatpush2.msra.mxu0 0.0
        %3353 = vmatprep.subr.mxu0 0.0
        %3354 = vmatpush2.msra.mxu0 0.0
        %3355 = vmatprep.subr.mxu0 0.0
        %3356 = vmatpush2.msra.mxu0 0.0
        %3357 = vmatprep.subr.mxu0 0.0
        %3358 = vmatpush2.msra.mxu0 0.0
        %3359 = vmatprep.subr.mxu0 0.0
        %3360 = vmatpush2.msra.mxu0 0.0
        %3361 = vmatprep.subr.mxu0 0.0
        %3362 = vmatpush2.msra.mxu0 0.0
        %3363 = vmatprep.subr.mxu0 0.0
        %3364 = vmatpush2.msra.mxu0 0.0
        %3365 = vmatprep.subr.mxu0 0.0
        %3366 = vmatpush2.msra.mxu0 0.0
        %3367 = vmatprep.subr.mxu0 0.0
        %3368 = vmatpush2.msra.mxu0 0.0
        %3369 = vmatprep.subr.mxu0 0.0
        %3370 = vmatpush2.msra.mxu0 0.0
        %3371 = vmatprep.subr.mxu0 0.0
        %3372 = vmatpush2.msra.mxu0 0.0
        %3373 = vmatprep.subr.mxu0 0.0
        %3374 = vmatpush2.msra.mxu0 0.0
        %3375 = vmatprep.subr.mxu0 0.0
        %3376 = vmatpush2.msra.mxu0 0.0
        %3377 = vmatprep.subr.mxu0 0.0
        %3378 = vmatpush2.msra.mxu0 0.0
        %3379 = vmatprep.subr.mxu0 0.0
        %3380 = vmatpush2.msra.mxu0 0.0
        %3381 = vmatprep.mubr.f32.mxu0 0.0
        %3382 = vmatmul.mubr.f32.gmra.mxu0 %v2651
        %v3383 = vpop.f32.mrf.mxu0
        %v3384 = vadd.f32 0.0, %v3383
        %v3385 = vpop.f32.mrf.mxu0
        %3386 = vdwg.mxu0
        %3387 = vmatprep.subr.mxu0 0.0
        %3388 = vmatpush1.msra.mxu0 0.0
        %3389 = vmatprep.subr.mxu0 0.0
        %3390 = vmatpush1.msra.mxu0 0.0
        %3391 = vmatprep.subr.mxu0 0.0
        %3392 = vmatpush1.msra.mxu0 0.0
        %3393 = vmatprep.subr.mxu0 0.0
        %3394 = vmatpush1.msra.mxu0 0.0
        %3395 = vmatprep.subr.mxu0 0.0
        %3396 = vmatpush1.msra.mxu0 0.0
        %3397 = vmatprep.subr.mxu0 0.0
        %3398 = vmatpush1.msra.mxu0 0.0
        %3399 = vmatprep.subr.mxu0 0.0
        %3400 = vmatpush1.msra.mxu0 0.0
        %3401 = vmatprep.subr.mxu0 0.0
        %3402 = vmatpush1.msra.mxu0 0.0
        %3403 = vmatprep.subr.mxu0 0.0
        %3404 = vmatpush1.msra.mxu0 0.0
        %3405 = vmatprep.subr.mxu0 0.0
        %3406 = vmatpush1.msra.mxu0 0.0
        %3407 = vmatprep.subr.mxu0 0.0
        %3408 = vmatpush1.msra.mxu0 0.0
        %3409 = vmatprep.subr.mxu0 0.0
        %3410 = vmatpush1.msra.mxu0 0.0
        %3411 = vmatprep.subr.mxu0 0.0
        %3412 = vmatpush1.msra.mxu0 %v3242
        %3413 = vmatprep.subr.mxu0 0.0
        %3414 = vmatpush1.msra.mxu0 %v3241
        %3415 = vmatprep.subr.mxu0 0.0
        %3416 = vmatpush1.msra.mxu0 %v3240
        %3417 = vmatprep.subr.mxu0 0.0
        %3418 = vmatpush1.msra.mxu0 %v3239
        %3419 = vmatprep.subr.mxu0 0.0
        %3420 = vmatpush2.msra.mxu0 0.0
        %3421 = vmatprep.subr.mxu0 0.0
        %3422 = vmatpush2.msra.mxu0 0.0
        %3423 = vmatprep.subr.mxu0 0.0
        %3424 = vmatpush2.msra.mxu0 0.0
        %3425 = vmatprep.subr.mxu0 0.0
        %3426 = vmatpush2.msra.mxu0 0.0
        %3427 = vmatprep.subr.mxu0 0.0
        %3428 = vmatpush2.msra.mxu0 0.0
        %3429 = vmatprep.subr.mxu0 0.0
        %3430 = vmatpush2.msra.mxu0 0.0
        %3431 = vmatprep.subr.mxu0 0.0
        %3432 = vmatpush2.msra.mxu0 0.0
        %3433 = vmatprep.subr.mxu0 0.0
        %3434 = vmatpush2.msra.mxu0 0.0
        %3435 = vmatprep.subr.mxu0 0.0
        %3436 = vmatpush2.msra.mxu0 0.0
        %3437 = vmatprep.subr.mxu0 0.0
        %3438 = vmatpush2.msra.mxu0 0.0
        %3439 = vmatprep.subr.mxu0 0.0
        %3440 = vmatpush2.msra.mxu0 0.0
        %3441 = vmatprep.subr.mxu0 0.0
        %3442 = vmatpush2.msra.mxu0 0.0
        %3443 = vmatprep.subr.mxu0 0.0
        %3444 = vmatpush2.msra.mxu0 0.0
        %3445 = vmatprep.subr.mxu0 0.0
        %3446 = vmatpush2.msra.mxu0 0.0
        %3447 = vmatprep.subr.mxu0 0.0
        %3448 = vmatpush2.msra.mxu0 0.0
        %3449 = vmatprep.subr.mxu0 0.0
        %3450 = vmatpush2.msra.mxu0 0.0
        %3451 = vmatprep.mubr.f32.mxu0 0.0
        %3452 = vmatmul.mubr.f32.gmra.mxu0 %v2651
        %v3453 = vpop.f32.mrf.mxu0
        %v3454 = vadd.f32 0.0, %v3453
        %v3455 = vpop.f32.mrf.mxu0
        %3456 = vdwg.mxu0
        %3457 = vmatprep.subr.mxu0 0.0
        %3458 = vmatpush1.msra.mxu0 0.0
        %3459 = vmatprep.subr.mxu0 0.0
        %3460 = vmatpush1.msra.mxu0 0.0
        %3461 = vmatprep.subr.mxu0 0.0
        %3462 = vmatpush1.msra.mxu0 0.0
        %3463 = vmatprep.subr.mxu0 0.0
        %3464 = vmatpush1.msra.mxu0 0.0
        %3465 = vmatprep.subr.mxu0 0.0
        %3466 = vmatpush1.msra.mxu0 0.0
        %3467 = vmatprep.subr.mxu0 0.0
        %3468 = vmatpush1.msra.mxu0 0.0
        %3469 = vmatprep.subr.mxu0 0.0
        %3470 = vmatpush1.msra.mxu0 0.0
        %3471 = vmatprep.subr.mxu0 0.0
        %3472 = vmatpush1.msra.mxu0 0.0
        %3473 = vmatprep.subr.mxu0 0.0
        %3474 = vmatpush1.msra.mxu0 0.0
        %3475 = vmatprep.subr.mxu0 0.0
        %3476 = vmatpush1.msra.mxu0 0.0
        %3477 = vmatprep.subr.mxu0 0.0
        %3478 = vmatpush1.msra.mxu0 0.0
        %3479 = vmatprep.subr.mxu0 0.0
        %3480 = vmatpush1.msra.mxu0 0.0
        %3481 = vmatprep.subr.mxu0 0.0
        %3482 = vmatpush1.msra.mxu0 %v3246
        %3483 = vmatprep.subr.mxu0 0.0
        %3484 = vmatpush1.msra.mxu0 %v3245
        %3485 = vmatprep.subr.mxu0 0.0
        %3486 = vmatpush1.msra.mxu0 %v3244
        %3487 = vmatprep.subr.mxu0 0.0
        %3488 = vmatpush1.msra.mxu0 %v3243
        %3489 = vmatprep.subr.mxu0 0.0
        %3490 = vmatpush2.msra.mxu0 0.0
        %3491 = vmatprep.subr.mxu0 0.0
        %3492 = vmatpush2.msra.mxu0 0.0
        %3493 = vmatprep.subr.mxu0 0.0
        %3494 = vmatpush2.msra.mxu0 0.0
        %3495 = vmatprep.subr.mxu0 0.0
        %3496 = vmatpush2.msra.mxu0 0.0
        %3497 = vmatprep.subr.mxu0 0.0
        %3498 = vmatpush2.msra.mxu0 0.0
        %3499 = vmatprep.subr.mxu0 0.0
        %3500 = vmatpush2.msra.mxu0 0.0
        %3501 = vmatprep.subr.mxu0 0.0
        %3502 = vmatpush2.msra.mxu0 0.0
        %3503 = vmatprep.subr.mxu0 0.0
        %3504 = vmatpush2.msra.mxu0 0.0
        %3505 = vmatprep.subr.mxu0 0.0
        %3506 = vmatpush2.msra.mxu0 0.0
        %3507 = vmatprep.subr.mxu0 0.0
        %3508 = vmatpush2.msra.mxu0 0.0
        %3509 = vmatprep.subr.mxu0 0.0
        %3510 = vmatpush2.msra.mxu0 0.0
        %3511 = vmatprep.subr.mxu0 0.0
        %3512 = vmatpush2.msra.mxu0 0.0
        %3513 = vmatprep.subr.mxu0 0.0
        %3514 = vmatpush2.msra.mxu0 0.0
        %3515 = vmatprep.subr.mxu0 0.0
        %3516 = vmatpush2.msra.mxu0 0.0
        %3517 = vmatprep.subr.mxu0 0.0
        %3518 = vmatpush2.msra.mxu0 0.0
        %3519 = vmatprep.subr.mxu0 0.0
        %3520 = vmatpush2.msra.mxu0 0.0
        %3521 = vmatprep.mubr.f32.mxu0 0.0
        %3522 = vmatmul.mubr.f32.gmra.mxu0 %v2651
        %v3523 = vpop.f32.mrf.mxu0
        %v3524 = vadd.f32 0.0, %v3523
        %v3525 = vpop.f32.mrf.mxu0
        %3526 = vdwg.mxu0
        %v3528 = vsel %vm1415, %v2720, 0
        %v3531 = vsel %vm1415, %v3017, 0
        %3533 = vmatprep.subr.mxu0 0.0
        %3534 = vmatpush1.xpose.msra.mxu0 0.0
        %3535 = vmatprep.subr.mxu0 0.0
        %3536 = vmatpush1.xpose.msra.mxu0 0.0
        %3537 = vmatprep.subr.mxu0 0.0
        %3538 = vmatpush1.xpose.msra.mxu0 0.0
        %3539 = vmatprep.subr.mxu0 0.0
        %3540 = vmatpush1.xpose.msra.mxu0 0.0
        %3541 = vmatprep.subr.mxu0 0.0
        %3542 = vmatpush1.xpose.msra.mxu0 0.0
        %3543 = vmatprep.subr.mxu0 0.0
        %3544 = vmatpush1.xpose.msra.mxu0 0.0
        %3545 = vmatprep.subr.mxu0 0.0
        %3546 = vmatpush1.xpose.msra.mxu0 0.0
        %3547 = vmatprep.subr.mxu0 0.0
        %3548 = vmatpush1.xpose.msra.mxu0 0.0
        %3549 = vmatprep.subr.mxu0 0.0
        %3550 = vmatpush1.xpose.msra.mxu0 0.0
        %3551 = vmatprep.subr.mxu0 0.0
        %3552 = vmatpush1.xpose.msra.mxu0 0.0
        %3553 = vmatprep.subr.mxu0 0.0
        %3554 = vmatpush1.xpose.msra.mxu0 0.0
        %3555 = vmatprep.subr.mxu0 0.0
        %3556 = vmatpush1.xpose.msra.mxu0 0.0
        %3557 = vmatprep.subr.mxu0 0.0
        %3558 = vmatpush1.xpose.msra.mxu0 0.0
        %3559 = vmatprep.subr.mxu0 0.0
        %3560 = vmatpush1.xpose.msra.mxu0 0.0
        %3561 = vmatprep.subr.mxu0 0.0
        %3562 = vmatpush1.xpose.msra.mxu0 0.0
        %3563 = vmatprep.subr.mxu0 0.0
        %3564 = vmatpush1.xpose.msra.mxu0 %v3531
        %3565 = vmatprep.subr.mxu0 0.0
        %3566 = vmatpush2.xpose.msra.mxu0 0.0
        %3567 = vmatprep.subr.mxu0 0.0
        %3568 = vmatpush2.xpose.msra.mxu0 0.0
        %3569 = vmatprep.subr.mxu0 0.0
        %3570 = vmatpush2.xpose.msra.mxu0 0.0
        %3571 = vmatprep.subr.mxu0 0.0
        %3572 = vmatpush2.xpose.msra.mxu0 0.0
        %3573 = vmatprep.subr.mxu0 0.0
        %3574 = vmatpush2.xpose.msra.mxu0 0.0
        %3575 = vmatprep.subr.mxu0 0.0
        %3576 = vmatpush2.xpose.msra.mxu0 0.0
        %3577 = vmatprep.subr.mxu0 0.0
        %3578 = vmatpush2.xpose.msra.mxu0 0.0
        %3579 = vmatprep.subr.mxu0 0.0
        %3580 = vmatpush2.xpose.msra.mxu0 0.0
        %3581 = vmatprep.subr.mxu0 0.0
        %3582 = vmatpush2.xpose.msra.mxu0 0.0
        %3583 = vmatprep.subr.mxu0 0.0
        %3584 = vmatpush2.xpose.msra.mxu0 0.0
        %3585 = vmatprep.subr.mxu0 0.0
        %3586 = vmatpush2.xpose.msra.mxu0 0.0
        %3587 = vmatprep.subr.mxu0 0.0
        %3588 = vmatpush2.xpose.msra.mxu0 0.0
        %3589 = vmatprep.subr.mxu0 0.0
        %3590 = vmatpush2.xpose.msra.mxu0 0.0
        %3591 = vmatprep.subr.mxu0 0.0
        %3592 = vmatpush2.xpose.msra.mxu0 0.0
        %3593 = vmatprep.subr.mxu0 0.0
        %3594 = vmatpush2.xpose.msra.mxu0 0.0
        %3595 = vmatprep.subr.mxu0 0.0
        %3596 = vmatpush2.xpose.msra.mxu0 0.0
        %3597 = vmatprep.mubr.f32.mxu0 0.0
        %3598 = vmatmul.mubr.f32.gmra.mxu0 %v3528
        %v3599 = vpop.f32.mrf.mxu0
        %v3600 = vadd.f32 0.0, %v3599
        %v3601 = vpop.f32.mrf.mxu0
        %3602 = vdwg.mxu0
        %v3604 = vsel %vm1415, %v2790, 0
        %v3607 = vsel %vm1415, %v3087, 0
        %3609 = vmatprep.subr.mxu0 0.0
        %3610 = vmatpush1.xpose.msra.mxu0 0.0
        %3611 = vmatprep.subr.mxu0 0.0
        %3612 = vmatpush1.xpose.msra.mxu0 0.0
        %3613 = vmatprep.subr.mxu0 0.0
        %3614 = vmatpush1.xpose.msra.mxu0 0.0
        %3615 = vmatprep.subr.mxu0 0.0
        %3616 = vmatpush1.xpose.msra.mxu0 0.0
        %3617 = vmatprep.subr.mxu0 0.0
        %3618 = vmatpush1.xpose.msra.mxu0 0.0
        %3619 = vmatprep.subr.mxu0 0.0
        %3620 = vmatpush1.xpose.msra.mxu0 0.0
        %3621 = vmatprep.subr.mxu0 0.0
        %3622 = vmatpush1.xpose.msra.mxu0 0.0
        %3623 = vmatprep.subr.mxu0 0.0
        %3624 = vmatpush1.xpose.msra.mxu0 0.0
        %3625 = vmatprep.subr.mxu0 0.0
        %3626 = vmatpush1.xpose.msra.mxu0 0.0
        %3627 = vmatprep.subr.mxu0 0.0
        %3628 = vmatpush1.xpose.msra.mxu0 0.0
        %3629 = vmatprep.subr.mxu0 0.0
        %3630 = vmatpush1.xpose.msra.mxu0 0.0
        %3631 = vmatprep.subr.mxu0 0.0
        %3632 = vmatpush1.xpose.msra.mxu0 0.0
        %3633 = vmatprep.subr.mxu0 0.0
        %3634 = vmatpush1.xpose.msra.mxu0 0.0
        %3635 = vmatprep.subr.mxu0 0.0
        %3636 = vmatpush1.xpose.msra.mxu0 0.0
        %3637 = vmatprep.subr.mxu0 0.0
        %3638 = vmatpush1.xpose.msra.mxu0 0.0
        %3639 = vmatprep.subr.mxu0 0.0
        %3640 = vmatpush1.xpose.msra.mxu0 %v3607
        %3641 = vmatprep.subr.mxu0 0.0
        %3642 = vmatpush2.xpose.msra.mxu0 0.0
        %3643 = vmatprep.subr.mxu0 0.0
        %3644 = vmatpush2.xpose.msra.mxu0 0.0
        %3645 = vmatprep.subr.mxu0 0.0
        %3646 = vmatpush2.xpose.msra.mxu0 0.0
        %3647 = vmatprep.subr.mxu0 0.0
        %3648 = vmatpush2.xpose.msra.mxu0 0.0
        %3649 = vmatprep.subr.mxu0 0.0
        %3650 = vmatpush2.xpose.msra.mxu0 0.0
        %3651 = vmatprep.subr.mxu0 0.0
        %3652 = vmatpush2.xpose.msra.mxu0 0.0
        %3653 = vmatprep.subr.mxu0 0.0
        %3654 = vmatpush2.xpose.msra.mxu0 0.0
        %3655 = vmatprep.subr.mxu0 0.0
        %3656 = vmatpush2.xpose.msra.mxu0 0.0
        %3657 = vmatprep.subr.mxu0 0.0
        %3658 = vmatpush2.xpose.msra.mxu0 0.0
        %3659 = vmatprep.subr.mxu0 0.0
        %3660 = vmatpush2.xpose.msra.mxu0 0.0
        %3661 = vmatprep.subr.mxu0 0.0
        %3662 = vmatpush2.xpose.msra.mxu0 0.0
        %3663 = vmatprep.subr.mxu0 0.0
        %3664 = vmatpush2.xpose.msra.mxu0 0.0
        %3665 = vmatprep.subr.mxu0 0.0
        %3666 = vmatpush2.xpose.msra.mxu0 0.0
        %3667 = vmatprep.subr.mxu0 0.0
        %3668 = vmatpush2.xpose.msra.mxu0 0.0
        %3669 = vmatprep.subr.mxu0 0.0
        %3670 = vmatpush2.xpose.msra.mxu0 0.0
        %3671 = vmatprep.subr.mxu0 0.0
        %3672 = vmatpush2.xpose.msra.mxu0 0.0
        %3673 = vmatprep.mubr.f32.mxu0 0.0
        %3674 = vmatmul.mubr.f32.gmra.mxu0 %v3604
        %v3675 = vpop.f32.mrf.mxu0
        %v3676 = vadd.f32 0.0, %v3675
        %v3677 = vpop.f32.mrf.mxu0
        %3678 = vdwg.mxu0
        %v3680 = vsel %vm1415, %v2860, 0
        %v3683 = vsel %vm1415, %v3157, 0
        %3685 = vmatprep.subr.mxu0 0.0
        %3686 = vmatpush1.xpose.msra.mxu0 0.0
        %3687 = vmatprep.subr.mxu0 0.0
        %3688 = vmatpush1.xpose.msra.mxu0 0.0
        %3689 = vmatprep.subr.mxu0 0.0
        %3690 = vmatpush1.xpose.msra.mxu0 0.0
        %3691 = vmatprep.subr.mxu0 0.0
        %3692 = vmatpush1.xpose.msra.mxu0 0.0
        %3693 = vmatprep.subr.mxu0 0.0
        %3694 = vmatpush1.xpose.msra.mxu0 0.0
        %3695 = vmatprep.subr.mxu0 0.0
        %3696 = vmatpush1.xpose.msra.mxu0 0.0
        %3697 = vmatprep.subr.mxu0 0.0
        %3698 = vmatpush1.xpose.msra.mxu0 0.0
        %3699 = vmatprep.subr.mxu0 0.0
        %3700 = vmatpush1.xpose.msra.mxu0 0.0
        %3701 = vmatprep.subr.mxu0 0.0
        %3702 = vmatpush1.xpose.msra.mxu0 0.0
        %3703 = vmatprep.subr.mxu0 0.0
        %3704 = vmatpush1.xpose.msra.mxu0 0.0
        %3705 = vmatprep.subr.mxu0 0.0
        %3706 = vmatpush1.xpose.msra.mxu0 0.0
        %3707 = vmatprep.subr.mxu0 0.0
        %3708 = vmatpush1.xpose.msra.mxu0 0.0
        %3709 = vmatprep.subr.mxu0 0.0
        %3710 = vmatpush1.xpose.msra.mxu0 0.0
        %3711 = vmatprep.subr.mxu0 0.0
        %3712 = vmatpush1.xpose.msra.mxu0 0.0
        %3713 = vmatprep.subr.mxu0 0.0
        %3714 = vmatpush1.xpose.msra.mxu0 0.0
        %3715 = vmatprep.subr.mxu0 0.0
        %3716 = vmatpush1.xpose.msra.mxu0 %v3683
        %3717 = vmatprep.subr.mxu0 0.0
        %3718 = vmatpush2.xpose.msra.mxu0 0.0
        %3719 = vmatprep.subr.mxu0 0.0
        %3720 = vmatpush2.xpose.msra.mxu0 0.0
        %3721 = vmatprep.subr.mxu0 0.0
        %3722 = vmatpush2.xpose.msra.mxu0 0.0
        %3723 = vmatprep.subr.mxu0 0.0
        %3724 = vmatpush2.xpose.msra.mxu0 0.0
        %3725 = vmatprep.subr.mxu0 0.0
        %3726 = vmatpush2.xpose.msra.mxu0 0.0
        %3727 = vmatprep.subr.mxu0 0.0
        %3728 = vmatpush2.xpose.msra.mxu0 0.0
        %3729 = vmatprep.subr.mxu0 0.0
        %3730 = vmatpush2.xpose.msra.mxu0 0.0
        %3731 = vmatprep.subr.mxu0 0.0
        %3732 = vmatpush2.xpose.msra.mxu0 0.0
        %3733 = vmatprep.subr.mxu0 0.0
        %3734 = vmatpush2.xpose.msra.mxu0 0.0
        %3735 = vmatprep.subr.mxu0 0.0
        %3736 = vmatpush2.xpose.msra.mxu0 0.0
        %3737 = vmatprep.subr.mxu0 0.0
        %3738 = vmatpush2.xpose.msra.mxu0 0.0
        %3739 = vmatprep.subr.mxu0 0.0
        %3740 = vmatpush2.xpose.msra.mxu0 0.0
        %3741 = vmatprep.subr.mxu0 0.0
        %3742 = vmatpush2.xpose.msra.mxu0 0.0
        %3743 = vmatprep.subr.mxu0 0.0
        %3744 = vmatpush2.xpose.msra.mxu0 0.0
        %3745 = vmatprep.subr.mxu0 0.0
        %3746 = vmatpush2.xpose.msra.mxu0 0.0
        %3747 = vmatprep.subr.mxu0 0.0
        %3748 = vmatpush2.xpose.msra.mxu0 0.0
        %3749 = vmatprep.mubr.f32.mxu0 0.0
        %3750 = vmatmul.mubr.f32.gmra.mxu0 %v3680
        %v3751 = vpop.f32.mrf.mxu0
        %v3752 = vadd.f32 0.0, %v3751
        %v3753 = vpop.f32.mrf.mxu0
        %3754 = vdwg.mxu0
        %v3756 = vsel %vm1415, %v2930, 0
        %v3759 = vsel %vm1415, %v3227, 0
        %3761 = vmatprep.subr.mxu0 0.0
        %3762 = vmatpush1.xpose.msra.mxu0 0.0
        %3763 = vmatprep.subr.mxu0 0.0
        %3764 = vmatpush1.xpose.msra.mxu0 0.0
        %3765 = vmatprep.subr.mxu0 0.0
        %3766 = vmatpush1.xpose.msra.mxu0 0.0
        %3767 = vmatprep.subr.mxu0 0.0
        %3768 = vmatpush1.xpose.msra.mxu0 0.0
        %3769 = vmatprep.subr.mxu0 0.0
        %3770 = vmatpush1.xpose.msra.mxu0 0.0
        %3771 = vmatprep.subr.mxu0 0.0
        %3772 = vmatpush1.xpose.msra.mxu0 0.0
        %3773 = vmatprep.subr.mxu0 0.0
        %3774 = vmatpush1.xpose.msra.mxu0 0.0
        %3775 = vmatprep.subr.mxu0 0.0
        %3776 = vmatpush1.xpose.msra.mxu0 0.0
        %3777 = vmatprep.subr.mxu0 0.0
        %3778 = vmatpush1.xpose.msra.mxu0 0.0
        %3779 = vmatprep.subr.mxu0 0.0
        %3780 = vmatpush1.xpose.msra.mxu0 0.0
        %3781 = vmatprep.subr.mxu0 0.0
        %3782 = vmatpush1.xpose.msra.mxu0 0.0
        %3783 = vmatprep.subr.mxu0 0.0
        %3784 = vmatpush1.xpose.msra.mxu0 0.0
        %3785 = vmatprep.subr.mxu0 0.0
        %3786 = vmatpush1.xpose.msra.mxu0 0.0
        %3787 = vmatprep.subr.mxu0 0.0
        %3788 = vmatpush1.xpose.msra.mxu0 0.0
        %3789 = vmatprep.subr.mxu0 0.0
        %3790 = vmatpush1.xpose.msra.mxu0 0.0
        %3791 = vmatprep.subr.mxu0 0.0
        %3792 = vmatpush1.xpose.msra.mxu0 %v3759
        %3793 = vmatprep.subr.mxu0 0.0
        %3794 = vmatpush2.xpose.msra.mxu0 0.0
        %3795 = vmatprep.subr.mxu0 0.0
        %3796 = vmatpush2.xpose.msra.mxu0 0.0
        %3797 = vmatprep.subr.mxu0 0.0
        %3798 = vmatpush2.xpose.msra.mxu0 0.0
        %3799 = vmatprep.subr.mxu0 0.0
        %3800 = vmatpush2.xpose.msra.mxu0 0.0
        %3801 = vmatprep.subr.mxu0 0.0
        %3802 = vmatpush2.xpose.msra.mxu0 0.0
        %3803 = vmatprep.subr.mxu0 0.0
        %3804 = vmatpush2.xpose.msra.mxu0 0.0
        %3805 = vmatprep.subr.mxu0 0.0
        %3806 = vmatpush2.xpose.msra.mxu0 0.0
        %3807 = vmatprep.subr.mxu0 0.0
        %3808 = vmatpush2.xpose.msra.mxu0 0.0
        %3809 = vmatprep.subr.mxu0 0.0
        %3810 = vmatpush2.xpose.msra.mxu0 0.0
        %3811 = vmatprep.subr.mxu0 0.0
        %3812 = vmatpush2.xpose.msra.mxu0 0.0
        %3813 = vmatprep.subr.mxu0 0.0
        %3814 = vmatpush2.xpose.msra.mxu0 0.0
        %3815 = vmatprep.subr.mxu0 0.0
        %3816 = vmatpush2.xpose.msra.mxu0 0.0
        %3817 = vmatprep.subr.mxu0 0.0
        %3818 = vmatpush2.xpose.msra.mxu0 0.0
        %3819 = vmatprep.subr.mxu0 0.0
        %3820 = vmatpush2.xpose.msra.mxu0 0.0
        %3821 = vmatprep.subr.mxu0 0.0
        %3822 = vmatpush2.xpose.msra.mxu0 0.0
        %3823 = vmatprep.subr.mxu0 0.0
        %3824 = vmatpush2.xpose.msra.mxu0 0.0
        %3825 = vmatprep.mubr.f32.mxu0 0.0
        %3826 = vmatmul.mubr.f32.gmra.mxu0 %v3756
        %v3827 = vpop.f32.mrf.mxu0
        %v3828 = vadd.f32 0.0, %v3827
        %v3829 = vpop.f32.mrf.mxu0
        %3830 = vdwg.mxu0
        %v3831 = vmul.f32 %v3600, 0.35355338
        %v3832 = vmul.f32 %v3676, 0.35355338
        %v3833 = vmul.f32 %v3752, 0.35355338
        %v3834 = vmul.f32 %v3828, 0.35355338
        %v3835 = vsel %vm1415, %v3831, -inf
        %3836 = vmax.xlane.f32.xlu0 %v3835
        %v3837 = vpop.xlane.xlu0 %3836
        %v3838 = vsel %vm1415, %v3832, -inf
        %3839 = vmax.xlane.f32.xlu0 %v3838
        %v3840 = vpop.xlane.xlu0 %3839
        %v3841 = vsel %vm1415, %v3833, -inf
        %3842 = vmax.xlane.f32.xlu0 %v3841
        %v3843 = vpop.xlane.xlu0 %3842
        %v3844 = vsel %vm1415, %v3834, -inf
        %3845 = vmax.xlane.f32.xlu0 %v3844
        %v3846 = vpop.xlane.xlu0 %3845
        %v3847 = vsub.f32 %v3831, %v3837
        %v3848 = vsub.f32 %v3832, %v3840
        %v3849 = vsub.f32 %v3833, %v3843
        %v3850 = vsub.f32 %v3834, %v3846
        %v3851 = vmul.f32 %v3847, 1.442695
        %v3852 = vpow.pop %v3851
        %v3853 = vmul.f32 %v3848, 1.442695
        %v3854 = vpow.pop %v3853
        %v3855 = vmul.f32 %v3849, 1.442695
        %v3856 = vpow.pop %v3855
        %v3857 = vmul.f32 %v3850, 1.442695
        %v3858 = vpow.pop %v3857
        %v3859 = vsel %vm1415, %v3852, 0.0
        %3860 = vadd.xlane.f32.xlu0 %v3859
        %v3861 = vpop.xlane.xlu0 %3860
        %v3862 = vsel %vm1415, %v3854, 0.0
        %3863 = vadd.xlane.f32.xlu0 %v3862
        %v3864 = vpop.xlane.xlu0 %3863
        %v3865 = vsel %vm1415, %v3856, 0.0
        %3866 = vadd.xlane.f32.xlu0 %v3865
        %v3867 = vpop.xlane.xlu0 %3866
        %v3868 = vsel %vm1415, %v3858, 0.0
        %3869 = vadd.xlane.f32.xlu0 %v3868
        %v3870 = vpop.xlane.xlu0 %3869
        %v3871 = vrcp.pop %v3861
        %v3872 = vmul.f32 %v3852, %v3871
        %v3873 = vrcp.pop %v3864
        %v3874 = vmul.f32 %v3854, %v3873
        %v3875 = vrcp.pop %v3867
        %v3876 = vmul.f32 %v3856, %v3875
        %v3877 = vrcp.pop %v3870
        %v3878 = vmul.f32 %v3858, %v3877
        %v3880 = vsel %vm1415, %v3872, 0
        %3882 = vmatprep.subr.mxu0 0.0
        %3883 = vmatpush1.msra.mxu0 0.0
        %3884 = vmatprep.subr.mxu0 0.0
        %3885 = vmatpush1.msra.mxu0 0.0
        %3886 = vmatprep.subr.mxu0 0.0
        %3887 = vmatpush1.msra.mxu0 0.0
        %3888 = vmatprep.subr.mxu0 0.0
        %3889 = vmatpush1.msra.mxu0 0.0
        %3890 = vmatprep.subr.mxu0 0.0
        %3891 = vmatpush1.msra.mxu0 0.0
        %3892 = vmatprep.subr.mxu0 0.0
        %3893 = vmatpush1.msra.mxu0 0.0
        %3894 = vmatprep.subr.mxu0 0.0
        %3895 = vmatpush1.msra.mxu0 0.0
        %3896 = vmatprep.subr.mxu0 0.0
        %3897 = vmatpush1.msra.mxu0 0.0
        %3898 = vmatprep.subr.mxu0 0.0
        %3899 = vmatpush1.msra.mxu0 0.0
        %3900 = vmatprep.subr.mxu0 0.0
        %3901 = vmatpush1.msra.mxu0 0.0
        %3902 = vmatprep.subr.mxu0 0.0
        %3903 = vmatpush1.msra.mxu0 0.0
        %3904 = vmatprep.subr.mxu0 0.0
        %3905 = vmatpush1.msra.mxu0 0.0
        %3906 = vmatprep.subr.mxu0 0.0
        %3907 = vmatpush1.msra.mxu0 0.0
        %3908 = vmatprep.subr.mxu0 0.0
        %3909 = vmatpush1.msra.mxu0 0.0
        %3910 = vmatprep.subr.mxu0 0.0
        %3911 = vmatpush1.msra.mxu0 0.0
        %3912 = vmatprep.subr.mxu0 0.0
        %3913 = vmatpush1.msra.mxu0 %v3314
        %3914 = vmatprep.subr.mxu0 0.0
        %3915 = vmatpush2.msra.mxu0 0.0
        %3916 = vmatprep.subr.mxu0 0.0
        %3917 = vmatpush2.msra.mxu0 0.0
        %3918 = vmatprep.subr.mxu0 0.0
        %3919 = vmatpush2.msra.mxu0 0.0
        %3920 = vmatprep.subr.mxu0 0.0
        %3921 = vmatpush2.msra.mxu0 0.0
        %3922 = vmatprep.subr.mxu0 0.0
        %3923 = vmatpush2.msra.mxu0 0.0
        %3924 = vmatprep.subr.mxu0 0.0
        %3925 = vmatpush2.msra.mxu0 0.0
        %3926 = vmatprep.subr.mxu0 0.0
        %3927 = vmatpush2.msra.mxu0 0.0
        %3928 = vmatprep.subr.mxu0 0.0
        %3929 = vmatpush2.msra.mxu0 0.0
        %3930 = vmatprep.subr.mxu0 0.0
        %3931 = vmatpush2.msra.mxu0 0.0
        %3932 = vmatprep.subr.mxu0 0.0
        %3933 = vmatpush2.msra.mxu0 0.0
        %3934 = vmatprep.subr.mxu0 0.0
        %3935 = vmatpush2.msra.mxu0 0.0
        %3936 = vmatprep.subr.mxu0 0.0
        %3937 = vmatpush2.msra.mxu0 0.0
        %3938 = vmatprep.subr.mxu0 0.0
        %3939 = vmatpush2.msra.mxu0 0.0
        %3940 = vmatprep.subr.mxu0 0.0
        %3941 = vmatpush2.msra.mxu0 0.0
        %3942 = vmatprep.subr.mxu0 0.0
        %3943 = vmatpush2.msra.mxu0 0.0
        %3944 = vmatprep.subr.mxu0 0.0
        %3945 = vmatpush2.msra.mxu0 0.0
        %3946 = vmatprep.mubr.f32.mxu0 0.0
        %3947 = vmatmul.mubr.f32.gmra.mxu0 %v3880
        %v3948 = vpop.f32.mrf.mxu0
        %v3949 = vadd.f32 0.0, %v3948
        %v3950 = vpop.f32.mrf.mxu0
        %3951 = vdwg.mxu0
        %v3953 = vsel %vm1415, %v3874, 0
        %3955 = vmatprep.subr.mxu0 0.0
        %3956 = vmatpush1.msra.mxu0 0.0
        %3957 = vmatprep.subr.mxu0 0.0
        %3958 = vmatpush1.msra.mxu0 0.0
        %3959 = vmatprep.subr.mxu0 0.0
        %3960 = vmatpush1.msra.mxu0 0.0
        %3961 = vmatprep.subr.mxu0 0.0
        %3962 = vmatpush1.msra.mxu0 0.0
        %3963 = vmatprep.subr.mxu0 0.0
        %3964 = vmatpush1.msra.mxu0 0.0
        %3965 = vmatprep.subr.mxu0 0.0
        %3966 = vmatpush1.msra.mxu0 0.0
        %3967 = vmatprep.subr.mxu0 0.0
        %3968 = vmatpush1.msra.mxu0 0.0
        %3969 = vmatprep.subr.mxu0 0.0
        %3970 = vmatpush1.msra.mxu0 0.0
        %3971 = vmatprep.subr.mxu0 0.0
        %3972 = vmatpush1.msra.mxu0 0.0
        %3973 = vmatprep.subr.mxu0 0.0
        %3974 = vmatpush1.msra.mxu0 0.0
        %3975 = vmatprep.subr.mxu0 0.0
        %3976 = vmatpush1.msra.mxu0 0.0
        %3977 = vmatprep.subr.mxu0 0.0
        %3978 = vmatpush1.msra.mxu0 0.0
        %3979 = vmatprep.subr.mxu0 0.0
        %3980 = vmatpush1.msra.mxu0 0.0
        %3981 = vmatprep.subr.mxu0 0.0
        %3982 = vmatpush1.msra.mxu0 0.0
        %3983 = vmatprep.subr.mxu0 0.0
        %3984 = vmatpush1.msra.mxu0 0.0
        %3985 = vmatprep.subr.mxu0 0.0
        %3986 = vmatpush1.msra.mxu0 %v3384
        %3987 = vmatprep.subr.mxu0 0.0
        %3988 = vmatpush2.msra.mxu0 0.0
        %3989 = vmatprep.subr.mxu0 0.0
        %3990 = vmatpush2.msra.mxu0 0.0
        %3991 = vmatprep.subr.mxu0 0.0
        %3992 = vmatpush2.msra.mxu0 0.0
        %3993 = vmatprep.subr.mxu0 0.0
        %3994 = vmatpush2.msra.mxu0 0.0
        %3995 = vmatprep.subr.mxu0 0.0
        %3996 = vmatpush2.msra.mxu0 0.0
        %3997 = vmatprep.subr.mxu0 0.0
        %3998 = vmatpush2.msra.mxu0 0.0
        %3999 = vmatprep.subr.mxu0 0.0
        %4000 = vmatpush2.msra.mxu0 0.0
        %4001 = vmatprep.subr.mxu0 0.0
        %4002 = vmatpush2.msra.mxu0 0.0
        %4003 = vmatprep.subr.mxu0 0.0
        %4004 = vmatpush2.msra.mxu0 0.0
        %4005 = vmatprep.subr.mxu0 0.0
        %4006 = vmatpush2.msra.mxu0 0.0
        %4007 = vmatprep.subr.mxu0 0.0
        %4008 = vmatpush2.msra.mxu0 0.0
        %4009 = vmatprep.subr.mxu0 0.0
        %4010 = vmatpush2.msra.mxu0 0.0
        %4011 = vmatprep.subr.mxu0 0.0
        %4012 = vmatpush2.msra.mxu0 0.0
        %4013 = vmatprep.subr.mxu0 0.0
        %4014 = vmatpush2.msra.mxu0 0.0
        %4015 = vmatprep.subr.mxu0 0.0
        %4016 = vmatpush2.msra.mxu0 0.0
        %4017 = vmatprep.subr.mxu0 0.0
        %4018 = vmatpush2.msra.mxu0 0.0
        %4019 = vmatprep.mubr.f32.mxu0 0.0
        %4020 = vmatmul.mubr.f32.gmra.mxu0 %v3953
        %v4021 = vpop.f32.mrf.mxu0
        %v4022 = vadd.f32 0.0, %v4021
        %v4023 = vpop.f32.mrf.mxu0
        %4024 = vdwg.mxu0
        %v4026 = vsel %vm1415, %v3876, 0
        %4028 = vmatprep.subr.mxu0 0.0
        %4029 = vmatpush1.msra.mxu0 0.0
        %4030 = vmatprep.subr.mxu0 0.0
        %4031 = vmatpush1.msra.mxu0 0.0
        %4032 = vmatprep.subr.mxu0 0.0
        %4033 = vmatpush1.msra.mxu0 0.0
        %4034 = vmatprep.subr.mxu0 0.0
        %4035 = vmatpush1.msra.mxu0 0.0
        %4036 = vmatprep.subr.mxu0 0.0
        %4037 = vmatpush1.msra.mxu0 0.0
        %4038 = vmatprep.subr.mxu0 0.0
        %4039 = vmatpush1.msra.mxu0 0.0
        %4040 = vmatprep.subr.mxu0 0.0
        %4041 = vmatpush1.msra.mxu0 0.0
        %4042 = vmatprep.subr.mxu0 0.0
        %4043 = vmatpush1.msra.mxu0 0.0
        %4044 = vmatprep.subr.mxu0 0.0
        %4045 = vmatpush1.msra.mxu0 0.0
        %4046 = vmatprep.subr.mxu0 0.0
        %4047 = vmatpush1.msra.mxu0 0.0
        %4048 = vmatprep.subr.mxu0 0.0
        %4049 = vmatpush1.msra.mxu0 0.0
        %4050 = vmatprep.subr.mxu0 0.0
        %4051 = vmatpush1.msra.mxu0 0.0
        %4052 = vmatprep.subr.mxu0 0.0
        %4053 = vmatpush1.msra.mxu0 0.0
        %4054 = vmatprep.subr.mxu0 0.0
        %4055 = vmatpush1.msra.mxu0 0.0
        %4056 = vmatprep.subr.mxu0 0.0
        %4057 = vmatpush1.msra.mxu0 0.0
        %4058 = vmatprep.subr.mxu0 0.0
        %4059 = vmatpush1.msra.mxu0 %v3454
        %4060 = vmatprep.subr.mxu0 0.0
        %4061 = vmatpush2.msra.mxu0 0.0
        %4062 = vmatprep.subr.mxu0 0.0
        %4063 = vmatpush2.msra.mxu0 0.0
        %4064 = vmatprep.subr.mxu0 0.0
        %4065 = vmatpush2.msra.mxu0 0.0
        %4066 = vmatprep.subr.mxu0 0.0
        %4067 = vmatpush2.msra.mxu0 0.0
        %4068 = vmatprep.subr.mxu0 0.0
        %4069 = vmatpush2.msra.mxu0 0.0
        %4070 = vmatprep.subr.mxu0 0.0
        %4071 = vmatpush2.msra.mxu0 0.0
        %4072 = vmatprep.subr.mxu0 0.0
        %4073 = vmatpush2.msra.mxu0 0.0
        %4074 = vmatprep.subr.mxu0 0.0
        %4075 = vmatpush2.msra.mxu0 0.0
        %4076 = vmatprep.subr.mxu0 0.0
        %4077 = vmatpush2.msra.mxu0 0.0
        %4078 = vmatprep.subr.mxu0 0.0
        %4079 = vmatpush2.msra.mxu0 0.0
        %4080 = vmatprep.subr.mxu0 0.0
        %4081 = vmatpush2.msra.mxu0 0.0
        %4082 = vmatprep.subr.mxu0 0.0
        %4083 = vmatpush2.msra.mxu0 0.0
        %4084 = vmatprep.subr.mxu0 0.0
        %4085 = vmatpush2.msra.mxu0 0.0
        %4086 = vmatprep.subr.mxu0 0.0
        %4087 = vmatpush2.msra.mxu0 0.0
        %4088 = vmatprep.subr.mxu0 0.0
        %4089 = vmatpush2.msra.mxu0 0.0
        %4090 = vmatprep.subr.mxu0 0.0
        %4091 = vmatpush2.msra.mxu0 0.0
        %4092 = vmatprep.mubr.f32.mxu0 0.0
        %4093 = vmatmul.mubr.f32.gmra.mxu0 %v4026
        %v4094 = vpop.f32.mrf.mxu0
        %v4095 = vadd.f32 0.0, %v4094
        %v4096 = vpop.f32.mrf.mxu0
        %4097 = vdwg.mxu0
        %v4099 = vsel %vm1415, %v3878, 0
        %4101 = vmatprep.subr.mxu0 0.0
        %4102 = vmatpush1.msra.mxu0 0.0
        %4103 = vmatprep.subr.mxu0 0.0
        %4104 = vmatpush1.msra.mxu0 0.0
        %4105 = vmatprep.subr.mxu0 0.0
        %4106 = vmatpush1.msra.mxu0 0.0
        %4107 = vmatprep.subr.mxu0 0.0
        %4108 = vmatpush1.msra.mxu0 0.0
        %4109 = vmatprep.subr.mxu0 0.0
        %4110 = vmatpush1.msra.mxu0 0.0
        %4111 = vmatprep.subr.mxu0 0.0
        %4112 = vmatpush1.msra.mxu0 0.0
        %4113 = vmatprep.subr.mxu0 0.0
        %4114 = vmatpush1.msra.mxu0 0.0
        %4115 = vmatprep.subr.mxu0 0.0
        %4116 = vmatpush1.msra.mxu0 0.0
        %4117 = vmatprep.subr.mxu0 0.0
        %4118 = vmatpush1.msra.mxu0 0.0
        %4119 = vmatprep.subr.mxu0 0.0
        %4120 = vmatpush1.msra.mxu0 0.0
        %4121 = vmatprep.subr.mxu0 0.0
        %4122 = vmatpush1.msra.mxu0 0.0
        %4123 = vmatprep.subr.mxu0 0.0
        %4124 = vmatpush1.msra.mxu0 0.0
        %4125 = vmatprep.subr.mxu0 0.0
        %4126 = vmatpush1.msra.mxu0 0.0
        %4127 = vmatprep.subr.mxu0 0.0
        %4128 = vmatpush1.msra.mxu0 0.0
        %4129 = vmatprep.subr.mxu0 0.0
        %4130 = vmatpush1.msra.mxu0 0.0
        %4131 = vmatprep.subr.mxu0 0.0
        %4132 = vmatpush1.msra.mxu0 %v3524
        %4133 = vmatprep.subr.mxu0 0.0
        %4134 = vmatpush2.msra.mxu0 0.0
        %4135 = vmatprep.subr.mxu0 0.0
        %4136 = vmatpush2.msra.mxu0 0.0
        %4137 = vmatprep.subr.mxu0 0.0
        %4138 = vmatpush2.msra.mxu0 0.0
        %4139 = vmatprep.subr.mxu0 0.0
        %4140 = vmatpush2.msra.mxu0 0.0
        %4141 = vmatprep.subr.mxu0 0.0
        %4142 = vmatpush2.msra.mxu0 0.0
        %4143 = vmatprep.subr.mxu0 0.0
        %4144 = vmatpush2.msra.mxu0 0.0
        %4145 = vmatprep.subr.mxu0 0.0
        %4146 = vmatpush2.msra.mxu0 0.0
        %4147 = vmatprep.subr.mxu0 0.0
        %4148 = vmatpush2.msra.mxu0 0.0
        %4149 = vmatprep.subr.mxu0 0.0
        %4150 = vmatpush2.msra.mxu0 0.0
        %4151 = vmatprep.subr.mxu0 0.0
        %4152 = vmatpush2.msra.mxu0 0.0
        %4153 = vmatprep.subr.mxu0 0.0
        %4154 = vmatpush2.msra.mxu0 0.0
        %4155 = vmatprep.subr.mxu0 0.0
        %4156 = vmatpush2.msra.mxu0 0.0
        %4157 = vmatprep.subr.mxu0 0.0
        %4158 = vmatpush2.msra.mxu0 0.0
        %4159 = vmatprep.subr.mxu0 0.0
        %4160 = vmatpush2.msra.mxu0 0.0
        %4161 = vmatprep.subr.mxu0 0.0
        %4162 = vmatpush2.msra.mxu0 0.0
        %4163 = vmatprep.subr.mxu0 0.0
        %4164 = vmatpush2.msra.mxu0 0.0
        %4165 = vmatprep.mubr.f32.mxu0 0.0
        %4166 = vmatmul.mubr.f32.gmra.mxu0 %v4099
        %v4167 = vpop.f32.mrf.mxu0
        %v4168 = vadd.f32 0.0, %v4167
        %v4169 = vpop.f32.mrf.mxu0
        %4170 = vdwg.mxu0
        %s4171 = scalar_lea.vmem %s6, 32
        %v4172 = vld [vmem:[%s4171] sm:$0xff]
        %v4173 = vld [vmem:[%s4171 + $0x8] sm:$0xff]
        %v4174 = vld [vmem:[%s4171 + $0x10] sm:$0xff]
        %v4175 = vld [vmem:[%s4171 + $0x18] sm:$0xff]
        %v4177 = vsel %vm1415, %v3949, 0
        %4179 = vmatprep.subr.mxu0 0.0
        %4180 = vmatpush1.msra.mxu0 0.0
        %4181 = vmatprep.subr.mxu0 0.0
        %4182 = vmatpush1.msra.mxu0 0.0
        %4183 = vmatprep.subr.mxu0 0.0
        %4184 = vmatpush1.msra.mxu0 0.0
        %4185 = vmatprep.subr.mxu0 0.0
        %4186 = vmatpush1.msra.mxu0 0.0
        %4187 = vmatprep.subr.mxu0 0.0
        %4188 = vmatpush1.msra.mxu0 0.0
        %4189 = vmatprep.subr.mxu0 0.0
        %4190 = vmatpush1.msra.mxu0 0.0
        %4191 = vmatprep.subr.mxu0 0.0
        %4192 = vmatpush1.msra.mxu0 0.0
        %4193 = vmatprep.subr.mxu0 0.0
        %4194 = vmatpush1.msra.mxu0 0.0
        %4195 = vmatprep.subr.mxu0 0.0
        %4196 = vmatpush1.msra.mxu0 0.0
        %4197 = vmatprep.subr.mxu0 0.0
        %4198 = vmatpush1.msra.mxu0 0.0
        %4199 = vmatprep.subr.mxu0 0.0
        %4200 = vmatpush1.msra.mxu0 0.0
        %4201 = vmatprep.subr.mxu0 0.0
        %4202 = vmatpush1.msra.mxu0 0.0
        %4203 = vmatprep.subr.mxu0 0.0
        %4204 = vmatpush1.msra.mxu0 0.0
        %4205 = vmatprep.subr.mxu0 0.0
        %4206 = vmatpush1.msra.mxu0 0.0
        %4207 = vmatprep.subr.mxu0 0.0
        %4208 = vmatpush1.msra.mxu0 0.0
        %4209 = vmatprep.subr.mxu0 0.0
        %4210 = vmatpush1.msra.mxu0 %v4172
        %4211 = vmatprep.subr.mxu0 0.0
        %4212 = vmatpush2.msra.mxu0 0.0
        %4213 = vmatprep.subr.mxu0 0.0
        %4214 = vmatpush2.msra.mxu0 0.0
        %4215 = vmatprep.subr.mxu0 0.0
        %4216 = vmatpush2.msra.mxu0 0.0
        %4217 = vmatprep.subr.mxu0 0.0
        %4218 = vmatpush2.msra.mxu0 0.0
        %4219 = vmatprep.subr.mxu0 0.0
        %4220 = vmatpush2.msra.mxu0 0.0
        %4221 = vmatprep.subr.mxu0 0.0
        %4222 = vmatpush2.msra.mxu0 0.0
        %4223 = vmatprep.subr.mxu0 0.0
        %4224 = vmatpush2.msra.mxu0 0.0
        %4225 = vmatprep.subr.mxu0 0.0
        %4226 = vmatpush2.msra.mxu0 0.0
        %4227 = vmatprep.subr.mxu0 0.0
        %4228 = vmatpush2.msra.mxu0 0.0
        %4229 = vmatprep.subr.mxu0 0.0
        %4230 = vmatpush2.msra.mxu0 0.0
        %4231 = vmatprep.subr.mxu0 0.0
        %4232 = vmatpush2.msra.mxu0 0.0
        %4233 = vmatprep.subr.mxu0 0.0
        %4234 = vmatpush2.msra.mxu0 0.0
        %4235 = vmatprep.subr.mxu0 0.0
        %4236 = vmatpush2.msra.mxu0 0.0
        %4237 = vmatprep.subr.mxu0 0.0
        %4238 = vmatpush2.msra.mxu0 0.0
        %4239 = vmatprep.subr.mxu0 0.0
        %4240 = vmatpush2.msra.mxu0 0.0
        %4241 = vmatprep.subr.mxu0 0.0
        %4242 = vmatpush2.msra.mxu0 0.0
        %4243 = vmatprep.mubr.f32.mxu0 0.0
        %4244 = vmatmul.mubr.f32.gmra.mxu0 %v4177
        %v4245 = vpop.f32.mrf.mxu0
        %v4246 = vadd.f32 0.0, %v4245
        %v4247 = vpop.f32.mrf.mxu0
        %4248 = vdwg.mxu0
        %v4250 = vsel %vm1415, %v4022, 0
        %4252 = vmatprep.subr.mxu0 0.0
        %4253 = vmatpush1.msra.mxu0 0.0
        %4254 = vmatprep.subr.mxu0 0.0
        %4255 = vmatpush1.msra.mxu0 0.0
        %4256 = vmatprep.subr.mxu0 0.0
        %4257 = vmatpush1.msra.mxu0 0.0
        %4258 = vmatprep.subr.mxu0 0.0
        %4259 = vmatpush1.msra.mxu0 0.0
        %4260 = vmatprep.subr.mxu0 0.0
        %4261 = vmatpush1.msra.mxu0 0.0
        %4262 = vmatprep.subr.mxu0 0.0
        %4263 = vmatpush1.msra.mxu0 0.0
        %4264 = vmatprep.subr.mxu0 0.0
        %4265 = vmatpush1.msra.mxu0 0.0
        %4266 = vmatprep.subr.mxu0 0.0
        %4267 = vmatpush1.msra.mxu0 0.0
        %4268 = vmatprep.subr.mxu0 0.0
        %4269 = vmatpush1.msra.mxu0 0.0
        %4270 = vmatprep.subr.mxu0 0.0
        %4271 = vmatpush1.msra.mxu0 0.0
        %4272 = vmatprep.subr.mxu0 0.0
        %4273 = vmatpush1.msra.mxu0 0.0
        %4274 = vmatprep.subr.mxu0 0.0
        %4275 = vmatpush1.msra.mxu0 0.0
        %4276 = vmatprep.subr.mxu0 0.0
        %4277 = vmatpush1.msra.mxu0 0.0
        %4278 = vmatprep.subr.mxu0 0.0
        %4279 = vmatpush1.msra.mxu0 0.0
        %4280 = vmatprep.subr.mxu0 0.0
        %4281 = vmatpush1.msra.mxu0 0.0
        %4282 = vmatprep.subr.mxu0 0.0
        %4283 = vmatpush1.msra.mxu0 %v4173
        %4284 = vmatprep.subr.mxu0 0.0
        %4285 = vmatpush2.msra.mxu0 0.0
        %4286 = vmatprep.subr.mxu0 0.0
        %4287 = vmatpush2.msra.mxu0 0.0
        %4288 = vmatprep.subr.mxu0 0.0
        %4289 = vmatpush2.msra.mxu0 0.0
        %4290 = vmatprep.subr.mxu0 0.0
        %4291 = vmatpush2.msra.mxu0 0.0
        %4292 = vmatprep.subr.mxu0 0.0
        %4293 = vmatpush2.msra.mxu0 0.0
        %4294 = vmatprep.subr.mxu0 0.0
        %4295 = vmatpush2.msra.mxu0 0.0
        %4296 = vmatprep.subr.mxu0 0.0
        %4297 = vmatpush2.msra.mxu0 0.0
        %4298 = vmatprep.subr.mxu0 0.0
        %4299 = vmatpush2.msra.mxu0 0.0
        %4300 = vmatprep.subr.mxu0 0.0
        %4301 = vmatpush2.msra.mxu0 0.0
        %4302 = vmatprep.subr.mxu0 0.0
        %4303 = vmatpush2.msra.mxu0 0.0
        %4304 = vmatprep.subr.mxu0 0.0
        %4305 = vmatpush2.msra.mxu0 0.0
        %4306 = vmatprep.subr.mxu0 0.0
        %4307 = vmatpush2.msra.mxu0 0.0
        %4308 = vmatprep.subr.mxu0 0.0
        %4309 = vmatpush2.msra.mxu0 0.0
        %4310 = vmatprep.subr.mxu0 0.0
        %4311 = vmatpush2.msra.mxu0 0.0
        %4312 = vmatprep.subr.mxu0 0.0
        %4313 = vmatpush2.msra.mxu0 0.0
        %4314 = vmatprep.subr.mxu0 0.0
        %4315 = vmatpush2.msra.mxu0 0.0
        %4316 = vmatprep.mubr.f32.mxu0 0.0
        %4317 = vmatmul.mubr.f32.gmra.mxu0 %v4250
        %v4318 = vpop.f32.mrf.mxu0
        %v4319 = vadd.f32 0.0, %v4318
        %v4320 = vpop.f32.mrf.mxu0
        %4321 = vdwg.mxu0
        %v4323 = vsel %vm1415, %v4095, 0
        %4325 = vmatprep.subr.mxu0 0.0
        %4326 = vmatpush1.msra.mxu0 0.0
        %4327 = vmatprep.subr.mxu0 0.0
        %4328 = vmatpush1.msra.mxu0 0.0
        %4329 = vmatprep.subr.mxu0 0.0
        %4330 = vmatpush1.msra.mxu0 0.0
        %4331 = vmatprep.subr.mxu0 0.0
        %4332 = vmatpush1.msra.mxu0 0.0
        %4333 = vmatprep.subr.mxu0 0.0
        %4334 = vmatpush1.msra.mxu0 0.0
        %4335 = vmatprep.subr.mxu0 0.0
        %4336 = vmatpush1.msra.mxu0 0.0
        %4337 = vmatprep.subr.mxu0 0.0
        %4338 = vmatpush1.msra.mxu0 0.0
        %4339 = vmatprep.subr.mxu0 0.0
        %4340 = vmatpush1.msra.mxu0 0.0
        %4341 = vmatprep.subr.mxu0 0.0
        %4342 = vmatpush1.msra.mxu0 0.0
        %4343 = vmatprep.subr.mxu0 0.0
        %4344 = vmatpush1.msra.mxu0 0.0
        %4345 = vmatprep.subr.mxu0 0.0
        %4346 = vmatpush1.msra.mxu0 0.0
        %4347 = vmatprep.subr.mxu0 0.0
        %4348 = vmatpush1.msra.mxu0 0.0
        %4349 = vmatprep.subr.mxu0 0.0
        %4350 = vmatpush1.msra.mxu0 0.0
        %4351 = vmatprep.subr.mxu0 0.0
        %4352 = vmatpush1.msra.mxu0 0.0
        %4353 = vmatprep.subr.mxu0 0.0
        %4354 = vmatpush1.msra.mxu0 0.0
        %4355 = vmatprep.subr.mxu0 0.0
        %4356 = vmatpush1.msra.mxu0 %v4174
        %4357 = vmatprep.subr.mxu0 0.0
        %4358 = vmatpush2.msra.mxu0 0.0
        %4359 = vmatprep.subr.mxu0 0.0
        %4360 = vmatpush2.msra.mxu0 0.0
        %4361 = vmatprep.subr.mxu0 0.0
        %4362 = vmatpush2.msra.mxu0 0.0
        %4363 = vmatprep.subr.mxu0 0.0
        %4364 = vmatpush2.msra.mxu0 0.0
        %4365 = vmatprep.subr.mxu0 0.0
        %4366 = vmatpush2.msra.mxu0 0.0
        %4367 = vmatprep.subr.mxu0 0.0
        %4368 = vmatpush2.msra.mxu0 0.0
        %4369 = vmatprep.subr.mxu0 0.0
        %4370 = vmatpush2.msra.mxu0 0.0
        %4371 = vmatprep.subr.mxu0 0.0
        %4372 = vmatpush2.msra.mxu0 0.0
        %4373 = vmatprep.subr.mxu0 0.0
        %4374 = vmatpush2.msra.mxu0 0.0
        %4375 = vmatprep.subr.mxu0 0.0
        %4376 = vmatpush2.msra.mxu0 0.0
        %4377 = vmatprep.subr.mxu0 0.0
        %4378 = vmatpush2.msra.mxu0 0.0
        %4379 = vmatprep.subr.mxu0 0.0
        %4380 = vmatpush2.msra.mxu0 0.0
        %4381 = vmatprep.subr.mxu0 0.0
        %4382 = vmatpush2.msra.mxu0 0.0
        %4383 = vmatprep.subr.mxu0 0.0
        %4384 = vmatpush2.msra.mxu0 0.0
        %4385 = vmatprep.subr.mxu0 0.0
        %4386 = vmatpush2.msra.mxu0 0.0
        %4387 = vmatprep.subr.mxu0 0.0
        %4388 = vmatpush2.msra.mxu0 0.0
        %4389 = vmatprep.mubr.f32.mxu0 0.0
        %4390 = vmatmul.mubr.f32.gmra.mxu0 %v4323
        %v4391 = vpop.f32.mrf.mxu0
        %v4392 = vadd.f32 0.0, %v4391
        %v4393 = vpop.f32.mrf.mxu0
        %4394 = vdwg.mxu0
        %v4396 = vsel %vm1415, %v4168, 0
        %4398 = vmatprep.subr.mxu0 0.0
        %4399 = vmatpush1.msra.mxu0 0.0
        %4400 = vmatprep.subr.mxu0 0.0
        %4401 = vmatpush1.msra.mxu0 0.0
        %4402 = vmatprep.subr.mxu0 0.0
        %4403 = vmatpush1.msra.mxu0 0.0
        %4404 = vmatprep.subr.mxu0 0.0
        %4405 = vmatpush1.msra.mxu0 0.0
        %4406 = vmatprep.subr.mxu0 0.0
        %4407 = vmatpush1.msra.mxu0 0.0
        %4408 = vmatprep.subr.mxu0 0.0
        %4409 = vmatpush1.msra.mxu0 0.0
        %4410 = vmatprep.subr.mxu0 0.0
        %4411 = vmatpush1.msra.mxu0 0.0
        %4412 = vmatprep.subr.mxu0 0.0
        %4413 = vmatpush1.msra.mxu0 0.0
        %4414 = vmatprep.subr.mxu0 0.0
        %4415 = vmatpush1.msra.mxu0 0.0
        %4416 = vmatprep.subr.mxu0 0.0
        %4417 = vmatpush1.msra.mxu0 0.0
        %4418 = vmatprep.subr.mxu0 0.0
        %4419 = vmatpush1.msra.mxu0 0.0
        %4420 = vmatprep.subr.mxu0 0.0
        %4421 = vmatpush1.msra.mxu0 0.0
        %4422 = vmatprep.subr.mxu0 0.0
        %4423 = vmatpush1.msra.mxu0 0.0
        %4424 = vmatprep.subr.mxu0 0.0
        %4425 = vmatpush1.msra.mxu0 0.0
        %4426 = vmatprep.subr.mxu0 0.0
        %4427 = vmatpush1.msra.mxu0 0.0
        %4428 = vmatprep.subr.mxu0 0.0
        %4429 = vmatpush1.msra.mxu0 %v4175
        %4430 = vmatprep.subr.mxu0 0.0
        %4431 = vmatpush2.msra.mxu0 0.0
        %4432 = vmatprep.subr.mxu0 0.0
        %4433 = vmatpush2.msra.mxu0 0.0
        %4434 = vmatprep.subr.mxu0 0.0
        %4435 = vmatpush2.msra.mxu0 0.0
        %4436 = vmatprep.subr.mxu0 0.0
        %4437 = vmatpush2.msra.mxu0 0.0
        %4438 = vmatprep.subr.mxu0 0.0
        %4439 = vmatpush2.msra.mxu0 0.0
        %4440 = vmatprep.subr.mxu0 0.0
        %4441 = vmatpush2.msra.mxu0 0.0
        %4442 = vmatprep.subr.mxu0 0.0
        %4443 = vmatpush2.msra.mxu0 0.0
        %4444 = vmatprep.subr.mxu0 0.0
        %4445 = vmatpush2.msra.mxu0 0.0
        %4446 = vmatprep.subr.mxu0 0.0
        %4447 = vmatpush2.msra.mxu0 0.0
        %4448 = vmatprep.subr.mxu0 0.0
        %4449 = vmatpush2.msra.mxu0 0.0
        %4450 = vmatprep.subr.mxu0 0.0
        %4451 = vmatpush2.msra.mxu0 0.0
        %4452 = vmatprep.subr.mxu0 0.0
        %4453 = vmatpush2.msra.mxu0 0.0
        %4454 = vmatprep.subr.mxu0 0.0
        %4455 = vmatpush2.msra.mxu0 0.0
        %4456 = vmatprep.subr.mxu0 0.0
        %4457 = vmatpush2.msra.mxu0 0.0
        %4458 = vmatprep.subr.mxu0 0.0
        %4459 = vmatpush2.msra.mxu0 0.0
        %4460 = vmatprep.subr.mxu0 0.0
        %4461 = vmatpush2.msra.mxu0 0.0
        %4462 = vmatprep.mubr.f32.mxu0 0.0
        %4463 = vmatmul.mubr.f32.gmra.mxu0 %v4396
        %v4464 = vpop.f32.mrf.mxu0
        %v4465 = vadd.f32 0.0, %v4464
        %v4466 = vpop.f32.mrf.mxu0
        %4467 = vdwg.mxu0
        %v4468 = vsel %vm539, %v4246, 0.0
        %v4469 = vsel %vm539, %v4319, 0.0
        %v4470 = vadd.f32 %v4468, %v4469
        %v4471 = vsel %vm539, %v4392, 0.0
        %v4472 = vadd.f32 %v4470, %v4471
        %v4473 = vsel %vm539, %v4465, 0.0
        %v4474 = vadd.f32 %v4472, %v4473
        %v4475 = vadd.f32 %v4474, %v2632
        %s4476 = scalar_lea.vmem %s11, 6
        %v4477 = vld [vmem:[%s4476] sm:$0x1]
        %s4478 = scalar_lea.vmem %s11, 7
        %v4479 = vld [vmem:[%s4478] sm:$0x1]
        %v4480 = vsel %vm539, %v4475, 0.0
        %4481 = vadd.xlane.f32.xlu0 %v4480
        %v4482 = vpop.xlane.xlu0 %4481
        %v4483 = vmul.f32 %v4482, %v2370
        %v4484 = vsub.f32 %v4475, %v4483
        %v4485 = vmul.f32 %v4484, %v4484
        %v4486 = vsel %vm539, %v4485, 0.0
        %4487 = vadd.xlane.f32.xlu0 %v4486
        %v4488 = vpop.xlane.xlu0 %4487
        %v4489 = vmul.f32 %v4488, %v2370
        %v4490 = vadd.f32 %v4489, 1e-06
        %v4491 = vrsqrt.pop %v4490
        %v4492 = vmul.f32 %v4484, %v4491
        %v4494 = vlaneseq
        %v4495 = vshrl.u32 %v4494, 7
        %v4496 = vsub.s32 0, %v4495
        %v4497 = vrot.slane %v4477, %v4496
        %v4499 = vmul.f32 %v4492, %v4497
        %v4501 = vlaneseq
        %v4502 = vshrl.u32 %v4501, 7
        %v4503 = vsub.s32 0, %v4502
        %v4504 = vrot.slane %v4479, %v4503
        %v4506 = vadd.f32 %v4499, %v4504
        %v4507 = vadd.f32 %v2632, %v4506
        %s4508 = scalar_lea.vmem %s11, 8
        %v4509 = vld [vmem:[%s4508] sm:$0x1]
        %s4510 = scalar_lea.vmem %s11, 9
        %v4511 = vld [vmem:[%s4510] sm:$0x1]
        %v4512 = vsel %vm539, %v4507, 0.0
        %4513 = vadd.xlane.f32.xlu0 %v4512
        %v4514 = vpop.xlane.xlu0 %4513
        %v4515 = vmul.f32 %v4514, %v2370
        %v4516 = vsub.f32 %v4507, %v4515
        %v4517 = vmul.f32 %v4516, %v4516
        %v4518 = vsel %vm539, %v4517, 0.0
        %4519 = vadd.xlane.f32.xlu0 %v4518
        %v4520 = vpop.xlane.xlu0 %4519
        %v4521 = vmul.f32 %v4520, %v2370
        %v4522 = vadd.f32 %v4521, 1e-05
        %v4523 = vrsqrt.pop %v4522
        %v4524 = vmul.f32 %v4516, %v4523
        %v4526 = vlaneseq
        %v4527 = vshrl.u32 %v4526, 7
        %v4528 = vsub.s32 0, %v4527
        %v4529 = vrot.slane %v4509, %v4528
        %v4531 = vmul.f32 %v4524, %v4529
        %v4533 = vlaneseq
        %v4534 = vshrl.u32 %v4533, 7
        %v4535 = vsub.s32 0, %v4534
        %v4536 = vrot.slane %v4511, %v4535
        %v4538 = vadd.f32 %v4531, %v4536
        %s4539 = scalar_lea.vmem %s7, 32
        %v4540 = vld [vmem:[%s4539] sm:$0xff]
        %v4541 = vld [vmem:[%s4539 + $0x8] sm:$0xff]
        %v4542 = vld [vmem:[%s4539 + $0x10] sm:$0xff]
        %v4543 = vld [vmem:[%s4539 + $0x18] sm:$0xff]
        %s4544 = scalar_lea.vmem %s8, 1
        %v4545 = vld [vmem:[%s4544] sm:$0x1]
        %v4547 = vlaneseq
        %v4548 = vshrl.u32 %v4547, 7
        %v4549 = vsub.s32 0, %v4548
        %v4550 = vrot.slane %v4545, %v4549
        %v4553 = vsel %vm539, %v4538, 0
        %4555 = vmatprep.subr.mxu0 0.0
        %4556 = vmatpush1.msra.mxu0 0.0
        %4557 = vmatprep.subr.mxu0 0.0
        %4558 = vmatpush1.msra.mxu0 0.0
        %4559 = vmatprep.subr.mxu0 0.0
        %4560 = vmatpush1.msra.mxu0 0.0
        %4561 = vmatprep.subr.mxu0 0.0
        %4562 = vmatpush1.msra.mxu0 0.0
        %4563 = vmatprep.subr.mxu0 0.0
        %4564 = vmatpush1.msra.mxu0 0.0
        %4565 = vmatprep.subr.mxu0 0.0
        %4566 = vmatpush1.msra.mxu0 0.0
        %4567 = vmatprep.subr.mxu0 0.0
        %4568 = vmatpush1.msra.mxu0 0.0
        %4569 = vmatprep.subr.mxu0 0.0
        %4570 = vmatpush1.msra.mxu0 0.0
        %4571 = vmatprep.subr.mxu0 0.0
        %4572 = vmatpush1.msra.mxu0 0.0
        %4573 = vmatprep.subr.mxu0 0.0
        %4574 = vmatpush1.msra.mxu0 0.0
        %4575 = vmatprep.subr.mxu0 0.0
        %4576 = vmatpush1.msra.mxu0 0.0
        %4577 = vmatprep.subr.mxu0 0.0
        %4578 = vmatpush1.msra.mxu0 0.0
        %4579 = vmatprep.subr.mxu0 0.0
        %4580 = vmatpush1.msra.mxu0 %v4543
        %4581 = vmatprep.subr.mxu0 0.0
        %4582 = vmatpush1.msra.mxu0 %v4542
        %4583 = vmatprep.subr.mxu0 0.0
        %4584 = vmatpush1.msra.mxu0 %v4541
        %4585 = vmatprep.subr.mxu0 0.0
        %4586 = vmatpush1.msra.mxu0 %v4540
        %4587 = vmatprep.subr.mxu0 0.0
        %4588 = vmatpush2.msra.mxu0 0.0
        %4589 = vmatprep.subr.mxu0 0.0
        %4590 = vmatpush2.msra.mxu0 0.0
        %4591 = vmatprep.subr.mxu0 0.0
        %4592 = vmatpush2.msra.mxu0 0.0
        %4593 = vmatprep.subr.mxu0 0.0
        %4594 = vmatpush2.msra.mxu0 0.0
        %4595 = vmatprep.subr.mxu0 0.0
        %4596 = vmatpush2.msra.mxu0 0.0
        %4597 = vmatprep.subr.mxu0 0.0
        %4598 = vmatpush2.msra.mxu0 0.0
        %4599 = vmatprep.subr.mxu0 0.0
        %4600 = vmatpush2.msra.mxu0 0.0
        %4601 = vmatprep.subr.mxu0 0.0
        %4602 = vmatpush2.msra.mxu0 0.0
        %4603 = vmatprep.subr.mxu0 0.0
        %4604 = vmatpush2.msra.mxu0 0.0
        %4605 = vmatprep.subr.mxu0 0.0
        %4606 = vmatpush2.msra.mxu0 0.0
        %4607 = vmatprep.subr.mxu0 0.0
        %4608 = vmatpush2.msra.mxu0 0.0
        %4609 = vmatprep.subr.mxu0 0.0
        %4610 = vmatpush2.msra.mxu0 0.0
        %4611 = vmatprep.subr.mxu0 0.0
        %4612 = vmatpush2.msra.mxu0 0.0
        %4613 = vmatprep.subr.mxu0 0.0
        %4614 = vmatpush2.msra.mxu0 0.0
        %4615 = vmatprep.subr.mxu0 0.0
        %4616 = vmatpush2.msra.mxu0 0.0
        %4617 = vmatprep.subr.mxu0 0.0
        %4618 = vmatpush2.msra.mxu0 0.0
        %4619 = vmatprep.mubr.f32.mxu0 0.0
        %4620 = vmatmul.mubr.f32.gmra.mxu0 %v4553
        %v4621 = vpop.f32.mrf.mxu0
        %v4622 = vadd.f32 %v4550, %v4621
        %v4623 = vpop.f32.mrf.mxu0
        %4624 = vdwg.mxu0
        %v4625 = vmax.f32 %v4622, 0.0
        %s4626 = scalar_lea.vmem %s9, 64
        %v4627 = vld [vmem:[%s4626] sm:$0xff]
        %v4628 = vld [vmem:[%s4626 + $0x8] sm:$0xff]
        %v4629 = vld [vmem:[%s4626 + $0x10] sm:$0xff]
        %v4630 = vld [vmem:[%s4626 + $0x18] sm:$0xff]
        %v4631 = vld [vmem:[%s4626 + $0x20] sm:$0xff]
        %v4632 = vld [vmem:[%s4626 + $0x28] sm:$0xff]
        %v4633 = vld [vmem:[%s4626 + $0x30] sm:$0xff]
        %v4634 = vld [vmem:[%s4626 + $0x38] sm:$0xff]
        %s4635 = scalar_lea.vmem %s10, 1
        %v4636 = vld [vmem:[%s4635] sm:$0x1]
        %v4638 = vlaneseq
        %v4639 = vshrl.u32 %v4638, 7
        %v4640 = vsub.s32 0, %v4639
        %v4641 = vrot.slane %v4636, %v4640
        %v4644 = vsel %vm2527, %v4625, 0
        %4646 = vmatprep.subr.mxu0 0.0
        %4647 = vmatpush1.msra.mxu0 0.0
        %4648 = vmatprep.subr.mxu0 0.0
        %4649 = vmatpush1.msra.mxu0 0.0
        %4650 = vmatprep.subr.mxu0 0.0
        %4651 = vmatpush1.msra.mxu0 0.0
        %4652 = vmatprep.subr.mxu0 0.0
        %4653 = vmatpush1.msra.mxu0 0.0
        %4654 = vmatprep.subr.mxu0 0.0
        %4655 = vmatpush1.msra.mxu0 0.0
        %4656 = vmatprep.subr.mxu0 0.0
        %4657 = vmatpush1.msra.mxu0 0.0
        %4658 = vmatprep.subr.mxu0 0.0
        %4659 = vmatpush1.msra.mxu0 0.0
        %4660 = vmatprep.subr.mxu0 0.0
        %4661 = vmatpush1.msra.mxu0 0.0
        %4662 = vmatprep.subr.mxu0 0.0
        %4663 = vmatpush1.msra.mxu0 %v4634
        %4664 = vmatprep.subr.mxu0 0.0
        %4665 = vmatpush1.msra.mxu0 %v4633
        %4666 = vmatprep.subr.mxu0 0.0
        %4667 = vmatpush1.msra.mxu0 %v4632
        %4668 = vmatprep.subr.mxu0 0.0
        %4669 = vmatpush1.msra.mxu0 %v4631
        %4670 = vmatprep.subr.mxu0 0.0
        %4671 = vmatpush1.msra.mxu0 %v4630
        %4672 = vmatprep.subr.mxu0 0.0
        %4673 = vmatpush1.msra.mxu0 %v4629
        %4674 = vmatprep.subr.mxu0 0.0
        %4675 = vmatpush1.msra.mxu0 %v4628
        %4676 = vmatprep.subr.mxu0 0.0
        %4677 = vmatpush1.msra.mxu0 %v4627
        %4678 = vmatprep.subr.mxu0 0.0
        %4679 = vmatpush2.msra.mxu0 0.0
        %4680 = vmatprep.subr.mxu0 0.0
        %4681 = vmatpush2.msra.mxu0 0.0
        %4682 = vmatprep.subr.mxu0 0.0
        %4683 = vmatpush2.msra.mxu0 0.0
        %4684 = vmatprep.subr.mxu0 0.0
        %4685 = vmatpush2.msra.mxu0 0.0
        %4686 = vmatprep.subr.mxu0 0.0
        %4687 = vmatpush2.msra.mxu0 0.0
        %4688 = vmatprep.subr.mxu0 0.0
        %4689 = vmatpush2.msra.mxu0 0.0
        %4690 = vmatprep.subr.mxu0 0.0
        %4691 = vmatpush2.msra.mxu0 0.0
        %4692 = vmatprep.subr.mxu0 0.0
        %4693 = vmatpush2.msra.mxu0 0.0
        %4694 = vmatprep.subr.mxu0 0.0
        %4695 = vmatpush2.msra.mxu0 0.0
        %4696 = vmatprep.subr.mxu0 0.0
        %4697 = vmatpush2.msra.mxu0 0.0
        %4698 = vmatprep.subr.mxu0 0.0
        %4699 = vmatpush2.msra.mxu0 0.0
        %4700 = vmatprep.subr.mxu0 0.0
        %4701 = vmatpush2.msra.mxu0 0.0
        %4702 = vmatprep.subr.mxu0 0.0
        %4703 = vmatpush2.msra.mxu0 0.0
        %4704 = vmatprep.subr.mxu0 0.0
        %4705 = vmatpush2.msra.mxu0 0.0
        %4706 = vmatprep.subr.mxu0 0.0
        %4707 = vmatpush2.msra.mxu0 0.0
        %4708 = vmatprep.subr.mxu0 0.0
        %4709 = vmatpush2.msra.mxu0 0.0
        %4710 = vmatprep.mubr.f32.mxu0 0.0
        %4711 = vmatmul.mubr.f32.gmra.mxu0 %v4644
        %v4712 = vpop.f32.mrf.mxu0
        %v4713 = vadd.f32 %v4641, %v4712
        %v4714 = vpop.f32.mrf.mxu0
        %4715 = vdwg.mxu0
        %v4716 = vadd.f32 %v4538, %v4713
        %s4717 = scalar_lea.vmem %s11, 10
        %v4718 = vld [vmem:[%s4717] sm:$0x1]
        %s4719 = scalar_lea.vmem %s11, 11
        %v4720 = vld [vmem:[%s4719] sm:$0x1]
        %v4721 = vsel %vm539, %v4716, 0.0
        %4722 = vadd.xlane.f32.xlu0 %v4721
        %v4723 = vpop.xlane.xlu0 %4722
        %v4724 = vmul.f32 %v4723, %v2370
        %v4725 = vsub.f32 %v4716, %v4724
        %v4726 = vmul.f32 %v4725, %v4725
        %v4727 = vsel %vm539, %v4726, 0.0
        %4728 = vadd.xlane.f32.xlu0 %v4727
        %v4729 = vpop.xlane.xlu0 %4728
        %v4730 = vmul.f32 %v4729, %v2370
        %v4731 = vadd.f32 %v4730, 1e-05
        %v4732 = vrsqrt.pop %v4731
        %v4733 = vmul.f32 %v4725, %v4732
        %v4735 = vlaneseq
        %v4736 = vshrl.u32 %v4735, 7
        %v4737 = vsub.s32 0, %v4736
        %v4738 = vrot.slane %v4718, %v4737
        %v4740 = vmul.f32 %v4733, %v4738
        %v4742 = vlaneseq
        %v4743 = vshrl.u32 %v4742, 7
        %v4744 = vsub.s32 0, %v4743
        %v4745 = vrot.slane %v4720, %v4744
        %v4747 = vadd.f32 %v4740, %v4745
        %v4748 = vld [vmem:[%s12] sm:$0x1]
        %s4749 = scalar_lea.vmem %s12, 1
        %v4750 = vld [vmem:[%s4749] sm:$0x1]
        %v4751 = vsel %vm539, %v4747, 0.0
        %4752 = vadd.xlane.f32.xlu0 %v4751
        %v4753 = vpop.xlane.xlu0 %4752
        %v4754 = vmul.f32 %v4753, %v2370
        %v4755 = vsub.f32 %v4747, %v4754
        %v4756 = vmul.f32 %v4755, %v4755
        %v4757 = vsel %vm539, %v4756, 0.0
        %4758 = vadd.xlane.f32.xlu0 %v4757
        %v4759 = vpop.xlane.xlu0 %4758
        %v4760 = vmul.f32 %v4759, %v2370
        %v4761 = vadd.f32 %v4760, 1e-05
        %v4762 = vrsqrt.pop %v4761
        %v4763 = vmul.f32 %v4755, %v4762
        %v4765 = vlaneseq
        %v4766 = vshrl.u32 %v4765, 7
        %v4767 = vsub.s32 0, %v4766
        %v4768 = vrot.slane %v4748, %v4767
        %v4770 = vmul.f32 %v4763, %v4768
        %v4772 = vlaneseq
        %v4773 = vshrl.u32 %v4772, 7
        %v4774 = vsub.s32 0, %v4773
        %v4775 = vrot.slane %v4750, %v4774
        %v4777 = vadd.f32 %v4770, %v4775
        %4778 = vst.msk [vmem:[%s431] sm:$0xff] %vm539, %v4777
        %s4779 = sand.u32 %s313, 1
        %s4780 = scalar_lea.sflag [#allocation3], %s4779
        %s4781 = sand.u32 %s313, 1
        %s4782 = smul.addr %s4781, 8
        %s4783 = scalar_lea.vmem [#allocation2], %s4782
        // Predicated region
        $region73: #{encoder_forward.1} parent=71 // pred_check
          %p4784 = pneg %p323
        $region74: #{encoder_forward.1} parent=71 // pred_check_branch
          %4786 = sbr.rel (%p4784) target = $region76
        $region75: #{encoder_forward.1} parent=71 // pred_region
          %s4788 = ssub.s32 128, 128
          %4789 = vsyncadd %s4780, %s4788
          %s4790 = smul.addr %s27, 128
          %s4791 = scalar_lea.hbm %s13, %s4790
          %s4793 = sshll.u32 %s4783, 4
          %s4794 = int_to_ptr.vmem [resolvable:$true] %s4793
          %4796 = dma.vmem_to_hbm [thread:$0]  %s4794, 128, %s4791, %s4780
        $region76: #{encoder_forward.1} parent=71 // pred_fallthru
          _
      $region72: #{encoder_forward.1} parent=5 // pred_fallthru
        _
      %p4797 = scmp.le.s32.totalorder 2, %s22
      // Predicated region
      $region77: #{encoder_forward.1} parent=5 // pred_check
        %p4798 = pneg %p4797
      $region78: #{encoder_forward.1} parent=5 // pred_check_branch
        %4800 = sbr.rel (%p4798) target = $region80
      $region79: #{encoder_forward.1} parent=5 // pred_region
        %s4801 = ssub.s32 %s22, 2
        // Predicated region
        $region81: #{encoder_forward.1} parent=79 // pred_check
          %p4802 = pneg %p329
        $region82: #{encoder_forward.1} parent=79 // pred_check_branch
          %4804 = sbr.rel (%p4802) target = $region84
        $region83: #{encoder_forward.1} parent=79 // pred_region
          %s4805 = sand.u32 %s314, 1
          %s4806 = scalar_lea.sflag [#allocation3], %s4805
          %s4807 = sand.u32 %s314, 1
          %s4808 = smul.addr %s4807, 8
          %s4809 = scalar_lea.vmem [#allocation2], %s4808
          %4810 = dma.done %s4806, 128
        $region84: #{encoder_forward.1} parent=79 // pred_fallthru
          _
      $region80: #{encoder_forward.1} parent=5 // pred_fallthru
        _
    $region6: #{encoder_forward.1} parent=1 // loop_footer
      %s26 = sadd.s32 1, %s22
    $region7: #{encoder_forward.1} parent=1 // loop_footer_branch
      %21 = sbr.rel target = $region3
    $region8: #{encoder_forward.1} parent=1 // loop_exit
      _
    %4811 = vsyncpa [#allocation3], 1
    %s4812 = scalar_lea.sflag [#allocation3], 1
    %4813 = vsyncpa %s4812, 1

</llo_original>
